<compile_context>
chip_gen: v6e
topology: v6e:2x2x1
jax: 0.10.0
libtpu: 0.0.40
codegen_flags: <defaults>
</compile_context>

<pallas_src>
import math

import jax
import jax.numpy as jnp
from jax.experimental import pallas as pl
from jax.experimental.pallas import tpu as pltpu


# ----------------------------- small helpers -----------------------------

def _cdiv(a: int, b: int) -> int:
    return -(-a // b)


def _round_up(n: int, m: int) -> int:
    return _cdiv(n, m) * m


def _is_dual_tensorcore() -> bool:
    """True on chips with 2 TensorCores per chip (v7x); False otherwise."""
    try:
        kind = jax.devices()[0].device_kind.lower()
    except Exception:
        return False
    return ("v7" in kind) or ("7x" in kind)


def _choose_tile_batch(B: int, k: int, dual_tc: bool) -> int:
    """Pick tb (batch samples per grid step) = generation-aware rows target."""
    m = 8 // math.gcd(k, 8)              # tb multiple of m keeps tb*k % 8 == 0
    if dual_tc:
        min_steps, max_rows = 4, 1024    # >=2 steps per TC so DMA hides
    else:
        min_steps, max_rows = 1, 4096    # single TC: few big slabs
    max_tb = max(m, (max_rows // (k * m)) * m)
    steps = max(min_steps, _cdiv(B, max_tb))
    tb = _cdiv(B, steps)
    tb = max(m, _round_up(tb, m))
    tb = min(tb, max_tb)
    # Prefer a tb that divides B exactly (no batch padding / post-slice copy),
    # but don't more-than-double the step count to achieve it.
    for cand in range(tb, m - 1, -m):
        if B % cand == 0:
            if 2 * cand >= tb:
                return cand
            break
    return tb


def _vmem_limit_bytes(rows: int, fin: int, w_list, out_p: int) -> int:
    """Derive a scoped-VMEM request from actual tile/resident sizes (+headroom)."""
    x_tile = rows * fin * 4
    out_tile = rows * out_p * 4
    resid = rows * fin * 4                                    # replicated R slab
    for w in w_list:
        resid += (int(w.shape[0]) * int(w.shape[1]) + int(w.shape[1])) * 4
    max_w = max([fin] + [int(w.shape[1]) for w in w_list])
    act = rows * max_w * 4 * 2                                # live activations
    need = 2 * (x_tile + out_tile) + 2 * resid + act          # double buffers
    return int(min(64 * 1024 * 1024, max(8 * 1024 * 1024, 4 * need)))


# ------------------------------- the kernel -------------------------------

def _make_tabm_kernel(num_layers: int):
    """Kernel closure for a fixed number of MLP layers.

    Ref order: x (rows, fin) f32, r_rep (rows, fin) f32,
               [w_i (in_p, out_p) f32, b_i (1, out_p) f32] * num_layers,
               out (rows, out_dim) f32
    """

    def kernel(x_ref, r_ref, *rest):
        out_ref = rest[-1]
        wb = rest[:-1]

        # 1) elementwise  h = X * R   (VPU, f32 end-to-end)
        h = x_ref[...] * r_ref[...]
        # 2) per layer    h = relu(h @ W_t + b)   (MXU, f32 accumulate)
        for i in range(num_layers):
            w = wb[2 * i][...]          # (in_p, out_p) f32, zero-padded
            b = wb[2 * i + 1][...]      # (1, out_p)    f32, zero-padded
            acc = jnp.dot(h, w, preferred_element_type=jnp.float32)
            h = jnp.maximum(acc + b, 0.0)            # ReLU
        out_ref[...] = h.astype(out_ref.dtype)

    return kernel


# --------------------------- builder / forward -----------------------------

def build_tabm_mini(r, weights, biases):
    """One-time prep of TabM_mini parameters; returns a jitted forward(x).

    r:       (k, in_features) float
    weights: list of (out_dim, in_dim) arrays (torch.nn.Linear layout)
    biases:  list of (out_dim,) arrays
    forward(x): x (B, k, in_features) -> (B, k, hidden_sizes[-1]) float32
    """
    r32 = jnp.asarray(r, jnp.float32)
    k, fin = int(r32.shape[0]), int(r32.shape[1])
    num_layers = len(weights)
    out_dim = int(weights[-1].shape[0])

    # --- one-time param prep: transpose to (in, out); intermediate out-dims
    #     zero-padded to 128 lanes; FINAL layer left at its natural out_dim.
    w_list, b_list = [], []
    in_p = fin
    for li, (w, b) in enumerate(zip(weights, biases)):
        o, i = int(w.shape[0]), int(w.shape[1])
        o_p = o if li == num_layers - 1 else _round_up(o, 128)
        wt = jnp.zeros((in_p, o_p), jnp.float32)
        wt = wt.at[:i, :o].set(jnp.asarray(w, jnp.float32).T)
        bt = jnp.zeros((1, o_p), jnp.float32).at[0, :o].set(
            jnp.asarray(b, jnp.float32))
        w_list.append(wt)
        b_list.append(bt)
        in_p = o_p
    out_p = in_p          # == out_dim (last layer is unpadded)

    dual_tc = _is_dual_tensorcore()
    kernel = _make_tabm_kernel(num_layers)

    @jax.jit
    def forward(x):
        B = int(x.shape[0])
        tb = _choose_tile_batch(B, k, dual_tc)
        b_pad = _round_up(B, tb)
        steps = b_pad // tb
        rows = tb * k
        rows_total = b_pad * k

        x32 = jnp.asarray(x, jnp.float32)
        if b_pad != B:
            x32 = jnp.pad(x32, ((0, b_pad - B), (0, 0), (0, 0)))
        x2 = x32.reshape(rows_total, fin)

        # Replicated R slab; r32 is a closed-over constant so this folds at
        # compile time (no per-call HBM op).
        r_rep = jnp.tile(r32, (tb, 1))

        vmem = pltpu.MemorySpace.VMEM
        in_specs = [
            pl.BlockSpec((rows, fin), lambda i: (i, 0)),                     # X tile
            pl.BlockSpec((rows, fin), lambda i: (0, 0), memory_space=vmem),  # R resident
        ]
        operands = [x2, r_rep]
        for wt, bt in zip(w_list, b_list):
            in_specs.append(
                pl.BlockSpec(wt.shape, lambda i: (0, 0), memory_space=vmem))
            in_specs.append(
                pl.BlockSpec(bt.shape, lambda i: (0, 0), memory_space=vmem))
            operands.append(wt)
            operands.append(bt)

        out_spec = pl.BlockSpec((rows, out_p), lambda i: (i, 0))

        flops = 2 * rows_total * sum(
            int(w.shape[0]) * int(w.shape[1]) for w in w_list)
        bytes_accessed = (rows_total * fin * 4 + rows * fin * 4
                          + sum(int(w.size) * 4 for w in w_list)
                          + sum(int(b.size) * 4 for b in b_list)
                          + rows_total * out_p * 4)
        ce = pl.CostEstimate(flops=flops, transcendentals=0,
                             bytes_accessed=int(bytes_accessed))

        out = pl.pallas_call(
            kernel,
            out_shape=jax.ShapeDtypeStruct((rows_total, out_p), jnp.float32),
            grid_spec=pltpu.PrefetchScalarGridSpec(
                num_scalar_prefetch=0,
                grid=(steps,),
                in_specs=in_specs,
                out_specs=out_spec,
            ),
            compiler_params=pltpu.CompilerParams(
                dimension_semantics=("parallel",),
                vmem_limit_bytes=_vmem_limit_bytes(rows, fin, w_list, out_p),
            ),
            cost_estimate=ce,
        )(*operands)

        out = out.reshape(b_pad, k, out_p)
        if b_pad != B:
            out = out[:B]
        return out

    return forward


# ------------------------------- reference --------------------------------

def reference_forward(x, r, weights, biases):
    """Pure-JAX f32 reference matching the PyTorch semantics."""
    h = jnp.asarray(x, jnp.float32) * jnp.asarray(r, jnp.float32)[None, :, :]
    for w, b in zip(weights, biases):
        h = jnp.dot(h, jnp.asarray(w, jnp.float32).T,
                    preferred_element_type=jnp.float32,
                    precision=jax.lax.Precision.HIGHEST)
        h = jnp.maximum(h + jnp.asarray(b, jnp.float32), 0.0)
    return h


# --------------------------------- main ------------------------------------

if __name__ == "__main__":
    # Small shapes consistent with the module (k defaults to 32).
    batch = 64
    in_features = 16
    k = 32
    hidden_sizes = [32, 32]
    dropout_rate = 0  # identity

    key = jax.random.PRNGKey(0)
    key, kx, kr = jax.random.split(key, 3)

    x = jax.random.normal(kx, (batch, k, in_features), dtype=jnp.float32)
    r = jax.random.normal(kr, (k, in_features), dtype=jnp.float32)  # ~ self.R

    # Deterministic synthetic nn.Linear parameters.
    layer_sizes = [in_features] + hidden_sizes
    weights, biases = [], []
    for i in range(len(layer_sizes) - 1):
        key, kw, kb = jax.random.split(key, 3)
        fan_out, fan_in = layer_sizes[i + 1], layer_sizes[i]
        weights.append(
            jax.random.normal(kw, (fan_out, fan_in), dtype=jnp.float32) * 0.1)
        biases.append(jax.random.normal(kb, (fan_out,), dtype=jnp.float32) * 0.1)

    forward = build_tabm_mini(r, weights, biases)
    out = jax.block_until_ready(forward(x))
    assert out.shape == (batch, k, hidden_sizes[-1]), out.shape

    ref = reference_forward(x, r, weights, biases)
    max_err = float(jnp.max(jnp.abs(out - ref)))
    # Kernel is f32 end-to-end; tolerance kept conservative to be robust to
    # MXU internal matmul precision, but error is expected to be tiny.
    assert jnp.allclose(out, ref, atol=3e-2, rtol=3e-2), (
        f"mismatch vs f32 reference, max abs err = {max_err}")

    print("KERNEL_OK")
</pallas_src>

<mosaic_0001>
module attributes {stable_mosaic.version = 11 : i64} {
  func.func @kernel(%arg0: i32, %arg1: memref<2048x16xf32, #tpu.memory_space<vmem>>, %arg2: memref<2048x16xf32, #tpu.memory_space<vmem>>, %arg3: memref<16x128xf32, #tpu.memory_space<vmem>>, %arg4: memref<1x128xf32, #tpu.memory_space<vmem>>, %arg5: memref<128x32xf32, #tpu.memory_space<vmem>>, %arg6: memref<1x32xf32, #tpu.memory_space<vmem>>, %arg7: memref<2048x32xf32, #tpu.memory_space<vmem>>) attributes {dimension_semantics = [#tpu.dimension_semantics<parallel>], iteration_bounds = array<i64: 1>, scalar_prefetch = 0 : i64, scratch_operands = 0 : i64, tpu.core_type = #tpu.core_type<tc>, window_params = [{transform_indices = @transform_0, window_bounds = array<i64: 2048, 16>}, {pipeline_mode = #tpu.pipeline_mode<synchronous>, transform_indices = @transform_1, window_bounds = array<i64: 2048, 16>}, {pipeline_mode = #tpu.pipeline_mode<synchronous>, transform_indices = @transform_2, window_bounds = array<i64: 16, 128>}, {pipeline_mode = #tpu.pipeline_mode<synchronous>, transform_indices = @transform_3, window_bounds = array<i64: 1, 128>}, {pipeline_mode = #tpu.pipeline_mode<synchronous>, transform_indices = @transform_4, window_bounds = array<i64: 128, 32>}, {pipeline_mode = #tpu.pipeline_mode<synchronous>, transform_indices = @transform_5, window_bounds = array<i64: 1, 32>}, {transform_indices = @transform_6, window_bounds = array<i64: 2048, 32>}]} {
    %c0 = arith.constant 0 : index
    %c0_0 = arith.constant 0 : index
    %0 = vector.load %arg1[%c0, %c0_0] : memref<2048x16xf32, #tpu.memory_space<vmem>>, vector<2048x16xf32>
    %c0_1 = arith.constant 0 : index
    %c0_2 = arith.constant 0 : index
    %1 = vector.load %arg2[%c0_1, %c0_2] : memref<2048x16xf32, #tpu.memory_space<vmem>>, vector<2048x16xf32>
    %2 = arith.mulf %0, %1 : vector<2048x16xf32>
    %c0_3 = arith.constant 0 : index
    %c0_4 = arith.constant 0 : index
    %3 = vector.load %arg3[%c0_3, %c0_4] : memref<16x128xf32, #tpu.memory_space<vmem>>, vector<16x128xf32>
    %c0_5 = arith.constant 0 : index
    %c0_6 = arith.constant 0 : index
    %4 = vector.load %arg4[%c0_5, %c0_6] : memref<1x128xf32, #tpu.memory_space<vmem>>, vector<1x128xf32>
    %cst = arith.constant dense<0.000000e+00> : vector<2048x128xf32>
    %5 = tpu.matmul %2, %3, %cst {dimension_numbers = #tpu.dot_dimension_numbers<[1], [0], [0], [1], [0, 0, 1, 1], [], []>} : vector<2048x16xf32>, vector<16x128xf32>, vector<2048x128xf32> -> vector<2048x128xf32>
    %6 = vector.broadcast %4 : vector<1x128xf32> to vector<2048x128xf32>
    %7 = arith.addf %5, %6 : vector<2048x128xf32>
    %cst_7 = arith.constant 0.000000e+00 : f32
    %8 = vector.broadcast %cst_7 : f32 to vector<2048x128xf32>
    %9 = arith.maximumf %7, %8 : vector<2048x128xf32>
    %c0_8 = arith.constant 0 : index
    %c0_9 = arith.constant 0 : index
    %10 = vector.load %arg5[%c0_8, %c0_9] : memref<128x32xf32, #tpu.memory_space<vmem>>, vector<128x32xf32>
    %c0_10 = arith.constant 0 : index
    %c0_11 = arith.constant 0 : index
    %11 = vector.load %arg6[%c0_10, %c0_11] : memref<1x32xf32, #tpu.memory_space<vmem>>, vector<1x32xf32>
    %cst_12 = arith.constant dense<0.000000e+00> : vector<2048x32xf32>
    %12 = tpu.matmul %9, %10, %cst_12 {dimension_numbers = #tpu.dot_dimension_numbers<[1], [0], [0], [1], [0, 0, 1, 1], [], []>} : vector<2048x128xf32>, vector<128x32xf32>, vector<2048x32xf32> -> vector<2048x32xf32>
    %13 = vector.broadcast %11 : vector<1x32xf32> to vector<2048x32xf32>
    %14 = arith.addf %12, %13 : vector<2048x32xf32>
    %cst_13 = arith.constant 0.000000e+00 : f32
    %15 = vector.broadcast %cst_13 : f32 to vector<2048x32xf32>
    %16 = arith.maximumf %14, %15 : vector<2048x32xf32>
    %c0_14 = arith.constant 0 : index
    %c0_15 = arith.constant 0 : index
    %17 = vector.load %arg7[%c0_14, %c0_15] : memref<2048x32xf32, #tpu.memory_space<vmem>>, vector<2048x32xf32>
    tpu.vector_store %arg7[%c0_14, %c0_15], %16 {strides = array<i32>} : memref<2048x32xf32, #tpu.memory_space<vmem>>, vector<2048x32xf32>,
    return
  }
  func.func @transform_0(%arg0: i32) -> (i32, i32) {
    %c0_i32 = arith.constant 0 : i32
    %c0_i32_0 = arith.constant 0 : i32
    return %arg0, %c0_i32 : i32, i32
  }
  func.func @transform_1(%arg0: i32) -> (i32, i32) {
    %c0_i32 = arith.constant 0 : i32
    %c0_i32_0 = arith.constant 0 : i32
    %c0_i32_1 = arith.constant 0 : i32
    return %c0_i32, %c0_i32_0 : i32, i32
  }
  func.func @transform_2(%arg0: i32) -> (i32, i32) {
    %c0_i32 = arith.constant 0 : i32
    %c0_i32_0 = arith.constant 0 : i32
    %c0_i32_1 = arith.constant 0 : i32
    return %c0_i32, %c0_i32_0 : i32, i32
  }
  func.func @transform_3(%arg0: i32) -> (i32, i32) {
    %c0_i32 = arith.constant 0 : i32
    %c0_i32_0 = arith.constant 0 : i32
    %c0_i32_1 = arith.constant 0 : i32
    return %c0_i32, %c0_i32_0 : i32, i32
  }
  func.func @transform_4(%arg0: i32) -> (i32, i32) {
    %c0_i32 = arith.constant 0 : i32
    %c0_i32_0 = arith.constant 0 : i32
    %c0_i32_1 = arith.constant 0 : i32
    return %c0_i32, %c0_i32_0 : i32, i32
  }
  func.func @transform_5(%arg0: i32) -> (i32, i32) {
    %c0_i32 = arith.constant 0 : i32
    %c0_i32_0 = arith.constant 0 : i32
    %c0_i32_1 = arith.constant 0 : i32
    return %c0_i32, %c0_i32_0 : i32, i32
  }
  func.func @transform_6(%arg0: i32) -> (i32, i32) {
    %c0_i32 = arith.constant 0 : i32
    %c0_i32_0 = arith.constant 0 : i32
    return %arg0, %c0_i32 : i32, i32
  }
}

</mosaic_0001>

<llo_original>
// kernel: forward.1
$region0: #{forward.1}
  #allocation0 [shape = 'u32[]', space=smem, size = 0x4, offset = 0x4, fixed_abs, tag = 'smem constant byte address 0x4 - core index']
  #allocation1 [shape = 'u32[144,128]{1,0:T(1,128)}', space=vmem, size = 0x12000, scoped, tag = 'internal scratch']
  %s0 = inlined_call_operand.vmem [shape: f32[2048,16], index: 0, kind: input, shape index: {}]
  %s1 = inlined_call_operand.vmem [shape: f32[2048,16], index: 1, kind: input, shape index: {}]
  %s2 = inlined_call_operand.vmem [shape: f32[16,128], index: 2, kind: input, shape index: {}]
  %s3 = inlined_call_operand.vmem [shape: f32[1,128], index: 3, kind: input, shape index: {}]
  %s4 = inlined_call_operand.vmem [shape: f32[128,32], index: 4, kind: input, shape index: {}]
  %s5 = inlined_call_operand.vmem [shape: f32[1,32], index: 5, kind: input, shape index: {}]
  %s6 = inlined_call_operand.vmem [shape: f32[2048,32], index: 6, kind: output, shape index: {}]
  %s7 = sld [smem:[#allocation0]]
  $region34: #{forward.1} parent=0
    _
  %s9 = ssub.s32 1, %s7
  %s10 = scalar_select 0, %s9, %s7
  // Predicated region
  $region2: #{forward.1} parent=0 // pred_check
    _
  $region3: #{forward.1} parent=0 // pred_check_branch
    %12 = sbr.rel (0) target = $region5
  $region4: #{forward.1} parent=0 // pred_region
    _
  $region5: #{forward.1} parent=0 // pred_fallthru
    _
  // Predicated region
  $region6: #{forward.1} parent=0 // pred_check
    _
  $region7: #{forward.1} parent=0 // pred_check_branch
    %14 = sbr.rel (0) target = $region9
  $region8: #{forward.1} parent=0 // pred_region
    _
  $region9: #{forward.1} parent=0 // pred_fallthru
    _
  // Predicated region
  $region10: #{forward.1} parent=0 // pred_check
    _
  $region11: #{forward.1} parent=0 // pred_check_branch
    %16 = sbr.rel (0) target = $region13
  $region12: #{forward.1} parent=0 // pred_region
    _
  $region13: #{forward.1} parent=0 // pred_fallthru
    _
  // Predicated region
  $region14: #{forward.1} parent=0 // pred_check
    _
  $region15: #{forward.1} parent=0 // pred_check_branch
    %18 = sbr.rel (0) target = $region17
  $region16: #{forward.1} parent=0 // pred_region
    _
  $region17: #{forward.1} parent=0 // pred_fallthru
    _
  // Predicated region
  $region18: #{forward.1} parent=0 // pred_check
    _
  $region19: #{forward.1} parent=0 // pred_check_branch
    %20 = sbr.rel (0) target = $region21
  $region20: #{forward.1} parent=0 // pred_region
    _
  $region21: #{forward.1} parent=0 // pred_fallthru
    _
  // Predicated region
  $region22: #{forward.1} parent=0 // pred_check
    _
  $region23: #{forward.1} parent=0 // pred_check_branch
    %22 = sbr.rel (0) target = $region25
  $region24: #{forward.1} parent=0 // pred_region
    _
  $region25: #{forward.1} parent=0 // pred_fallthru
    _
  %v23 = vld [vmem:[%s0] sm:$0xff]
  %v24 = vld [vmem:[%s0 + $0x8] sm:$0xff]
  %v25 = vld [vmem:[%s0 + $0x10] sm:$0xff]
  %v26 = vld [vmem:[%s0 + $0x18] sm:$0xff]
  %v27 = vld [vmem:[%s0 + $0x20] sm:$0xff]
  %v28 = vld [vmem:[%s0 + $0x28] sm:$0xff]
  %v29 = vld [vmem:[%s0 + $0x30] sm:$0xff]
  %v30 = vld [vmem:[%s0 + $0x38] sm:$0xff]
  %v31 = vld [vmem:[%s0 + $0x40] sm:$0xff]
  %v32 = vld [vmem:[%s0 + $0x48] sm:$0xff]
  %v33 = vld [vmem:[%s0 + $0x50] sm:$0xff]
  %v34 = vld [vmem:[%s0 + $0x58] sm:$0xff]
  %v35 = vld [vmem:[%s0 + $0x60] sm:$0xff]
  %v36 = vld [vmem:[%s0 + $0x68] sm:$0xff]
  %v37 = vld [vmem:[%s0 + $0x70] sm:$0xff]
  %v38 = vld [vmem:[%s0 + $0x78] sm:$0xff]
  %v39 = vld [vmem:[%s0 + $0x80] sm:$0xff]
  %v40 = vld [vmem:[%s0 + $0x88] sm:$0xff]
  %v41 = vld [vmem:[%s0 + $0x90] sm:$0xff]
  %v42 = vld [vmem:[%s0 + $0x98] sm:$0xff]
  %v43 = vld [vmem:[%s0 + $0xa0] sm:$0xff]
  %v44 = vld [vmem:[%s0 + $0xa8] sm:$0xff]
  %v45 = vld [vmem:[%s0 + $0xb0] sm:$0xff]
  %v46 = vld [vmem:[%s0 + $0xb8] sm:$0xff]
  %v47 = vld [vmem:[%s0 + $0xc0] sm:$0xff]
  %v48 = vld [vmem:[%s0 + $0xc8] sm:$0xff]
  %v49 = vld [vmem:[%s0 + $0xd0] sm:$0xff]
  %v50 = vld [vmem:[%s0 + $0xd8] sm:$0xff]
  %v51 = vld [vmem:[%s0 + $0xe0] sm:$0xff]
  %v52 = vld [vmem:[%s0 + $0xe8] sm:$0xff]
  %v53 = vld [vmem:[%s0 + $0xf0] sm:$0xff]
  %v54 = vld [vmem:[%s0 + $0xf8] sm:$0xff]
  %v55 = vld [vmem:[%s0 + $0x100] sm:$0xff]
  %v56 = vld [vmem:[%s0 + $0x108] sm:$0xff]
  %v57 = vld [vmem:[%s0 + $0x110] sm:$0xff]
  %v58 = vld [vmem:[%s0 + $0x118] sm:$0xff]
  %v59 = vld [vmem:[%s0 + $0x120] sm:$0xff]
  %v60 = vld [vmem:[%s0 + $0x128] sm:$0xff]
  %v61 = vld [vmem:[%s0 + $0x130] sm:$0xff]
  %v62 = vld [vmem:[%s0 + $0x138] sm:$0xff]
  %v63 = vld [vmem:[%s0 + $0x140] sm:$0xff]
  %v64 = vld [vmem:[%s0 + $0x148] sm:$0xff]
  %v65 = vld [vmem:[%s0 + $0x150] sm:$0xff]
  %v66 = vld [vmem:[%s0 + $0x158] sm:$0xff]
  %v67 = vld [vmem:[%s0 + $0x160] sm:$0xff]
  %v68 = vld [vmem:[%s0 + $0x168] sm:$0xff]
  %v69 = vld [vmem:[%s0 + $0x170] sm:$0xff]
  %v70 = vld [vmem:[%s0 + $0x178] sm:$0xff]
  %v71 = vld [vmem:[%s0 + $0x180] sm:$0xff]
  %v72 = vld [vmem:[%s0 + $0x188] sm:$0xff]
  %v73 = vld [vmem:[%s0 + $0x190] sm:$0xff]
  %v74 = vld [vmem:[%s0 + $0x198] sm:$0xff]
  %v75 = vld [vmem:[%s0 + $0x1a0] sm:$0xff]
  %v76 = vld [vmem:[%s0 + $0x1a8] sm:$0xff]
  %v77 = vld [vmem:[%s0 + $0x1b0] sm:$0xff]
  %v78 = vld [vmem:[%s0 + $0x1b8] sm:$0xff]
  %v79 = vld [vmem:[%s0 + $0x1c0] sm:$0xff]
  %v80 = vld [vmem:[%s0 + $0x1c8] sm:$0xff]
  %v81 = vld [vmem:[%s0 + $0x1d0] sm:$0xff]
  %v82 = vld [vmem:[%s0 + $0x1d8] sm:$0xff]
  %v83 = vld [vmem:[%s0 + $0x1e0] sm:$0xff]
  %v84 = vld [vmem:[%s0 + $0x1e8] sm:$0xff]
  %v85 = vld [vmem:[%s0 + $0x1f0] sm:$0xff]
  %v86 = vld [vmem:[%s0 + $0x1f8] sm:$0xff]
  %v87 = vld [vmem:[%s0 + $0x200] sm:$0xff]
  %v88 = vld [vmem:[%s0 + $0x208] sm:$0xff]
  %v89 = vld [vmem:[%s0 + $0x210] sm:$0xff]
  %v90 = vld [vmem:[%s0 + $0x218] sm:$0xff]
  %v91 = vld [vmem:[%s0 + $0x220] sm:$0xff]
  %v92 = vld [vmem:[%s0 + $0x228] sm:$0xff]
  %v93 = vld [vmem:[%s0 + $0x230] sm:$0xff]
  %v94 = vld [vmem:[%s0 + $0x238] sm:$0xff]
  %v95 = vld [vmem:[%s0 + $0x240] sm:$0xff]
  %v96 = vld [vmem:[%s0 + $0x248] sm:$0xff]
  %v97 = vld [vmem:[%s0 + $0x250] sm:$0xff]
  %v98 = vld [vmem:[%s0 + $0x258] sm:$0xff]
  %v99 = vld [vmem:[%s0 + $0x260] sm:$0xff]
  %v100 = vld [vmem:[%s0 + $0x268] sm:$0xff]
  %v101 = vld [vmem:[%s0 + $0x270] sm:$0xff]
  %v102 = vld [vmem:[%s0 + $0x278] sm:$0xff]
  %v103 = vld [vmem:[%s0 + $0x280] sm:$0xff]
  %v104 = vld [vmem:[%s0 + $0x288] sm:$0xff]
  %v105 = vld [vmem:[%s0 + $0x290] sm:$0xff]
  %v106 = vld [vmem:[%s0 + $0x298] sm:$0xff]
  %v107 = vld [vmem:[%s0 + $0x2a0] sm:$0xff]
  %v108 = vld [vmem:[%s0 + $0x2a8] sm:$0xff]
  %v109 = vld [vmem:[%s0 + $0x2b0] sm:$0xff]
  %v110 = vld [vmem:[%s0 + $0x2b8] sm:$0xff]
  %v111 = vld [vmem:[%s0 + $0x2c0] sm:$0xff]
  %v112 = vld [vmem:[%s0 + $0x2c8] sm:$0xff]
  %v113 = vld [vmem:[%s0 + $0x2d0] sm:$0xff]
  %v114 = vld [vmem:[%s0 + $0x2d8] sm:$0xff]
  %v115 = vld [vmem:[%s0 + $0x2e0] sm:$0xff]
  %v116 = vld [vmem:[%s0 + $0x2e8] sm:$0xff]
  %v117 = vld [vmem:[%s0 + $0x2f0] sm:$0xff]
  %v118 = vld [vmem:[%s0 + $0x2f8] sm:$0xff]
  %v119 = vld [vmem:[%s0 + $0x300] sm:$0xff]
  %v120 = vld [vmem:[%s0 + $0x308] sm:$0xff]
  %v121 = vld [vmem:[%s0 + $0x310] sm:$0xff]
  %v122 = vld [vmem:[%s0 + $0x318] sm:$0xff]
  %v123 = vld [vmem:[%s0 + $0x320] sm:$0xff]
  %v124 = vld [vmem:[%s0 + $0x328] sm:$0xff]
  %v125 = vld [vmem:[%s0 + $0x330] sm:$0xff]
  %v126 = vld [vmem:[%s0 + $0x338] sm:$0xff]
  %v127 = vld [vmem:[%s0 + $0x340] sm:$0xff]
  %v128 = vld [vmem:[%s0 + $0x348] sm:$0xff]
  %v129 = vld [vmem:[%s0 + $0x350] sm:$0xff]
  %v130 = vld [vmem:[%s0 + $0x358] sm:$0xff]
  %v131 = vld [vmem:[%s0 + $0x360] sm:$0xff]
  %v132 = vld [vmem:[%s0 + $0x368] sm:$0xff]
  %v133 = vld [vmem:[%s0 + $0x370] sm:$0xff]
  %v134 = vld [vmem:[%s0 + $0x378] sm:$0xff]
  %v135 = vld [vmem:[%s0 + $0x380] sm:$0xff]
  %v136 = vld [vmem:[%s0 + $0x388] sm:$0xff]
  %v137 = vld [vmem:[%s0 + $0x390] sm:$0xff]
  %v138 = vld [vmem:[%s0 + $0x398] sm:$0xff]
  %v139 = vld [vmem:[%s0 + $0x3a0] sm:$0xff]
  %v140 = vld [vmem:[%s0 + $0x3a8] sm:$0xff]
  %v141 = vld [vmem:[%s0 + $0x3b0] sm:$0xff]
  %v142 = vld [vmem:[%s0 + $0x3b8] sm:$0xff]
  %v143 = vld [vmem:[%s0 + $0x3c0] sm:$0xff]
  %v144 = vld [vmem:[%s0 + $0x3c8] sm:$0xff]
  %v145 = vld [vmem:[%s0 + $0x3d0] sm:$0xff]
  %v146 = vld [vmem:[%s0 + $0x3d8] sm:$0xff]
  %v147 = vld [vmem:[%s0 + $0x3e0] sm:$0xff]
  %v148 = vld [vmem:[%s0 + $0x3e8] sm:$0xff]
  %v149 = vld [vmem:[%s0 + $0x3f0] sm:$0xff]
  %v150 = vld [vmem:[%s0 + $0x3f8] sm:$0xff]
  %v151 = vld [vmem:[%s0 + $0x400] sm:$0xff]
  %v152 = vld [vmem:[%s0 + $0x408] sm:$0xff]
  %v153 = vld [vmem:[%s0 + $0x410] sm:$0xff]
  %v154 = vld [vmem:[%s0 + $0x418] sm:$0xff]
  %v155 = vld [vmem:[%s0 + $0x420] sm:$0xff]
  %v156 = vld [vmem:[%s0 + $0x428] sm:$0xff]
  %v157 = vld [vmem:[%s0 + $0x430] sm:$0xff]
  %v158 = vld [vmem:[%s0 + $0x438] sm:$0xff]
  %v159 = vld [vmem:[%s0 + $0x440] sm:$0xff]
  %v160 = vld [vmem:[%s0 + $0x448] sm:$0xff]
  %v161 = vld [vmem:[%s0 + $0x450] sm:$0xff]
  %v162 = vld [vmem:[%s0 + $0x458] sm:$0xff]
  %v163 = vld [vmem:[%s0 + $0x460] sm:$0xff]
  %v164 = vld [vmem:[%s0 + $0x468] sm:$0xff]
  %v165 = vld [vmem:[%s0 + $0x470] sm:$0xff]
  %v166 = vld [vmem:[%s0 + $0x478] sm:$0xff]
  %v167 = vld [vmem:[%s0 + $0x480] sm:$0xff]
  %v168 = vld [vmem:[%s0 + $0x488] sm:$0xff]
  %v169 = vld [vmem:[%s0 + $0x490] sm:$0xff]
  %v170 = vld [vmem:[%s0 + $0x498] sm:$0xff]
  %v171 = vld [vmem:[%s0 + $0x4a0] sm:$0xff]
  %v172 = vld [vmem:[%s0 + $0x4a8] sm:$0xff]
  %v173 = vld [vmem:[%s0 + $0x4b0] sm:$0xff]
  %v174 = vld [vmem:[%s0 + $0x4b8] sm:$0xff]
  %v175 = vld [vmem:[%s0 + $0x4c0] sm:$0xff]
  %v176 = vld [vmem:[%s0 + $0x4c8] sm:$0xff]
  %v177 = vld [vmem:[%s0 + $0x4d0] sm:$0xff]
  %v178 = vld [vmem:[%s0 + $0x4d8] sm:$0xff]
  %v179 = vld [vmem:[%s0 + $0x4e0] sm:$0xff]
  %v180 = vld [vmem:[%s0 + $0x4e8] sm:$0xff]
  %v181 = vld [vmem:[%s0 + $0x4f0] sm:$0xff]
  %v182 = vld [vmem:[%s0 + $0x4f8] sm:$0xff]
  %v183 = vld [vmem:[%s0 + $0x500] sm:$0xff]
  %v184 = vld [vmem:[%s0 + $0x508] sm:$0xff]
  %v185 = vld [vmem:[%s0 + $0x510] sm:$0xff]
  %v186 = vld [vmem:[%s0 + $0x518] sm:$0xff]
  %v187 = vld [vmem:[%s0 + $0x520] sm:$0xff]
  %v188 = vld [vmem:[%s0 + $0x528] sm:$0xff]
  %v189 = vld [vmem:[%s0 + $0x530] sm:$0xff]
  %v190 = vld [vmem:[%s0 + $0x538] sm:$0xff]
  %v191 = vld [vmem:[%s0 + $0x540] sm:$0xff]
  %v192 = vld [vmem:[%s0 + $0x548] sm:$0xff]
  %v193 = vld [vmem:[%s0 + $0x550] sm:$0xff]
  %v194 = vld [vmem:[%s0 + $0x558] sm:$0xff]
  %v195 = vld [vmem:[%s0 + $0x560] sm:$0xff]
  %v196 = vld [vmem:[%s0 + $0x568] sm:$0xff]
  %v197 = vld [vmem:[%s0 + $0x570] sm:$0xff]
  %v198 = vld [vmem:[%s0 + $0x578] sm:$0xff]
  %v199 = vld [vmem:[%s0 + $0x580] sm:$0xff]
  %v200 = vld [vmem:[%s0 + $0x588] sm:$0xff]
  %v201 = vld [vmem:[%s0 + $0x590] sm:$0xff]
  %v202 = vld [vmem:[%s0 + $0x598] sm:$0xff]
  %v203 = vld [vmem:[%s0 + $0x5a0] sm:$0xff]
  %v204 = vld [vmem:[%s0 + $0x5a8] sm:$0xff]
  %v205 = vld [vmem:[%s0 + $0x5b0] sm:$0xff]
  %v206 = vld [vmem:[%s0 + $0x5b8] sm:$0xff]
  %v207 = vld [vmem:[%s0 + $0x5c0] sm:$0xff]
  %v208 = vld [vmem:[%s0 + $0x5c8] sm:$0xff]
  %v209 = vld [vmem:[%s0 + $0x5d0] sm:$0xff]
  %v210 = vld [vmem:[%s0 + $0x5d8] sm:$0xff]
  %v211 = vld [vmem:[%s0 + $0x5e0] sm:$0xff]
  %v212 = vld [vmem:[%s0 + $0x5e8] sm:$0xff]
  %v213 = vld [vmem:[%s0 + $0x5f0] sm:$0xff]
  %v214 = vld [vmem:[%s0 + $0x5f8] sm:$0xff]
  %v215 = vld [vmem:[%s0 + $0x600] sm:$0xff]
  %v216 = vld [vmem:[%s0 + $0x608] sm:$0xff]
  %v217 = vld [vmem:[%s0 + $0x610] sm:$0xff]
  %v218 = vld [vmem:[%s0 + $0x618] sm:$0xff]
  %v219 = vld [vmem:[%s0 + $0x620] sm:$0xff]
  %v220 = vld [vmem:[%s0 + $0x628] sm:$0xff]
  %v221 = vld [vmem:[%s0 + $0x630] sm:$0xff]
  %v222 = vld [vmem:[%s0 + $0x638] sm:$0xff]
  %v223 = vld [vmem:[%s0 + $0x640] sm:$0xff]
  %v224 = vld [vmem:[%s0 + $0x648] sm:$0xff]
  %v225 = vld [vmem:[%s0 + $0x650] sm:$0xff]
  %v226 = vld [vmem:[%s0 + $0x658] sm:$0xff]
  %v227 = vld [vmem:[%s0 + $0x660] sm:$0xff]
  %v228 = vld [vmem:[%s0 + $0x668] sm:$0xff]
  %v229 = vld [vmem:[%s0 + $0x670] sm:$0xff]
  %v230 = vld [vmem:[%s0 + $0x678] sm:$0xff]
  %v231 = vld [vmem:[%s0 + $0x680] sm:$0xff]
  %v232 = vld [vmem:[%s0 + $0x688] sm:$0xff]
  %v233 = vld [vmem:[%s0 + $0x690] sm:$0xff]
  %v234 = vld [vmem:[%s0 + $0x698] sm:$0xff]
  %v235 = vld [vmem:[%s0 + $0x6a0] sm:$0xff]
  %v236 = vld [vmem:[%s0 + $0x6a8] sm:$0xff]
  %v237 = vld [vmem:[%s0 + $0x6b0] sm:$0xff]
  %v238 = vld [vmem:[%s0 + $0x6b8] sm:$0xff]
  %v239 = vld [vmem:[%s0 + $0x6c0] sm:$0xff]
  %v240 = vld [vmem:[%s0 + $0x6c8] sm:$0xff]
  %v241 = vld [vmem:[%s0 + $0x6d0] sm:$0xff]
  %v242 = vld [vmem:[%s0 + $0x6d8] sm:$0xff]
  %v243 = vld [vmem:[%s0 + $0x6e0] sm:$0xff]
  %v244 = vld [vmem:[%s0 + $0x6e8] sm:$0xff]
  %v245 = vld [vmem:[%s0 + $0x6f0] sm:$0xff]
  %v246 = vld [vmem:[%s0 + $0x6f8] sm:$0xff]
  %v247 = vld [vmem:[%s0 + $0x700] sm:$0xff]
  %v248 = vld [vmem:[%s0 + $0x708] sm:$0xff]
  %v249 = vld [vmem:[%s0 + $0x710] sm:$0xff]
  %v250 = vld [vmem:[%s0 + $0x718] sm:$0xff]
  %v251 = vld [vmem:[%s0 + $0x720] sm:$0xff]
  %v252 = vld [vmem:[%s0 + $0x728] sm:$0xff]
  %v253 = vld [vmem:[%s0 + $0x730] sm:$0xff]
  %v254 = vld [vmem:[%s0 + $0x738] sm:$0xff]
  %v255 = vld [vmem:[%s0 + $0x740] sm:$0xff]
  %v256 = vld [vmem:[%s0 + $0x748] sm:$0xff]
  %v257 = vld [vmem:[%s0 + $0x750] sm:$0xff]
  %v258 = vld [vmem:[%s0 + $0x758] sm:$0xff]
  %v259 = vld [vmem:[%s0 + $0x760] sm:$0xff]
  %v260 = vld [vmem:[%s0 + $0x768] sm:$0xff]
  %v261 = vld [vmem:[%s0 + $0x770] sm:$0xff]
  %v262 = vld [vmem:[%s0 + $0x778] sm:$0xff]
  %v263 = vld [vmem:[%s0 + $0x780] sm:$0xff]
  %v264 = vld [vmem:[%s0 + $0x788] sm:$0xff]
  %v265 = vld [vmem:[%s0 + $0x790] sm:$0xff]
  %v266 = vld [vmem:[%s0 + $0x798] sm:$0xff]
  %v267 = vld [vmem:[%s0 + $0x7a0] sm:$0xff]
  %v268 = vld [vmem:[%s0 + $0x7a8] sm:$0xff]
  %v269 = vld [vmem:[%s0 + $0x7b0] sm:$0xff]
  %v270 = vld [vmem:[%s0 + $0x7b8] sm:$0xff]
  %v271 = vld [vmem:[%s0 + $0x7c0] sm:$0xff]
  %v272 = vld [vmem:[%s0 + $0x7c8] sm:$0xff]
  %v273 = vld [vmem:[%s0 + $0x7d0] sm:$0xff]
  %v274 = vld [vmem:[%s0 + $0x7d8] sm:$0xff]
  %v275 = vld [vmem:[%s0 + $0x7e0] sm:$0xff]
  %v276 = vld [vmem:[%s0 + $0x7e8] sm:$0xff]
  %v277 = vld [vmem:[%s0 + $0x7f0] sm:$0xff]
  %v278 = vld [vmem:[%s0 + $0x7f8] sm:$0xff]
  %v279 = vld [vmem:[%s1] sm:$0xff]
  %v280 = vld [vmem:[%s1 + $0x8] sm:$0xff]
  %v281 = vld [vmem:[%s1 + $0x10] sm:$0xff]
  %v282 = vld [vmem:[%s1 + $0x18] sm:$0xff]
  %v283 = vld [vmem:[%s1 + $0x20] sm:$0xff]
  %v284 = vld [vmem:[%s1 + $0x28] sm:$0xff]
  %v285 = vld [vmem:[%s1 + $0x30] sm:$0xff]
  %v286 = vld [vmem:[%s1 + $0x38] sm:$0xff]
  %v287 = vld [vmem:[%s1 + $0x40] sm:$0xff]
  %v288 = vld [vmem:[%s1 + $0x48] sm:$0xff]
  %v289 = vld [vmem:[%s1 + $0x50] sm:$0xff]
  %v290 = vld [vmem:[%s1 + $0x58] sm:$0xff]
  %v291 = vld [vmem:[%s1 + $0x60] sm:$0xff]
  %v292 = vld [vmem:[%s1 + $0x68] sm:$0xff]
  %v293 = vld [vmem:[%s1 + $0x70] sm:$0xff]
  %v294 = vld [vmem:[%s1 + $0x78] sm:$0xff]
  %v295 = vld [vmem:[%s1 + $0x80] sm:$0xff]
  %v296 = vld [vmem:[%s1 + $0x88] sm:$0xff]
  %v297 = vld [vmem:[%s1 + $0x90] sm:$0xff]
  %v298 = vld [vmem:[%s1 + $0x98] sm:$0xff]
  %v299 = vld [vmem:[%s1 + $0xa0] sm:$0xff]
  %v300 = vld [vmem:[%s1 + $0xa8] sm:$0xff]
  %v301 = vld [vmem:[%s1 + $0xb0] sm:$0xff]
  %v302 = vld [vmem:[%s1 + $0xb8] sm:$0xff]
  %v303 = vld [vmem:[%s1 + $0xc0] sm:$0xff]
  %v304 = vld [vmem:[%s1 + $0xc8] sm:$0xff]
  %v305 = vld [vmem:[%s1 + $0xd0] sm:$0xff]
  %v306 = vld [vmem:[%s1 + $0xd8] sm:$0xff]
  %v307 = vld [vmem:[%s1 + $0xe0] sm:$0xff]
  %v308 = vld [vmem:[%s1 + $0xe8] sm:$0xff]
  %v309 = vld [vmem:[%s1 + $0xf0] sm:$0xff]
  %v310 = vld [vmem:[%s1 + $0xf8] sm:$0xff]
  %v311 = vld [vmem:[%s1 + $0x100] sm:$0xff]
  %v312 = vld [vmem:[%s1 + $0x108] sm:$0xff]
  %v313 = vld [vmem:[%s1 + $0x110] sm:$0xff]
  %v314 = vld [vmem:[%s1 + $0x118] sm:$0xff]
  %v315 = vld [vmem:[%s1 + $0x120] sm:$0xff]
  %v316 = vld [vmem:[%s1 + $0x128] sm:$0xff]
  %v317 = vld [vmem:[%s1 + $0x130] sm:$0xff]
  %v318 = vld [vmem:[%s1 + $0x138] sm:$0xff]
  %v319 = vld [vmem:[%s1 + $0x140] sm:$0xff]
  %v320 = vld [vmem:[%s1 + $0x148] sm:$0xff]
  %v321 = vld [vmem:[%s1 + $0x150] sm:$0xff]
  %v322 = vld [vmem:[%s1 + $0x158] sm:$0xff]
  %v323 = vld [vmem:[%s1 + $0x160] sm:$0xff]
  %v324 = vld [vmem:[%s1 + $0x168] sm:$0xff]
  %v325 = vld [vmem:[%s1 + $0x170] sm:$0xff]
  %v326 = vld [vmem:[%s1 + $0x178] sm:$0xff]
  %v327 = vld [vmem:[%s1 + $0x180] sm:$0xff]
  %v328 = vld [vmem:[%s1 + $0x188] sm:$0xff]
  %v329 = vld [vmem:[%s1 + $0x190] sm:$0xff]
  %v330 = vld [vmem:[%s1 + $0x198] sm:$0xff]
  %v331 = vld [vmem:[%s1 + $0x1a0] sm:$0xff]
  %v332 = vld [vmem:[%s1 + $0x1a8] sm:$0xff]
  %v333 = vld [vmem:[%s1 + $0x1b0] sm:$0xff]
  %v334 = vld [vmem:[%s1 + $0x1b8] sm:$0xff]
  %v335 = vld [vmem:[%s1 + $0x1c0] sm:$0xff]
  %v336 = vld [vmem:[%s1 + $0x1c8] sm:$0xff]
  %v337 = vld [vmem:[%s1 + $0x1d0] sm:$0xff]
  %v338 = vld [vmem:[%s1 + $0x1d8] sm:$0xff]
  %v339 = vld [vmem:[%s1 + $0x1e0] sm:$0xff]
  %v340 = vld [vmem:[%s1 + $0x1e8] sm:$0xff]
  %v341 = vld [vmem:[%s1 + $0x1f0] sm:$0xff]
  %v342 = vld [vmem:[%s1 + $0x1f8] sm:$0xff]
  %v343 = vld [vmem:[%s1 + $0x200] sm:$0xff]
  %v344 = vld [vmem:[%s1 + $0x208] sm:$0xff]
  %v345 = vld [vmem:[%s1 + $0x210] sm:$0xff]
  %v346 = vld [vmem:[%s1 + $0x218] sm:$0xff]
  %v347 = vld [vmem:[%s1 + $0x220] sm:$0xff]
  %v348 = vld [vmem:[%s1 + $0x228] sm:$0xff]
  %v349 = vld [vmem:[%s1 + $0x230] sm:$0xff]
  %v350 = vld [vmem:[%s1 + $0x238] sm:$0xff]
  %v351 = vld [vmem:[%s1 + $0x240] sm:$0xff]
  %v352 = vld [vmem:[%s1 + $0x248] sm:$0xff]
  %v353 = vld [vmem:[%s1 + $0x250] sm:$0xff]
  %v354 = vld [vmem:[%s1 + $0x258] sm:$0xff]
  %v355 = vld [vmem:[%s1 + $0x260] sm:$0xff]
  %v356 = vld [vmem:[%s1 + $0x268] sm:$0xff]
  %v357 = vld [vmem:[%s1 + $0x270] sm:$0xff]
  %v358 = vld [vmem:[%s1 + $0x278] sm:$0xff]
  %v359 = vld [vmem:[%s1 + $0x280] sm:$0xff]
  %v360 = vld [vmem:[%s1 + $0x288] sm:$0xff]
  %v361 = vld [vmem:[%s1 + $0x290] sm:$0xff]
  %v362 = vld [vmem:[%s1 + $0x298] sm:$0xff]
  %v363 = vld [vmem:[%s1 + $0x2a0] sm:$0xff]
  %v364 = vld [vmem:[%s1 + $0x2a8] sm:$0xff]
  %v365 = vld [vmem:[%s1 + $0x2b0] sm:$0xff]
  %v366 = vld [vmem:[%s1 + $0x2b8] sm:$0xff]
  %v367 = vld [vmem:[%s1 + $0x2c0] sm:$0xff]
  %v368 = vld [vmem:[%s1 + $0x2c8] sm:$0xff]
  %v369 = vld [vmem:[%s1 + $0x2d0] sm:$0xff]
  %v370 = vld [vmem:[%s1 + $0x2d8] sm:$0xff]
  %v371 = vld [vmem:[%s1 + $0x2e0] sm:$0xff]
  %v372 = vld [vmem:[%s1 + $0x2e8] sm:$0xff]
  %v373 = vld [vmem:[%s1 + $0x2f0] sm:$0xff]
  %v374 = vld [vmem:[%s1 + $0x2f8] sm:$0xff]
  %v375 = vld [vmem:[%s1 + $0x300] sm:$0xff]
  %v376 = vld [vmem:[%s1 + $0x308] sm:$0xff]
  %v377 = vld [vmem:[%s1 + $0x310] sm:$0xff]
  %v378 = vld [vmem:[%s1 + $0x318] sm:$0xff]
  %v379 = vld [vmem:[%s1 + $0x320] sm:$0xff]
  %v380 = vld [vmem:[%s1 + $0x328] sm:$0xff]
  %v381 = vld [vmem:[%s1 + $0x330] sm:$0xff]
  %v382 = vld [vmem:[%s1 + $0x338] sm:$0xff]
  %v383 = vld [vmem:[%s1 + $0x340] sm:$0xff]
  %v384 = vld [vmem:[%s1 + $0x348] sm:$0xff]
  %v385 = vld [vmem:[%s1 + $0x350] sm:$0xff]
  %v386 = vld [vmem:[%s1 + $0x358] sm:$0xff]
  %v387 = vld [vmem:[%s1 + $0x360] sm:$0xff]
  %v388 = vld [vmem:[%s1 + $0x368] sm:$0xff]
  %v389 = vld [vmem:[%s1 + $0x370] sm:$0xff]
  %v390 = vld [vmem:[%s1 + $0x378] sm:$0xff]
  %v391 = vld [vmem:[%s1 + $0x380] sm:$0xff]
  %v392 = vld [vmem:[%s1 + $0x388] sm:$0xff]
  %v393 = vld [vmem:[%s1 + $0x390] sm:$0xff]
  %v394 = vld [vmem:[%s1 + $0x398] sm:$0xff]
  %v395 = vld [vmem:[%s1 + $0x3a0] sm:$0xff]
  %v396 = vld [vmem:[%s1 + $0x3a8] sm:$0xff]
  %v397 = vld [vmem:[%s1 + $0x3b0] sm:$0xff]
  %v398 = vld [vmem:[%s1 + $0x3b8] sm:$0xff]
  %v399 = vld [vmem:[%s1 + $0x3c0] sm:$0xff]
  %v400 = vld [vmem:[%s1 + $0x3c8] sm:$0xff]
  %v401 = vld [vmem:[%s1 + $0x3d0] sm:$0xff]
  %v402 = vld [vmem:[%s1 + $0x3d8] sm:$0xff]
  %v403 = vld [vmem:[%s1 + $0x3e0] sm:$0xff]
  %v404 = vld [vmem:[%s1 + $0x3e8] sm:$0xff]
  %v405 = vld [vmem:[%s1 + $0x3f0] sm:$0xff]
  %v406 = vld [vmem:[%s1 + $0x3f8] sm:$0xff]
  %v407 = vld [vmem:[%s1 + $0x400] sm:$0xff]
  %v408 = vld [vmem:[%s1 + $0x408] sm:$0xff]
  %v409 = vld [vmem:[%s1 + $0x410] sm:$0xff]
  %v410 = vld [vmem:[%s1 + $0x418] sm:$0xff]
  %v411 = vld [vmem:[%s1 + $0x420] sm:$0xff]
  %v412 = vld [vmem:[%s1 + $0x428] sm:$0xff]
  %v413 = vld [vmem:[%s1 + $0x430] sm:$0xff]
  %v414 = vld [vmem:[%s1 + $0x438] sm:$0xff]
  %v415 = vld [vmem:[%s1 + $0x440] sm:$0xff]
  %v416 = vld [vmem:[%s1 + $0x448] sm:$0xff]
  %v417 = vld [vmem:[%s1 + $0x450] sm:$0xff]
  %v418 = vld [vmem:[%s1 + $0x458] sm:$0xff]
  %v419 = vld [vmem:[%s1 + $0x460] sm:$0xff]
  %v420 = vld [vmem:[%s1 + $0x468] sm:$0xff]
  %v421 = vld [vmem:[%s1 + $0x470] sm:$0xff]
  %v422 = vld [vmem:[%s1 + $0x478] sm:$0xff]
  %v423 = vld [vmem:[%s1 + $0x480] sm:$0xff]
  %v424 = vld [vmem:[%s1 + $0x488] sm:$0xff]
  %v425 = vld [vmem:[%s1 + $0x490] sm:$0xff]
  %v426 = vld [vmem:[%s1 + $0x498] sm:$0xff]
  %v427 = vld [vmem:[%s1 + $0x4a0] sm:$0xff]
  %v428 = vld [vmem:[%s1 + $0x4a8] sm:$0xff]
  %v429 = vld [vmem:[%s1 + $0x4b0] sm:$0xff]
  %v430 = vld [vmem:[%s1 + $0x4b8] sm:$0xff]
  %v431 = vld [vmem:[%s1 + $0x4c0] sm:$0xff]
  %v432 = vld [vmem:[%s1 + $0x4c8] sm:$0xff]
  %v433 = vld [vmem:[%s1 + $0x4d0] sm:$0xff]
  %v434 = vld [vmem:[%s1 + $0x4d8] sm:$0xff]
  %v435 = vld [vmem:[%s1 + $0x4e0] sm:$0xff]
  %v436 = vld [vmem:[%s1 + $0x4e8] sm:$0xff]
  %v437 = vld [vmem:[%s1 + $0x4f0] sm:$0xff]
  %v438 = vld [vmem:[%s1 + $0x4f8] sm:$0xff]
  %v439 = vld [vmem:[%s1 + $0x500] sm:$0xff]
  %v440 = vld [vmem:[%s1 + $0x508] sm:$0xff]
  %v441 = vld [vmem:[%s1 + $0x510] sm:$0xff]
  %v442 = vld [vmem:[%s1 + $0x518] sm:$0xff]
  %v443 = vld [vmem:[%s1 + $0x520] sm:$0xff]
  %v444 = vld [vmem:[%s1 + $0x528] sm:$0xff]
  %v445 = vld [vmem:[%s1 + $0x530] sm:$0xff]
  %v446 = vld [vmem:[%s1 + $0x538] sm:$0xff]
  %v447 = vld [vmem:[%s1 + $0x540] sm:$0xff]
  %v448 = vld [vmem:[%s1 + $0x548] sm:$0xff]
  %v449 = vld [vmem:[%s1 + $0x550] sm:$0xff]
  %v450 = vld [vmem:[%s1 + $0x558] sm:$0xff]
  %v451 = vld [vmem:[%s1 + $0x560] sm:$0xff]
  %v452 = vld [vmem:[%s1 + $0x568] sm:$0xff]
  %v453 = vld [vmem:[%s1 + $0x570] sm:$0xff]
  %v454 = vld [vmem:[%s1 + $0x578] sm:$0xff]
  %v455 = vld [vmem:[%s1 + $0x580] sm:$0xff]
  %v456 = vld [vmem:[%s1 + $0x588] sm:$0xff]
  %v457 = vld [vmem:[%s1 + $0x590] sm:$0xff]
  %v458 = vld [vmem:[%s1 + $0x598] sm:$0xff]
  %v459 = vld [vmem:[%s1 + $0x5a0] sm:$0xff]
  %v460 = vld [vmem:[%s1 + $0x5a8] sm:$0xff]
  %v461 = vld [vmem:[%s1 + $0x5b0] sm:$0xff]
  %v462 = vld [vmem:[%s1 + $0x5b8] sm:$0xff]
  %v463 = vld [vmem:[%s1 + $0x5c0] sm:$0xff]
  %v464 = vld [vmem:[%s1 + $0x5c8] sm:$0xff]
  %v465 = vld [vmem:[%s1 + $0x5d0] sm:$0xff]
  %v466 = vld [vmem:[%s1 + $0x5d8] sm:$0xff]
  %v467 = vld [vmem:[%s1 + $0x5e0] sm:$0xff]
  %v468 = vld [vmem:[%s1 + $0x5e8] sm:$0xff]
  %v469 = vld [vmem:[%s1 + $0x5f0] sm:$0xff]
  %v470 = vld [vmem:[%s1 + $0x5f8] sm:$0xff]
  %v471 = vld [vmem:[%s1 + $0x600] sm:$0xff]
  %v472 = vld [vmem:[%s1 + $0x608] sm:$0xff]
  %v473 = vld [vmem:[%s1 + $0x610] sm:$0xff]
  %v474 = vld [vmem:[%s1 + $0x618] sm:$0xff]
  %v475 = vld [vmem:[%s1 + $0x620] sm:$0xff]
  %v476 = vld [vmem:[%s1 + $0x628] sm:$0xff]
  %v477 = vld [vmem:[%s1 + $0x630] sm:$0xff]
  %v478 = vld [vmem:[%s1 + $0x638] sm:$0xff]
  %v479 = vld [vmem:[%s1 + $0x640] sm:$0xff]
  %v480 = vld [vmem:[%s1 + $0x648] sm:$0xff]
  %v481 = vld [vmem:[%s1 + $0x650] sm:$0xff]
  %v482 = vld [vmem:[%s1 + $0x658] sm:$0xff]
  %v483 = vld [vmem:[%s1 + $0x660] sm:$0xff]
  %v484 = vld [vmem:[%s1 + $0x668] sm:$0xff]
  %v485 = vld [vmem:[%s1 + $0x670] sm:$0xff]
  %v486 = vld [vmem:[%s1 + $0x678] sm:$0xff]
  %v487 = vld [vmem:[%s1 + $0x680] sm:$0xff]
  %v488 = vld [vmem:[%s1 + $0x688] sm:$0xff]
  %v489 = vld [vmem:[%s1 + $0x690] sm:$0xff]
  %v490 = vld [vmem:[%s1 + $0x698] sm:$0xff]
  %v491 = vld [vmem:[%s1 + $0x6a0] sm:$0xff]
  %v492 = vld [vmem:[%s1 + $0x6a8] sm:$0xff]
  %v493 = vld [vmem:[%s1 + $0x6b0] sm:$0xff]
  %v494 = vld [vmem:[%s1 + $0x6b8] sm:$0xff]
  %v495 = vld [vmem:[%s1 + $0x6c0] sm:$0xff]
  %v496 = vld [vmem:[%s1 + $0x6c8] sm:$0xff]
  %v497 = vld [vmem:[%s1 + $0x6d0] sm:$0xff]
  %v498 = vld [vmem:[%s1 + $0x6d8] sm:$0xff]
  %v499 = vld [vmem:[%s1 + $0x6e0] sm:$0xff]
  %v500 = vld [vmem:[%s1 + $0x6e8] sm:$0xff]
  %v501 = vld [vmem:[%s1 + $0x6f0] sm:$0xff]
  %v502 = vld [vmem:[%s1 + $0x6f8] sm:$0xff]
  %v503 = vld [vmem:[%s1 + $0x700] sm:$0xff]
  %v504 = vld [vmem:[%s1 + $0x708] sm:$0xff]
  %v505 = vld [vmem:[%s1 + $0x710] sm:$0xff]
  %v506 = vld [vmem:[%s1 + $0x718] sm:$0xff]
  %v507 = vld [vmem:[%s1 + $0x720] sm:$0xff]
  %v508 = vld [vmem:[%s1 + $0x728] sm:$0xff]
  %v509 = vld [vmem:[%s1 + $0x730] sm:$0xff]
  %v510 = vld [vmem:[%s1 + $0x738] sm:$0xff]
  %v511 = vld [vmem:[%s1 + $0x740] sm:$0xff]
  %v512 = vld [vmem:[%s1 + $0x748] sm:$0xff]
  %v513 = vld [vmem:[%s1 + $0x750] sm:$0xff]
  %v514 = vld [vmem:[%s1 + $0x758] sm:$0xff]
  %v515 = vld [vmem:[%s1 + $0x760] sm:$0xff]
  %v516 = vld [vmem:[%s1 + $0x768] sm:$0xff]
  %v517 = vld [vmem:[%s1 + $0x770] sm:$0xff]
  %v518 = vld [vmem:[%s1 + $0x778] sm:$0xff]
  %v519 = vld [vmem:[%s1 + $0x780] sm:$0xff]
  %v520 = vld [vmem:[%s1 + $0x788] sm:$0xff]
  %v521 = vld [vmem:[%s1 + $0x790] sm:$0xff]
  %v522 = vld [vmem:[%s1 + $0x798] sm:$0xff]
  %v523 = vld [vmem:[%s1 + $0x7a0] sm:$0xff]
  %v524 = vld [vmem:[%s1 + $0x7a8] sm:$0xff]
  %v525 = vld [vmem:[%s1 + $0x7b0] sm:$0xff]
  %v526 = vld [vmem:[%s1 + $0x7b8] sm:$0xff]
  %v527 = vld [vmem:[%s1 + $0x7c0] sm:$0xff]
  %v528 = vld [vmem:[%s1 + $0x7c8] sm:$0xff]
  %v529 = vld [vmem:[%s1 + $0x7d0] sm:$0xff]
  %v530 = vld [vmem:[%s1 + $0x7d8] sm:$0xff]
  %v531 = vld [vmem:[%s1 + $0x7e0] sm:$0xff]
  %v532 = vld [vmem:[%s1 + $0x7e8] sm:$0xff]
  %v533 = vld [vmem:[%s1 + $0x7f0] sm:$0xff]
  %v534 = vld [vmem:[%s1 + $0x7f8] sm:$0xff]
  %v535 = vmul.f32 %v23, %v279
  %v536 = vmul.f32 %v24, %v280
  %v537 = vmul.f32 %v25, %v281
  %v538 = vmul.f32 %v26, %v282
  %v539 = vmul.f32 %v27, %v283
  %v540 = vmul.f32 %v28, %v284
  %v541 = vmul.f32 %v29, %v285
  %v542 = vmul.f32 %v30, %v286
  %v543 = vmul.f32 %v31, %v287
  %v544 = vmul.f32 %v32, %v288
  %v545 = vmul.f32 %v33, %v289
  %v546 = vmul.f32 %v34, %v290
  %v547 = vmul.f32 %v35, %v291
  %v548 = vmul.f32 %v36, %v292
  %v549 = vmul.f32 %v37, %v293
  %v550 = vmul.f32 %v38, %v294
  %v551 = vmul.f32 %v39, %v295
  %v552 = vmul.f32 %v40, %v296
  %v553 = vmul.f32 %v41, %v297
  %v554 = vmul.f32 %v42, %v298
  %v555 = vmul.f32 %v43, %v299
  %v556 = vmul.f32 %v44, %v300
  %v557 = vmul.f32 %v45, %v301
  %v558 = vmul.f32 %v46, %v302
  %v559 = vmul.f32 %v47, %v303
  %v560 = vmul.f32 %v48, %v304
  %v561 = vmul.f32 %v49, %v305
  %v562 = vmul.f32 %v50, %v306
  %v563 = vmul.f32 %v51, %v307
  %v564 = vmul.f32 %v52, %v308
  %v565 = vmul.f32 %v53, %v309
  %v566 = vmul.f32 %v54, %v310
  %v567 = vmul.f32 %v55, %v311
  %v568 = vmul.f32 %v56, %v312
  %v569 = vmul.f32 %v57, %v313
  %v570 = vmul.f32 %v58, %v314
  %v571 = vmul.f32 %v59, %v315
  %v572 = vmul.f32 %v60, %v316
  %v573 = vmul.f32 %v61, %v317
  %v574 = vmul.f32 %v62, %v318
  %v575 = vmul.f32 %v63, %v319
  %v576 = vmul.f32 %v64, %v320
  %v577 = vmul.f32 %v65, %v321
  %v578 = vmul.f32 %v66, %v322
  %v579 = vmul.f32 %v67, %v323
  %v580 = vmul.f32 %v68, %v324
  %v581 = vmul.f32 %v69, %v325
  %v582 = vmul.f32 %v70, %v326
  %v583 = vmul.f32 %v71, %v327
  %v584 = vmul.f32 %v72, %v328
  %v585 = vmul.f32 %v73, %v329
  %v586 = vmul.f32 %v74, %v330
  %v587 = vmul.f32 %v75, %v331
  %v588 = vmul.f32 %v76, %v332
  %v589 = vmul.f32 %v77, %v333
  %v590 = vmul.f32 %v78, %v334
  %v591 = vmul.f32 %v79, %v335
  %v592 = vmul.f32 %v80, %v336
  %v593 = vmul.f32 %v81, %v337
  %v594 = vmul.f32 %v82, %v338
  %v595 = vmul.f32 %v83, %v339
  %v596 = vmul.f32 %v84, %v340
  %v597 = vmul.f32 %v85, %v341
  %v598 = vmul.f32 %v86, %v342
  %v599 = vmul.f32 %v87, %v343
  %v600 = vmul.f32 %v88, %v344
  %v601 = vmul.f32 %v89, %v345
  %v602 = vmul.f32 %v90, %v346
  %v603 = vmul.f32 %v91, %v347
  %v604 = vmul.f32 %v92, %v348
  %v605 = vmul.f32 %v93, %v349
  %v606 = vmul.f32 %v94, %v350
  %v607 = vmul.f32 %v95, %v351
  %v608 = vmul.f32 %v96, %v352
  %v609 = vmul.f32 %v97, %v353
  %v610 = vmul.f32 %v98, %v354
  %v611 = vmul.f32 %v99, %v355
  %v612 = vmul.f32 %v100, %v356
  %v613 = vmul.f32 %v101, %v357
  %v614 = vmul.f32 %v102, %v358
  %v615 = vmul.f32 %v103, %v359
  %v616 = vmul.f32 %v104, %v360
  %v617 = vmul.f32 %v105, %v361
  %v618 = vmul.f32 %v106, %v362
  %v619 = vmul.f32 %v107, %v363
  %v620 = vmul.f32 %v108, %v364
  %v621 = vmul.f32 %v109, %v365
  %v622 = vmul.f32 %v110, %v366
  %v623 = vmul.f32 %v111, %v367
  %v624 = vmul.f32 %v112, %v368
  %v625 = vmul.f32 %v113, %v369
  %v626 = vmul.f32 %v114, %v370
  %v627 = vmul.f32 %v115, %v371
  %v628 = vmul.f32 %v116, %v372
  %v629 = vmul.f32 %v117, %v373
  %v630 = vmul.f32 %v118, %v374
  %v631 = vmul.f32 %v119, %v375
  %v632 = vmul.f32 %v120, %v376
  %v633 = vmul.f32 %v121, %v377
  %v634 = vmul.f32 %v122, %v378
  %v635 = vmul.f32 %v123, %v379
  %v636 = vmul.f32 %v124, %v380
  %v637 = vmul.f32 %v125, %v381
  %v638 = vmul.f32 %v126, %v382
  %v639 = vmul.f32 %v127, %v383
  %v640 = vmul.f32 %v128, %v384
  %v641 = vmul.f32 %v129, %v385
  %v642 = vmul.f32 %v130, %v386
  %v643 = vmul.f32 %v131, %v387
  %v644 = vmul.f32 %v132, %v388
  %v645 = vmul.f32 %v133, %v389
  %v646 = vmul.f32 %v134, %v390
  %v647 = vmul.f32 %v135, %v391
  %v648 = vmul.f32 %v136, %v392
  %v649 = vmul.f32 %v137, %v393
  %v650 = vmul.f32 %v138, %v394
  %v651 = vmul.f32 %v139, %v395
  %v652 = vmul.f32 %v140, %v396
  %v653 = vmul.f32 %v141, %v397
  %v654 = vmul.f32 %v142, %v398
  %v655 = vmul.f32 %v143, %v399
  %v656 = vmul.f32 %v144, %v400
  %v657 = vmul.f32 %v145, %v401
  %v658 = vmul.f32 %v146, %v402
  %v659 = vmul.f32 %v147, %v403
  %v660 = vmul.f32 %v148, %v404
  %v661 = vmul.f32 %v149, %v405
  %v662 = vmul.f32 %v150, %v406
  %v663 = vmul.f32 %v151, %v407
  %v664 = vmul.f32 %v152, %v408
  %v665 = vmul.f32 %v153, %v409
  %v666 = vmul.f32 %v154, %v410
  %v667 = vmul.f32 %v155, %v411
  %v668 = vmul.f32 %v156, %v412
  %v669 = vmul.f32 %v157, %v413
  %v670 = vmul.f32 %v158, %v414
  %v671 = vmul.f32 %v159, %v415
  %v672 = vmul.f32 %v160, %v416
  %v673 = vmul.f32 %v161, %v417
  %v674 = vmul.f32 %v162, %v418
  %v675 = vmul.f32 %v163, %v419
  %v676 = vmul.f32 %v164, %v420
  %v677 = vmul.f32 %v165, %v421
  %v678 = vmul.f32 %v166, %v422
  %v679 = vmul.f32 %v167, %v423
  %v680 = vmul.f32 %v168, %v424
  %v681 = vmul.f32 %v169, %v425
  %v682 = vmul.f32 %v170, %v426
  %v683 = vmul.f32 %v171, %v427
  %v684 = vmul.f32 %v172, %v428
  %v685 = vmul.f32 %v173, %v429
  %v686 = vmul.f32 %v174, %v430
  %v687 = vmul.f32 %v175, %v431
  %v688 = vmul.f32 %v176, %v432
  %v689 = vmul.f32 %v177, %v433
  %v690 = vmul.f32 %v178, %v434
  %v691 = vmul.f32 %v179, %v435
  %v692 = vmul.f32 %v180, %v436
  %v693 = vmul.f32 %v181, %v437
  %v694 = vmul.f32 %v182, %v438
  %v695 = vmul.f32 %v183, %v439
  %v696 = vmul.f32 %v184, %v440
  %v697 = vmul.f32 %v185, %v441
  %v698 = vmul.f32 %v186, %v442
  %v699 = vmul.f32 %v187, %v443
  %v700 = vmul.f32 %v188, %v444
  %v701 = vmul.f32 %v189, %v445
  %v702 = vmul.f32 %v190, %v446
  %v703 = vmul.f32 %v191, %v447
  %v704 = vmul.f32 %v192, %v448
  %v705 = vmul.f32 %v193, %v449
  %v706 = vmul.f32 %v194, %v450
  %v707 = vmul.f32 %v195, %v451
  %v708 = vmul.f32 %v196, %v452
  %v709 = vmul.f32 %v197, %v453
  %v710 = vmul.f32 %v198, %v454
  %v711 = vmul.f32 %v199, %v455
  %v712 = vmul.f32 %v200, %v456
  %v713 = vmul.f32 %v201, %v457
  %v714 = vmul.f32 %v202, %v458
  %v715 = vmul.f32 %v203, %v459
  %v716 = vmul.f32 %v204, %v460
  %v717 = vmul.f32 %v205, %v461
  %v718 = vmul.f32 %v206, %v462
  %v719 = vmul.f32 %v207, %v463
  %v720 = vmul.f32 %v208, %v464
  %v721 = vmul.f32 %v209, %v465
  %v722 = vmul.f32 %v210, %v466
  %v723 = vmul.f32 %v211, %v467
  %v724 = vmul.f32 %v212, %v468
  %v725 = vmul.f32 %v213, %v469
  %v726 = vmul.f32 %v214, %v470
  %v727 = vmul.f32 %v215, %v471
  %v728 = vmul.f32 %v216, %v472
  %v729 = vmul.f32 %v217, %v473
  %v730 = vmul.f32 %v218, %v474
  %v731 = vmul.f32 %v219, %v475
  %v732 = vmul.f32 %v220, %v476
  %v733 = vmul.f32 %v221, %v477
  %v734 = vmul.f32 %v222, %v478
  %v735 = vmul.f32 %v223, %v479
  %v736 = vmul.f32 %v224, %v480
  %v737 = vmul.f32 %v225, %v481
  %v738 = vmul.f32 %v226, %v482
  %v739 = vmul.f32 %v227, %v483
  %v740 = vmul.f32 %v228, %v484
  %v741 = vmul.f32 %v229, %v485
  %v742 = vmul.f32 %v230, %v486
  %v743 = vmul.f32 %v231, %v487
  %v744 = vmul.f32 %v232, %v488
  %v745 = vmul.f32 %v233, %v489
  %v746 = vmul.f32 %v234, %v490
  %v747 = vmul.f32 %v235, %v491
  %v748 = vmul.f32 %v236, %v492
  %v749 = vmul.f32 %v237, %v493
  %v750 = vmul.f32 %v238, %v494
  %v751 = vmul.f32 %v239, %v495
  %v752 = vmul.f32 %v240, %v496
  %v753 = vmul.f32 %v241, %v497
  %v754 = vmul.f32 %v242, %v498
  %v755 = vmul.f32 %v243, %v499
  %v756 = vmul.f32 %v244, %v500
  %v757 = vmul.f32 %v245, %v501
  %v758 = vmul.f32 %v246, %v502
  %v759 = vmul.f32 %v247, %v503
  %v760 = vmul.f32 %v248, %v504
  %v761 = vmul.f32 %v249, %v505
  %v762 = vmul.f32 %v250, %v506
  %v763 = vmul.f32 %v251, %v507
  %v764 = vmul.f32 %v252, %v508
  %v765 = vmul.f32 %v253, %v509
  %v766 = vmul.f32 %v254, %v510
  %v767 = vmul.f32 %v255, %v511
  %v768 = vmul.f32 %v256, %v512
  %v769 = vmul.f32 %v257, %v513
  %v770 = vmul.f32 %v258, %v514
  %v771 = vmul.f32 %v259, %v515
  %v772 = vmul.f32 %v260, %v516
  %v773 = vmul.f32 %v261, %v517
  %v774 = vmul.f32 %v262, %v518
  %v775 = vmul.f32 %v263, %v519
  %v776 = vmul.f32 %v264, %v520
  %v777 = vmul.f32 %v265, %v521
  %v778 = vmul.f32 %v266, %v522
  %v779 = vmul.f32 %v267, %v523
  %v780 = vmul.f32 %v268, %v524
  %v781 = vmul.f32 %v269, %v525
  %v782 = vmul.f32 %v270, %v526
  %v783 = vmul.f32 %v271, %v527
  %v784 = vmul.f32 %v272, %v528
  %v785 = vmul.f32 %v273, %v529
  %v786 = vmul.f32 %v274, %v530
  %v787 = vmul.f32 %v275, %v531
  %v788 = vmul.f32 %v276, %v532
  %v789 = vmul.f32 %v277, %v533
  %v790 = vmul.f32 %v278, %v534
  %v791 = vld [vmem:[%s2] sm:$0xff]
  %v792 = vld [vmem:[%s2 + $0x8] sm:$0xff]
  %v793 = vld [vmem:[%s3] sm:$0x1]
  %v795 = vlaneseq
  %v796 = vshrl.u32 %v795, 7
  %v797 = vsub.s32 0, %v796
  %v798 = vrot.slane %v793, %v797
  %vm800 = vcmask 130048
  %v802 = vsel %vm800, %v535, 0
  %v805 = vsel %vm800, %v536, 0
  %v808 = vsel %vm800, %v537, 0
  %v811 = vsel %vm800, %v538, 0
  %v814 = vsel %vm800, %v539, 0
  %v817 = vsel %vm800, %v540, 0
  %v820 = vsel %vm800, %v541, 0
  %v823 = vsel %vm800, %v542, 0
  %v826 = vsel %vm800, %v543, 0
  %v829 = vsel %vm800, %v544, 0
  %v832 = vsel %vm800, %v545, 0
  %v835 = vsel %vm800, %v546, 0
  %v838 = vsel %vm800, %v547, 0
  %v841 = vsel %vm800, %v548, 0
  %v844 = vsel %vm800, %v549, 0
  %v847 = vsel %vm800, %v550, 0
  %v850 = vsel %vm800, %v551, 0
  %v853 = vsel %vm800, %v552, 0
  %v856 = vsel %vm800, %v553, 0
  %v859 = vsel %vm800, %v554, 0
  %v862 = vsel %vm800, %v555, 0
  %v865 = vsel %vm800, %v556, 0
  %v868 = vsel %vm800, %v557, 0
  %v871 = vsel %vm800, %v558, 0
  %v874 = vsel %vm800, %v559, 0
  %v877 = vsel %vm800, %v560, 0
  %v880 = vsel %vm800, %v561, 0
  %v883 = vsel %vm800, %v562, 0
  %v886 = vsel %vm800, %v563, 0
  %v889 = vsel %vm800, %v564, 0
  %v892 = vsel %vm800, %v565, 0
  %v895 = vsel %vm800, %v566, 0
  %v898 = vsel %vm800, %v567, 0
  %v901 = vsel %vm800, %v568, 0
  %v904 = vsel %vm800, %v569, 0
  %v907 = vsel %vm800, %v570, 0
  %v910 = vsel %vm800, %v571, 0
  %v913 = vsel %vm800, %v572, 0
  %v916 = vsel %vm800, %v573, 0
  %v919 = vsel %vm800, %v574, 0
  %v922 = vsel %vm800, %v575, 0
  %v925 = vsel %vm800, %v576, 0
  %v928 = vsel %vm800, %v577, 0
  %v931 = vsel %vm800, %v578, 0
  %v934 = vsel %vm800, %v579, 0
  %v937 = vsel %vm800, %v580, 0
  %v940 = vsel %vm800, %v581, 0
  %v943 = vsel %vm800, %v582, 0
  %v946 = vsel %vm800, %v583, 0
  %v949 = vsel %vm800, %v584, 0
  %v952 = vsel %vm800, %v585, 0
  %v955 = vsel %vm800, %v586, 0
  %v958 = vsel %vm800, %v587, 0
  %v961 = vsel %vm800, %v588, 0
  %v964 = vsel %vm800, %v589, 0
  %v967 = vsel %vm800, %v590, 0
  %v970 = vsel %vm800, %v591, 0
  %v973 = vsel %vm800, %v592, 0
  %v976 = vsel %vm800, %v593, 0
  %v979 = vsel %vm800, %v594, 0
  %v982 = vsel %vm800, %v595, 0
  %v985 = vsel %vm800, %v596, 0
  %v988 = vsel %vm800, %v597, 0
  %v991 = vsel %vm800, %v598, 0
  %v994 = vsel %vm800, %v599, 0
  %v997 = vsel %vm800, %v600, 0
  %v1000 = vsel %vm800, %v601, 0
  %v1003 = vsel %vm800, %v602, 0
  %v1006 = vsel %vm800, %v603, 0
  %v1009 = vsel %vm800, %v604, 0
  %v1012 = vsel %vm800, %v605, 0
  %v1015 = vsel %vm800, %v606, 0
  %v1018 = vsel %vm800, %v607, 0
  %v1021 = vsel %vm800, %v608, 0
  %v1024 = vsel %vm800, %v609, 0
  %v1027 = vsel %vm800, %v610, 0
  %v1030 = vsel %vm800, %v611, 0
  %v1033 = vsel %vm800, %v612, 0
  %v1036 = vsel %vm800, %v613, 0
  %v1039 = vsel %vm800, %v614, 0
  %v1042 = vsel %vm800, %v615, 0
  %v1045 = vsel %vm800, %v616, 0
  %v1048 = vsel %vm800, %v617, 0
  %v1051 = vsel %vm800, %v618, 0
  %v1054 = vsel %vm800, %v619, 0
  %v1057 = vsel %vm800, %v620, 0
  %v1060 = vsel %vm800, %v621, 0
  %v1063 = vsel %vm800, %v622, 0
  %v1066 = vsel %vm800, %v623, 0
  %v1069 = vsel %vm800, %v624, 0
  %v1072 = vsel %vm800, %v625, 0
  %v1075 = vsel %vm800, %v626, 0
  %v1078 = vsel %vm800, %v627, 0
  %v1081 = vsel %vm800, %v628, 0
  %v1084 = vsel %vm800, %v629, 0
  %v1087 = vsel %vm800, %v630, 0
  %v1090 = vsel %vm800, %v631, 0
  %v1093 = vsel %vm800, %v632, 0
  %v1096 = vsel %vm800, %v633, 0
  %v1099 = vsel %vm800, %v634, 0
  %v1102 = vsel %vm800, %v635, 0
  %v1105 = vsel %vm800, %v636, 0
  %v1108 = vsel %vm800, %v637, 0
  %v1111 = vsel %vm800, %v638, 0
  %v1114 = vsel %vm800, %v639, 0
  %v1117 = vsel %vm800, %v640, 0
  %v1120 = vsel %vm800, %v641, 0
  %v1123 = vsel %vm800, %v642, 0
  %v1126 = vsel %vm800, %v643, 0
  %v1129 = vsel %vm800, %v644, 0
  %v1132 = vsel %vm800, %v645, 0
  %v1135 = vsel %vm800, %v646, 0
  %v1138 = vsel %vm800, %v647, 0
  %v1141 = vsel %vm800, %v648, 0
  %v1144 = vsel %vm800, %v649, 0
  %v1147 = vsel %vm800, %v650, 0
  %v1150 = vsel %vm800, %v651, 0
  %v1153 = vsel %vm800, %v652, 0
  %v1156 = vsel %vm800, %v653, 0
  %v1159 = vsel %vm800, %v654, 0
  %v1162 = vsel %vm800, %v655, 0
  %v1165 = vsel %vm800, %v656, 0
  %v1168 = vsel %vm800, %v657, 0
  %v1171 = vsel %vm800, %v658, 0
  %v1174 = vsel %vm800, %v659, 0
  %v1177 = vsel %vm800, %v660, 0
  %v1180 = vsel %vm800, %v661, 0
  %v1183 = vsel %vm800, %v662, 0
  %v1186 = vsel %vm800, %v663, 0
  %v1189 = vsel %vm800, %v664, 0
  %v1192 = vsel %vm800, %v665, 0
  %v1195 = vsel %vm800, %v666, 0
  %v1198 = vsel %vm800, %v667, 0
  %v1201 = vsel %vm800, %v668, 0
  %v1204 = vsel %vm800, %v669, 0
  %v1207 = vsel %vm800, %v670, 0
  %v1210 = vsel %vm800, %v671, 0
  %v1213 = vsel %vm800, %v672, 0
  %v1216 = vsel %vm800, %v673, 0
  %v1219 = vsel %vm800, %v674, 0
  %v1222 = vsel %vm800, %v675, 0
  %v1225 = vsel %vm800, %v676, 0
  %v1228 = vsel %vm800, %v677, 0
  %v1231 = vsel %vm800, %v678, 0
  %v1234 = vsel %vm800, %v679, 0
  %v1237 = vsel %vm800, %v680, 0
  %v1240 = vsel %vm800, %v681, 0
  %v1243 = vsel %vm800, %v682, 0
  %v1246 = vsel %vm800, %v683, 0
  %v1249 = vsel %vm800, %v684, 0
  %v1252 = vsel %vm800, %v685, 0
  %v1255 = vsel %vm800, %v686, 0
  %v1258 = vsel %vm800, %v687, 0
  %v1261 = vsel %vm800, %v688, 0
  %v1264 = vsel %vm800, %v689, 0
  %v1267 = vsel %vm800, %v690, 0
  %v1270 = vsel %vm800, %v691, 0
  %v1273 = vsel %vm800, %v692, 0
  %v1276 = vsel %vm800, %v693, 0
  %v1279 = vsel %vm800, %v694, 0
  %v1282 = vsel %vm800, %v695, 0
  %v1285 = vsel %vm800, %v696, 0
  %v1288 = vsel %vm800, %v697, 0
  %v1291 = vsel %vm800, %v698, 0
  %v1294 = vsel %vm800, %v699, 0
  %v1297 = vsel %vm800, %v700, 0
  %v1300 = vsel %vm800, %v701, 0
  %v1303 = vsel %vm800, %v702, 0
  %v1306 = vsel %vm800, %v703, 0
  %v1309 = vsel %vm800, %v704, 0
  %v1312 = vsel %vm800, %v705, 0
  %v1315 = vsel %vm800, %v706, 0
  %v1318 = vsel %vm800, %v707, 0
  %v1321 = vsel %vm800, %v708, 0
  %v1324 = vsel %vm800, %v709, 0
  %v1327 = vsel %vm800, %v710, 0
  %v1330 = vsel %vm800, %v711, 0
  %v1333 = vsel %vm800, %v712, 0
  %v1336 = vsel %vm800, %v713, 0
  %v1339 = vsel %vm800, %v714, 0
  %v1342 = vsel %vm800, %v715, 0
  %v1345 = vsel %vm800, %v716, 0
  %v1348 = vsel %vm800, %v717, 0
  %v1351 = vsel %vm800, %v718, 0
  %v1354 = vsel %vm800, %v719, 0
  %v1357 = vsel %vm800, %v720, 0
  %v1360 = vsel %vm800, %v721, 0
  %v1363 = vsel %vm800, %v722, 0
  %v1366 = vsel %vm800, %v723, 0
  %v1369 = vsel %vm800, %v724, 0
  %v1372 = vsel %vm800, %v725, 0
  %v1375 = vsel %vm800, %v726, 0
  %v1378 = vsel %vm800, %v727, 0
  %v1381 = vsel %vm800, %v728, 0
  %v1384 = vsel %vm800, %v729, 0
  %v1387 = vsel %vm800, %v730, 0
  %v1390 = vsel %vm800, %v731, 0
  %v1393 = vsel %vm800, %v732, 0
  %v1396 = vsel %vm800, %v733, 0
  %v1399 = vsel %vm800, %v734, 0
  %v1402 = vsel %vm800, %v735, 0
  %v1405 = vsel %vm800, %v736, 0
  %v1408 = vsel %vm800, %v737, 0
  %v1411 = vsel %vm800, %v738, 0
  %v1414 = vsel %vm800, %v739, 0
  %v1417 = vsel %vm800, %v740, 0
  %v1420 = vsel %vm800, %v741, 0
  %v1423 = vsel %vm800, %v742, 0
  %v1426 = vsel %vm800, %v743, 0
  %v1429 = vsel %vm800, %v744, 0
  %v1432 = vsel %vm800, %v745, 0
  %v1435 = vsel %vm800, %v746, 0
  %v1438 = vsel %vm800, %v747, 0
  %v1441 = vsel %vm800, %v748, 0
  %v1444 = vsel %vm800, %v749, 0
  %v1447 = vsel %vm800, %v750, 0
  %v1450 = vsel %vm800, %v751, 0
  %v1453 = vsel %vm800, %v752, 0
  %v1456 = vsel %vm800, %v753, 0
  %v1459 = vsel %vm800, %v754, 0
  %v1462 = vsel %vm800, %v755, 0
  %v1465 = vsel %vm800, %v756, 0
  %v1468 = vsel %vm800, %v757, 0
  %v1471 = vsel %vm800, %v758, 0
  %v1474 = vsel %vm800, %v759, 0
  %v1477 = vsel %vm800, %v760, 0
  %v1480 = vsel %vm800, %v761, 0
  %v1483 = vsel %vm800, %v762, 0
  %v1486 = vsel %vm800, %v763, 0
  %v1489 = vsel %vm800, %v764, 0
  %v1492 = vsel %vm800, %v765, 0
  %v1495 = vsel %vm800, %v766, 0
  %v1498 = vsel %vm800, %v767, 0
  %v1501 = vsel %vm800, %v768, 0
  %v1504 = vsel %vm800, %v769, 0
  %v1507 = vsel %vm800, %v770, 0
  %v1510 = vsel %vm800, %v771, 0
  %v1513 = vsel %vm800, %v772, 0
  %v1516 = vsel %vm800, %v773, 0
  %v1519 = vsel %vm800, %v774, 0
  %v1522 = vsel %vm800, %v775, 0
  %v1525 = vsel %vm800, %v776, 0
  %v1528 = vsel %vm800, %v777, 0
  %v1531 = vsel %vm800, %v778, 0
  %v1534 = vsel %vm800, %v779, 0
  %v1537 = vsel %vm800, %v780, 0
  %v1540 = vsel %vm800, %v781, 0
  %v1543 = vsel %vm800, %v782, 0
  %v1546 = vsel %vm800, %v783, 0
  %v1549 = vsel %vm800, %v784, 0
  %v1552 = vsel %vm800, %v785, 0
  %v1555 = vsel %vm800, %v786, 0
  %v1558 = vsel %vm800, %v787, 0
  %v1561 = vsel %vm800, %v788, 0
  %v1564 = vsel %vm800, %v789, 0
  %v1567 = vsel %vm800, %v790, 0
  %1569 = vmatprep.subr.mxu0 0.0
  %1570 = vmatpush1.msra.mxu0 0.0
  %1571 = vmatprep.subr.mxu0 0.0
  %1572 = vmatpush1.msra.mxu0 0.0
  %1573 = vmatprep.subr.mxu0 0.0
  %1574 = vmatpush1.msra.mxu0 0.0
  %1575 = vmatprep.subr.mxu0 0.0
  %1576 = vmatpush1.msra.mxu0 0.0
  %1577 = vmatprep.subr.mxu0 0.0
  %1578 = vmatpush1.msra.mxu0 0.0
  %1579 = vmatprep.subr.mxu0 0.0
  %1580 = vmatpush1.msra.mxu0 0.0
  %1581 = vmatprep.subr.mxu0 0.0
  %1582 = vmatpush1.msra.mxu0 0.0
  %1583 = vmatprep.subr.mxu0 0.0
  %1584 = vmatpush1.msra.mxu0 0.0
  %1585 = vmatprep.subr.mxu0 0.0
  %1586 = vmatpush1.msra.mxu0 0.0
  %1587 = vmatprep.subr.mxu0 0.0
  %1588 = vmatpush1.msra.mxu0 0.0
  %1589 = vmatprep.subr.mxu0 0.0
  %1590 = vmatpush1.msra.mxu0 0.0
  %1591 = vmatprep.subr.mxu0 0.0
  %1592 = vmatpush1.msra.mxu0 0.0
  %1593 = vmatprep.subr.mxu0 0.0
  %1594 = vmatpush1.msra.mxu0 0.0
  %1595 = vmatprep.subr.mxu0 0.0
  %1596 = vmatpush1.msra.mxu0 0.0
  %1597 = vmatprep.subr.mxu0 0.0
  %1598 = vmatpush1.msra.mxu0 %v792
  %1599 = vmatprep.subr.mxu0 0.0
  %1600 = vmatpush1.msra.mxu0 %v791
  %1601 = vmatprep.subr.mxu0 0.0
  %1602 = vmatpush2.msra.mxu0 0.0
  %1603 = vmatprep.subr.mxu0 0.0
  %1604 = vmatpush2.msra.mxu0 0.0
  %1605 = vmatprep.subr.mxu0 0.0
  %1606 = vmatpush2.msra.mxu0 0.0
  %1607 = vmatprep.subr.mxu0 0.0
  %1608 = vmatpush2.msra.mxu0 0.0
  %1609 = vmatprep.subr.mxu0 0.0
  %1610 = vmatpush2.msra.mxu0 0.0
  %1611 = vmatprep.subr.mxu0 0.0
  %1612 = vmatpush2.msra.mxu0 0.0
  %1613 = vmatprep.subr.mxu0 0.0
  %1614 = vmatpush2.msra.mxu0 0.0
  %1615 = vmatprep.subr.mxu0 0.0
  %1616 = vmatpush2.msra.mxu0 0.0
  %1617 = vmatprep.subr.mxu0 0.0
  %1618 = vmatpush2.msra.mxu0 0.0
  %1619 = vmatprep.subr.mxu0 0.0
  %1620 = vmatpush2.msra.mxu0 0.0
  %1621 = vmatprep.subr.mxu0 0.0
  %1622 = vmatpush2.msra.mxu0 0.0
  %1623 = vmatprep.subr.mxu0 0.0
  %1624 = vmatpush2.msra.mxu0 0.0
  %1625 = vmatprep.subr.mxu0 0.0
  %1626 = vmatpush2.msra.mxu0 0.0
  %1627 = vmatprep.subr.mxu0 0.0
  %1628 = vmatpush2.msra.mxu0 0.0
  %1629 = vmatprep.subr.mxu0 0.0
  %1630 = vmatpush2.msra.mxu0 0.0
  %1631 = vmatprep.subr.mxu0 0.0
  %1632 = vmatpush2.msra.mxu0 0.0
  %1633 = vmatprep.mubr.f32.mxu0 0.0
  %1634 = vmatmul.mubr.f32.gmra.mxu0 %v802
  %v1635 = vpop.f32.mrf.mxu0
  %v1636 = vadd.f32 %v798, %v1635
  %v1637 = vpop.f32.mrf.mxu0
  %1638 = vmatprep.mubr.f32.mxu0 0.0
  %1639 = vmatmul.mubr.f32.gmra.mxu0 %v805
  %v1640 = vpop.f32.mrf.mxu0
  %v1641 = vadd.f32 %v798, %v1640
  %v1642 = vpop.f32.mrf.mxu0
  %1643 = vmatprep.mubr.f32.mxu0 0.0
  %1644 = vmatmul.mubr.f32.gmra.mxu0 %v808
  %v1645 = vpop.f32.mrf.mxu0
  %v1646 = vadd.f32 %v798, %v1645
  %v1647 = vpop.f32.mrf.mxu0
  %1648 = vmatprep.mubr.f32.mxu0 0.0
  %1649 = vmatmul.mubr.f32.gmra.mxu0 %v811
  %v1650 = vpop.f32.mrf.mxu0
  %v1651 = vadd.f32 %v798, %v1650
  %v1652 = vpop.f32.mrf.mxu0
  %1653 = vmatprep.mubr.f32.mxu0 0.0
  %1654 = vmatmul.mubr.f32.gmra.mxu0 %v814
  %v1655 = vpop.f32.mrf.mxu0
  %v1656 = vadd.f32 %v798, %v1655
  %v1657 = vpop.f32.mrf.mxu0
  %1658 = vmatprep.mubr.f32.mxu0 0.0
  %1659 = vmatmul.mubr.f32.gmra.mxu0 %v817
  %v1660 = vpop.f32.mrf.mxu0
  %v1661 = vadd.f32 %v798, %v1660
  %v1662 = vpop.f32.mrf.mxu0
  %1663 = vmatprep.mubr.f32.mxu0 0.0
  %1664 = vmatmul.mubr.f32.gmra.mxu0 %v820
  %v1665 = vpop.f32.mrf.mxu0
  %v1666 = vadd.f32 %v798, %v1665
  %v1667 = vpop.f32.mrf.mxu0
  %1668 = vmatprep.mubr.f32.mxu0 0.0
  %1669 = vmatmul.mubr.f32.gmra.mxu0 %v823
  %v1670 = vpop.f32.mrf.mxu0
  %v1671 = vadd.f32 %v798, %v1670
  %v1672 = vpop.f32.mrf.mxu0
  %1673 = vmatprep.mubr.f32.mxu0 0.0
  %1674 = vmatmul.mubr.f32.gmra.mxu0 %v826
  %v1675 = vpop.f32.mrf.mxu0
  %v1676 = vadd.f32 %v798, %v1675
  %v1677 = vpop.f32.mrf.mxu0
  %1678 = vmatprep.mubr.f32.mxu0 0.0
  %1679 = vmatmul.mubr.f32.gmra.mxu0 %v829
  %v1680 = vpop.f32.mrf.mxu0
  %v1681 = vadd.f32 %v798, %v1680
  %v1682 = vpop.f32.mrf.mxu0
  %1683 = vmatprep.mubr.f32.mxu0 0.0
  %1684 = vmatmul.mubr.f32.gmra.mxu0 %v832
  %v1685 = vpop.f32.mrf.mxu0
  %v1686 = vadd.f32 %v798, %v1685
  %v1687 = vpop.f32.mrf.mxu0
  %1688 = vmatprep.mubr.f32.mxu0 0.0
  %1689 = vmatmul.mubr.f32.gmra.mxu0 %v835
  %v1690 = vpop.f32.mrf.mxu0
  %v1691 = vadd.f32 %v798, %v1690
  %v1692 = vpop.f32.mrf.mxu0
  %1693 = vmatprep.mubr.f32.mxu0 0.0
  %1694 = vmatmul.mubr.f32.gmra.mxu0 %v838
  %v1695 = vpop.f32.mrf.mxu0
  %v1696 = vadd.f32 %v798, %v1695
  %v1697 = vpop.f32.mrf.mxu0
  %1698 = vmatprep.mubr.f32.mxu0 0.0
  %1699 = vmatmul.mubr.f32.gmra.mxu0 %v841
  %v1700 = vpop.f32.mrf.mxu0
  %v1701 = vadd.f32 %v798, %v1700
  %v1702 = vpop.f32.mrf.mxu0
  %1703 = vmatprep.mubr.f32.mxu0 0.0
  %1704 = vmatmul.mubr.f32.gmra.mxu0 %v844
  %v1705 = vpop.f32.mrf.mxu0
  %v1706 = vadd.f32 %v798, %v1705
  %v1707 = vpop.f32.mrf.mxu0
  %1708 = vmatprep.mubr.f32.mxu0 0.0
  %1709 = vmatmul.mubr.f32.gmra.mxu0 %v847
  %v1710 = vpop.f32.mrf.mxu0
  %v1711 = vadd.f32 %v798, %v1710
  %v1712 = vpop.f32.mrf.mxu0
  %1713 = vmatprep.mubr.f32.mxu0 0.0
  %1714 = vmatmul.mubr.f32.gmra.mxu0 %v850
  %v1715 = vpop.f32.mrf.mxu0
  %v1716 = vadd.f32 %v798, %v1715
  %v1717 = vpop.f32.mrf.mxu0
  %1718 = vmatprep.mubr.f32.mxu0 0.0
  %1719 = vmatmul.mubr.f32.gmra.mxu0 %v853
  %v1720 = vpop.f32.mrf.mxu0
  %v1721 = vadd.f32 %v798, %v1720
  %v1722 = vpop.f32.mrf.mxu0
  %1723 = vmatprep.mubr.f32.mxu0 0.0
  %1724 = vmatmul.mubr.f32.gmra.mxu0 %v856
  %v1725 = vpop.f32.mrf.mxu0
  %v1726 = vadd.f32 %v798, %v1725
  %v1727 = vpop.f32.mrf.mxu0
  %1728 = vmatprep.mubr.f32.mxu0 0.0
  %1729 = vmatmul.mubr.f32.gmra.mxu0 %v859
  %v1730 = vpop.f32.mrf.mxu0
  %v1731 = vadd.f32 %v798, %v1730
  %v1732 = vpop.f32.mrf.mxu0
  %1733 = vmatprep.mubr.f32.mxu0 0.0
  %1734 = vmatmul.mubr.f32.gmra.mxu0 %v862
  %v1735 = vpop.f32.mrf.mxu0
  %v1736 = vadd.f32 %v798, %v1735
  %v1737 = vpop.f32.mrf.mxu0
  %1738 = vmatprep.mubr.f32.mxu0 0.0
  %1739 = vmatmul.mubr.f32.gmra.mxu0 %v865
  %v1740 = vpop.f32.mrf.mxu0
  %v1741 = vadd.f32 %v798, %v1740
  %v1742 = vpop.f32.mrf.mxu0
  %1743 = vmatprep.mubr.f32.mxu0 0.0
  %1744 = vmatmul.mubr.f32.gmra.mxu0 %v868
  %v1745 = vpop.f32.mrf.mxu0
  %v1746 = vadd.f32 %v798, %v1745
  %v1747 = vpop.f32.mrf.mxu0
  %1748 = vmatprep.mubr.f32.mxu0 0.0
  %1749 = vmatmul.mubr.f32.gmra.mxu0 %v871
  %v1750 = vpop.f32.mrf.mxu0
  %v1751 = vadd.f32 %v798, %v1750
  %v1752 = vpop.f32.mrf.mxu0
  %1753 = vmatprep.mubr.f32.mxu0 0.0
  %1754 = vmatmul.mubr.f32.gmra.mxu0 %v874
  %v1755 = vpop.f32.mrf.mxu0
  %v1756 = vadd.f32 %v798, %v1755
  %v1757 = vpop.f32.mrf.mxu0
  %1758 = vmatprep.mubr.f32.mxu0 0.0
  %1759 = vmatmul.mubr.f32.gmra.mxu0 %v877
  %v1760 = vpop.f32.mrf.mxu0
  %v1761 = vadd.f32 %v798, %v1760
  %v1762 = vpop.f32.mrf.mxu0
  %1763 = vmatprep.mubr.f32.mxu0 0.0
  %1764 = vmatmul.mubr.f32.gmra.mxu0 %v880
  %v1765 = vpop.f32.mrf.mxu0
  %v1766 = vadd.f32 %v798, %v1765
  %v1767 = vpop.f32.mrf.mxu0
  %1768 = vmatprep.mubr.f32.mxu0 0.0
  %1769 = vmatmul.mubr.f32.gmra.mxu0 %v883
  %v1770 = vpop.f32.mrf.mxu0
  %v1771 = vadd.f32 %v798, %v1770
  %v1772 = vpop.f32.mrf.mxu0
  %1773 = vmatprep.mubr.f32.mxu0 0.0
  %1774 = vmatmul.mubr.f32.gmra.mxu0 %v886
  %v1775 = vpop.f32.mrf.mxu0
  %v1776 = vadd.f32 %v798, %v1775
  %v1777 = vpop.f32.mrf.mxu0
  %1778 = vmatprep.mubr.f32.mxu0 0.0
  %1779 = vmatmul.mubr.f32.gmra.mxu0 %v889
  %v1780 = vpop.f32.mrf.mxu0
  %v1781 = vadd.f32 %v798, %v1780
  %v1782 = vpop.f32.mrf.mxu0
  %1783 = vmatprep.mubr.f32.mxu0 0.0
  %1784 = vmatmul.mubr.f32.gmra.mxu0 %v892
  %v1785 = vpop.f32.mrf.mxu0
  %v1786 = vadd.f32 %v798, %v1785
  %v1787 = vpop.f32.mrf.mxu0
  %1788 = vmatprep.mubr.f32.mxu0 0.0
  %1789 = vmatmul.mubr.f32.gmra.mxu0 %v895
  %v1790 = vpop.f32.mrf.mxu0
  %v1791 = vadd.f32 %v798, %v1790
  %v1792 = vpop.f32.mrf.mxu0
  %1793 = vmatprep.mubr.f32.mxu0 0.0
  %1794 = vmatmul.mubr.f32.gmra.mxu0 %v898
  %v1795 = vpop.f32.mrf.mxu0
  %v1796 = vadd.f32 %v798, %v1795
  %v1797 = vpop.f32.mrf.mxu0
  %1798 = vmatprep.mubr.f32.mxu0 0.0
  %1799 = vmatmul.mubr.f32.gmra.mxu0 %v901
  %v1800 = vpop.f32.mrf.mxu0
  %v1801 = vadd.f32 %v798, %v1800
  %v1802 = vpop.f32.mrf.mxu0
  %1803 = vmatprep.mubr.f32.mxu0 0.0
  %1804 = vmatmul.mubr.f32.gmra.mxu0 %v904
  %v1805 = vpop.f32.mrf.mxu0
  %v1806 = vadd.f32 %v798, %v1805
  %v1807 = vpop.f32.mrf.mxu0
  %1808 = vmatprep.mubr.f32.mxu0 0.0
  %1809 = vmatmul.mubr.f32.gmra.mxu0 %v907
  %v1810 = vpop.f32.mrf.mxu0
  %v1811 = vadd.f32 %v798, %v1810
  %v1812 = vpop.f32.mrf.mxu0
  %1813 = vmatprep.mubr.f32.mxu0 0.0
  %1814 = vmatmul.mubr.f32.gmra.mxu0 %v910
  %v1815 = vpop.f32.mrf.mxu0
  %v1816 = vadd.f32 %v798, %v1815
  %v1817 = vpop.f32.mrf.mxu0
  %1818 = vmatprep.mubr.f32.mxu0 0.0
  %1819 = vmatmul.mubr.f32.gmra.mxu0 %v913
  %v1820 = vpop.f32.mrf.mxu0
  %v1821 = vadd.f32 %v798, %v1820
  %v1822 = vpop.f32.mrf.mxu0
  %1823 = vmatprep.mubr.f32.mxu0 0.0
  %1824 = vmatmul.mubr.f32.gmra.mxu0 %v916
  %v1825 = vpop.f32.mrf.mxu0
  %v1826 = vadd.f32 %v798, %v1825
  %v1827 = vpop.f32.mrf.mxu0
  %1828 = vmatprep.mubr.f32.mxu0 0.0
  %1829 = vmatmul.mubr.f32.gmra.mxu0 %v919
  %v1830 = vpop.f32.mrf.mxu0
  %v1831 = vadd.f32 %v798, %v1830
  %v1832 = vpop.f32.mrf.mxu0
  %1833 = vmatprep.mubr.f32.mxu0 0.0
  %1834 = vmatmul.mubr.f32.gmra.mxu0 %v922
  %v1835 = vpop.f32.mrf.mxu0
  %v1836 = vadd.f32 %v798, %v1835
  %v1837 = vpop.f32.mrf.mxu0
  %1838 = vmatprep.mubr.f32.mxu0 0.0
  %1839 = vmatmul.mubr.f32.gmra.mxu0 %v925
  %v1840 = vpop.f32.mrf.mxu0
  %v1841 = vadd.f32 %v798, %v1840
  %v1842 = vpop.f32.mrf.mxu0
  %1843 = vmatprep.mubr.f32.mxu0 0.0
  %1844 = vmatmul.mubr.f32.gmra.mxu0 %v928
  %v1845 = vpop.f32.mrf.mxu0
  %v1846 = vadd.f32 %v798, %v1845
  %v1847 = vpop.f32.mrf.mxu0
  %1848 = vmatprep.mubr.f32.mxu0 0.0
  %1849 = vmatmul.mubr.f32.gmra.mxu0 %v931
  %v1850 = vpop.f32.mrf.mxu0
  %v1851 = vadd.f32 %v798, %v1850
  %v1852 = vpop.f32.mrf.mxu0
  %1853 = vmatprep.mubr.f32.mxu0 0.0
  %1854 = vmatmul.mubr.f32.gmra.mxu0 %v934
  %v1855 = vpop.f32.mrf.mxu0
  %v1856 = vadd.f32 %v798, %v1855
  %v1857 = vpop.f32.mrf.mxu0
  %1858 = vmatprep.mubr.f32.mxu0 0.0
  %1859 = vmatmul.mubr.f32.gmra.mxu0 %v937
  %v1860 = vpop.f32.mrf.mxu0
  %v1861 = vadd.f32 %v798, %v1860
  %v1862 = vpop.f32.mrf.mxu0
  %1863 = vmatprep.mubr.f32.mxu0 0.0
  %1864 = vmatmul.mubr.f32.gmra.mxu0 %v940
  %v1865 = vpop.f32.mrf.mxu0
  %v1866 = vadd.f32 %v798, %v1865
  %v1867 = vpop.f32.mrf.mxu0
  %1868 = vmatprep.mubr.f32.mxu0 0.0
  %1869 = vmatmul.mubr.f32.gmra.mxu0 %v943
  %v1870 = vpop.f32.mrf.mxu0
  %v1871 = vadd.f32 %v798, %v1870
  %v1872 = vpop.f32.mrf.mxu0
  %1873 = vmatprep.mubr.f32.mxu0 0.0
  %1874 = vmatmul.mubr.f32.gmra.mxu0 %v946
  %v1875 = vpop.f32.mrf.mxu0
  %v1876 = vadd.f32 %v798, %v1875
  %v1877 = vpop.f32.mrf.mxu0
  %1878 = vmatprep.mubr.f32.mxu0 0.0
  %1879 = vmatmul.mubr.f32.gmra.mxu0 %v949
  %v1880 = vpop.f32.mrf.mxu0
  %v1881 = vadd.f32 %v798, %v1880
  %v1882 = vpop.f32.mrf.mxu0
  %1883 = vmatprep.mubr.f32.mxu0 0.0
  %1884 = vmatmul.mubr.f32.gmra.mxu0 %v952
  %v1885 = vpop.f32.mrf.mxu0
  %v1886 = vadd.f32 %v798, %v1885
  %v1887 = vpop.f32.mrf.mxu0
  %1888 = vmatprep.mubr.f32.mxu0 0.0
  %1889 = vmatmul.mubr.f32.gmra.mxu0 %v955
  %v1890 = vpop.f32.mrf.mxu0
  %v1891 = vadd.f32 %v798, %v1890
  %v1892 = vpop.f32.mrf.mxu0
  %1893 = vmatprep.mubr.f32.mxu0 0.0
  %1894 = vmatmul.mubr.f32.gmra.mxu0 %v958
  %v1895 = vpop.f32.mrf.mxu0
  %v1896 = vadd.f32 %v798, %v1895
  %v1897 = vpop.f32.mrf.mxu0
  %1898 = vmatprep.mubr.f32.mxu0 0.0
  %1899 = vmatmul.mubr.f32.gmra.mxu0 %v961
  %v1900 = vpop.f32.mrf.mxu0
  %v1901 = vadd.f32 %v798, %v1900
  %v1902 = vpop.f32.mrf.mxu0
  %1903 = vmatprep.mubr.f32.mxu0 0.0
  %1904 = vmatmul.mubr.f32.gmra.mxu0 %v964
  %v1905 = vpop.f32.mrf.mxu0
  %v1906 = vadd.f32 %v798, %v1905
  %v1907 = vpop.f32.mrf.mxu0
  %1908 = vmatprep.mubr.f32.mxu0 0.0
  %1909 = vmatmul.mubr.f32.gmra.mxu0 %v967
  %v1910 = vpop.f32.mrf.mxu0
  %v1911 = vadd.f32 %v798, %v1910
  %v1912 = vpop.f32.mrf.mxu0
  %1913 = vmatprep.mubr.f32.mxu0 0.0
  %1914 = vmatmul.mubr.f32.gmra.mxu0 %v970
  %v1915 = vpop.f32.mrf.mxu0
  %v1916 = vadd.f32 %v798, %v1915
  %v1917 = vpop.f32.mrf.mxu0
  %1918 = vmatprep.mubr.f32.mxu0 0.0
  %1919 = vmatmul.mubr.f32.gmra.mxu0 %v973
  %v1920 = vpop.f32.mrf.mxu0
  %v1921 = vadd.f32 %v798, %v1920
  %v1922 = vpop.f32.mrf.mxu0
  %1923 = vmatprep.mubr.f32.mxu0 0.0
  %1924 = vmatmul.mubr.f32.gmra.mxu0 %v976
  %v1925 = vpop.f32.mrf.mxu0
  %v1926 = vadd.f32 %v798, %v1925
  %v1927 = vpop.f32.mrf.mxu0
  %1928 = vmatprep.mubr.f32.mxu0 0.0
  %1929 = vmatmul.mubr.f32.gmra.mxu0 %v979
  %v1930 = vpop.f32.mrf.mxu0
  %v1931 = vadd.f32 %v798, %v1930
  %v1932 = vpop.f32.mrf.mxu0
  %1933 = vmatprep.mubr.f32.mxu0 0.0
  %1934 = vmatmul.mubr.f32.gmra.mxu0 %v982
  %v1935 = vpop.f32.mrf.mxu0
  %v1936 = vadd.f32 %v798, %v1935
  %v1937 = vpop.f32.mrf.mxu0
  %1938 = vmatprep.mubr.f32.mxu0 0.0
  %1939 = vmatmul.mubr.f32.gmra.mxu0 %v985
  %v1940 = vpop.f32.mrf.mxu0
  %v1941 = vadd.f32 %v798, %v1940
  %v1942 = vpop.f32.mrf.mxu0
  %1943 = vmatprep.mubr.f32.mxu0 0.0
  %1944 = vmatmul.mubr.f32.gmra.mxu0 %v988
  %v1945 = vpop.f32.mrf.mxu0
  %v1946 = vadd.f32 %v798, %v1945
  %v1947 = vpop.f32.mrf.mxu0
  %1948 = vmatprep.mubr.f32.mxu0 0.0
  %1949 = vmatmul.mubr.f32.gmra.mxu0 %v991
  %v1950 = vpop.f32.mrf.mxu0
  %v1951 = vadd.f32 %v798, %v1950
  %v1952 = vpop.f32.mrf.mxu0
  %1953 = vmatprep.mubr.f32.mxu0 0.0
  %1954 = vmatmul.mubr.f32.gmra.mxu0 %v994
  %v1955 = vpop.f32.mrf.mxu0
  %v1956 = vadd.f32 %v798, %v1955
  %v1957 = vpop.f32.mrf.mxu0
  %1958 = vmatprep.mubr.f32.mxu0 0.0
  %1959 = vmatmul.mubr.f32.gmra.mxu0 %v997
  %v1960 = vpop.f32.mrf.mxu0
  %v1961 = vadd.f32 %v798, %v1960
  %v1962 = vpop.f32.mrf.mxu0
  %1963 = vmatprep.mubr.f32.mxu0 0.0
  %1964 = vmatmul.mubr.f32.gmra.mxu0 %v1000
  %v1965 = vpop.f32.mrf.mxu0
  %v1966 = vadd.f32 %v798, %v1965
  %v1967 = vpop.f32.mrf.mxu0
  %1968 = vmatprep.mubr.f32.mxu0 0.0
  %1969 = vmatmul.mubr.f32.gmra.mxu0 %v1003
  %v1970 = vpop.f32.mrf.mxu0
  %v1971 = vadd.f32 %v798, %v1970
  %v1972 = vpop.f32.mrf.mxu0
  %1973 = vmatprep.mubr.f32.mxu0 0.0
  %1974 = vmatmul.mubr.f32.gmra.mxu0 %v1006
  %v1975 = vpop.f32.mrf.mxu0
  %v1976 = vadd.f32 %v798, %v1975
  %v1977 = vpop.f32.mrf.mxu0
  %1978 = vmatprep.mubr.f32.mxu0 0.0
  %1979 = vmatmul.mubr.f32.gmra.mxu0 %v1009
  %v1980 = vpop.f32.mrf.mxu0
  %v1981 = vadd.f32 %v798, %v1980
  %v1982 = vpop.f32.mrf.mxu0
  %1983 = vmatprep.mubr.f32.mxu0 0.0
  %1984 = vmatmul.mubr.f32.gmra.mxu0 %v1012
  %v1985 = vpop.f32.mrf.mxu0
  %v1986 = vadd.f32 %v798, %v1985
  %v1987 = vpop.f32.mrf.mxu0
  %1988 = vmatprep.mubr.f32.mxu0 0.0
  %1989 = vmatmul.mubr.f32.gmra.mxu0 %v1015
  %v1990 = vpop.f32.mrf.mxu0
  %v1991 = vadd.f32 %v798, %v1990
  %v1992 = vpop.f32.mrf.mxu0
  %1993 = vmatprep.mubr.f32.mxu0 0.0
  %1994 = vmatmul.mubr.f32.gmra.mxu0 %v1018
  %v1995 = vpop.f32.mrf.mxu0
  %v1996 = vadd.f32 %v798, %v1995
  %v1997 = vpop.f32.mrf.mxu0
  %1998 = vmatprep.mubr.f32.mxu0 0.0
  %1999 = vmatmul.mubr.f32.gmra.mxu0 %v1021
  %v2000 = vpop.f32.mrf.mxu0
  %v2001 = vadd.f32 %v798, %v2000
  %v2002 = vpop.f32.mrf.mxu0
  %2003 = vmatprep.mubr.f32.mxu0 0.0
  %2004 = vmatmul.mubr.f32.gmra.mxu0 %v1024
  %v2005 = vpop.f32.mrf.mxu0
  %v2006 = vadd.f32 %v798, %v2005
  %v2007 = vpop.f32.mrf.mxu0
  %2008 = vmatprep.mubr.f32.mxu0 0.0
  %2009 = vmatmul.mubr.f32.gmra.mxu0 %v1027
  %v2010 = vpop.f32.mrf.mxu0
  %v2011 = vadd.f32 %v798, %v2010
  %v2012 = vpop.f32.mrf.mxu0
  %2013 = vmatprep.mubr.f32.mxu0 0.0
  %2014 = vmatmul.mubr.f32.gmra.mxu0 %v1030
  %v2015 = vpop.f32.mrf.mxu0
  %v2016 = vadd.f32 %v798, %v2015
  %v2017 = vpop.f32.mrf.mxu0
  %2018 = vmatprep.mubr.f32.mxu0 0.0
  %2019 = vmatmul.mubr.f32.gmra.mxu0 %v1033
  %v2020 = vpop.f32.mrf.mxu0
  %v2021 = vadd.f32 %v798, %v2020
  %v2022 = vpop.f32.mrf.mxu0
  %2023 = vmatprep.mubr.f32.mxu0 0.0
  %2024 = vmatmul.mubr.f32.gmra.mxu0 %v1036
  %v2025 = vpop.f32.mrf.mxu0
  %v2026 = vadd.f32 %v798, %v2025
  %v2027 = vpop.f32.mrf.mxu0
  %2028 = vmatprep.mubr.f32.mxu0 0.0
  %2029 = vmatmul.mubr.f32.gmra.mxu0 %v1039
  %v2030 = vpop.f32.mrf.mxu0
  %v2031 = vadd.f32 %v798, %v2030
  %v2032 = vpop.f32.mrf.mxu0
  %2033 = vmatprep.mubr.f32.mxu0 0.0
  %2034 = vmatmul.mubr.f32.gmra.mxu0 %v1042
  %v2035 = vpop.f32.mrf.mxu0
  %v2036 = vadd.f32 %v798, %v2035
  %v2037 = vpop.f32.mrf.mxu0
  %2038 = vmatprep.mubr.f32.mxu0 0.0
  %2039 = vmatmul.mubr.f32.gmra.mxu0 %v1045
  %v2040 = vpop.f32.mrf.mxu0
  %v2041 = vadd.f32 %v798, %v2040
  %v2042 = vpop.f32.mrf.mxu0
  %2043 = vmatprep.mubr.f32.mxu0 0.0
  %2044 = vmatmul.mubr.f32.gmra.mxu0 %v1048
  %v2045 = vpop.f32.mrf.mxu0
  %v2046 = vadd.f32 %v798, %v2045
  %v2047 = vpop.f32.mrf.mxu0
  %2048 = vmatprep.mubr.f32.mxu0 0.0
  %2049 = vmatmul.mubr.f32.gmra.mxu0 %v1051
  %v2050 = vpop.f32.mrf.mxu0
  %v2051 = vadd.f32 %v798, %v2050
  %v2052 = vpop.f32.mrf.mxu0
  %2053 = vmatprep.mubr.f32.mxu0 0.0
  %2054 = vmatmul.mubr.f32.gmra.mxu0 %v1054
  %v2055 = vpop.f32.mrf.mxu0
  %v2056 = vadd.f32 %v798, %v2055
  %v2057 = vpop.f32.mrf.mxu0
  %2058 = vmatprep.mubr.f32.mxu0 0.0
  %2059 = vmatmul.mubr.f32.gmra.mxu0 %v1057
  %v2060 = vpop.f32.mrf.mxu0
  %v2061 = vadd.f32 %v798, %v2060
  %v2062 = vpop.f32.mrf.mxu0
  %2063 = vmatprep.mubr.f32.mxu0 0.0
  %2064 = vmatmul.mubr.f32.gmra.mxu0 %v1060
  %v2065 = vpop.f32.mrf.mxu0
  %v2066 = vadd.f32 %v798, %v2065
  %v2067 = vpop.f32.mrf.mxu0
  %2068 = vmatprep.mubr.f32.mxu0 0.0
  %2069 = vmatmul.mubr.f32.gmra.mxu0 %v1063
  %v2070 = vpop.f32.mrf.mxu0
  %v2071 = vadd.f32 %v798, %v2070
  %v2072 = vpop.f32.mrf.mxu0
  %2073 = vmatprep.mubr.f32.mxu0 0.0
  %2074 = vmatmul.mubr.f32.gmra.mxu0 %v1066
  %v2075 = vpop.f32.mrf.mxu0
  %v2076 = vadd.f32 %v798, %v2075
  %v2077 = vpop.f32.mrf.mxu0
  %2078 = vmatprep.mubr.f32.mxu0 0.0
  %2079 = vmatmul.mubr.f32.gmra.mxu0 %v1069
  %v2080 = vpop.f32.mrf.mxu0
  %v2081 = vadd.f32 %v798, %v2080
  %v2082 = vpop.f32.mrf.mxu0
  %2083 = vmatprep.mubr.f32.mxu0 0.0
  %2084 = vmatmul.mubr.f32.gmra.mxu0 %v1072
  %v2085 = vpop.f32.mrf.mxu0
  %v2086 = vadd.f32 %v798, %v2085
  %v2087 = vpop.f32.mrf.mxu0
  %2088 = vmatprep.mubr.f32.mxu0 0.0
  %2089 = vmatmul.mubr.f32.gmra.mxu0 %v1075
  %v2090 = vpop.f32.mrf.mxu0
  %v2091 = vadd.f32 %v798, %v2090
  %v2092 = vpop.f32.mrf.mxu0
  %2093 = vmatprep.mubr.f32.mxu0 0.0
  %2094 = vmatmul.mubr.f32.gmra.mxu0 %v1078
  %v2095 = vpop.f32.mrf.mxu0
  %v2096 = vadd.f32 %v798, %v2095
  %v2097 = vpop.f32.mrf.mxu0
  %2098 = vmatprep.mubr.f32.mxu0 0.0
  %2099 = vmatmul.mubr.f32.gmra.mxu0 %v1081
  %v2100 = vpop.f32.mrf.mxu0
  %v2101 = vadd.f32 %v798, %v2100
  %v2102 = vpop.f32.mrf.mxu0
  %2103 = vmatprep.mubr.f32.mxu0 0.0
  %2104 = vmatmul.mubr.f32.gmra.mxu0 %v1084
  %v2105 = vpop.f32.mrf.mxu0
  %v2106 = vadd.f32 %v798, %v2105
  %v2107 = vpop.f32.mrf.mxu0
  %2108 = vmatprep.mubr.f32.mxu0 0.0
  %2109 = vmatmul.mubr.f32.gmra.mxu0 %v1087
  %v2110 = vpop.f32.mrf.mxu0
  %v2111 = vadd.f32 %v798, %v2110
  %v2112 = vpop.f32.mrf.mxu0
  %2113 = vmatprep.mubr.f32.mxu0 0.0
  %2114 = vmatmul.mubr.f32.gmra.mxu0 %v1090
  %v2115 = vpop.f32.mrf.mxu0
  %v2116 = vadd.f32 %v798, %v2115
  %v2117 = vpop.f32.mrf.mxu0
  %2118 = vmatprep.mubr.f32.mxu0 0.0
  %2119 = vmatmul.mubr.f32.gmra.mxu0 %v1093
  %v2120 = vpop.f32.mrf.mxu0
  %v2121 = vadd.f32 %v798, %v2120
  %v2122 = vpop.f32.mrf.mxu0
  %2123 = vmatprep.mubr.f32.mxu0 0.0
  %2124 = vmatmul.mubr.f32.gmra.mxu0 %v1096
  %v2125 = vpop.f32.mrf.mxu0
  %v2126 = vadd.f32 %v798, %v2125
  %v2127 = vpop.f32.mrf.mxu0
  %2128 = vmatprep.mubr.f32.mxu0 0.0
  %2129 = vmatmul.mubr.f32.gmra.mxu0 %v1099
  %v2130 = vpop.f32.mrf.mxu0
  %v2131 = vadd.f32 %v798, %v2130
  %v2132 = vpop.f32.mrf.mxu0
  %2133 = vmatprep.mubr.f32.mxu0 0.0
  %2134 = vmatmul.mubr.f32.gmra.mxu0 %v1102
  %v2135 = vpop.f32.mrf.mxu0
  %v2136 = vadd.f32 %v798, %v2135
  %v2137 = vpop.f32.mrf.mxu0
  %2138 = vmatprep.mubr.f32.mxu0 0.0
  %2139 = vmatmul.mubr.f32.gmra.mxu0 %v1105
  %v2140 = vpop.f32.mrf.mxu0
  %v2141 = vadd.f32 %v798, %v2140
  %v2142 = vpop.f32.mrf.mxu0
  %2143 = vmatprep.mubr.f32.mxu0 0.0
  %2144 = vmatmul.mubr.f32.gmra.mxu0 %v1108
  %v2145 = vpop.f32.mrf.mxu0
  %v2146 = vadd.f32 %v798, %v2145
  %v2147 = vpop.f32.mrf.mxu0
  %2148 = vmatprep.mubr.f32.mxu0 0.0
  %2149 = vmatmul.mubr.f32.gmra.mxu0 %v1111
  %v2150 = vpop.f32.mrf.mxu0
  %v2151 = vadd.f32 %v798, %v2150
  %v2152 = vpop.f32.mrf.mxu0
  %2153 = vmatprep.mubr.f32.mxu0 0.0
  %2154 = vmatmul.mubr.f32.gmra.mxu0 %v1114
  %v2155 = vpop.f32.mrf.mxu0
  %v2156 = vadd.f32 %v798, %v2155
  %v2157 = vpop.f32.mrf.mxu0
  %2158 = vmatprep.mubr.f32.mxu0 0.0
  %2159 = vmatmul.mubr.f32.gmra.mxu0 %v1117
  %v2160 = vpop.f32.mrf.mxu0
  %v2161 = vadd.f32 %v798, %v2160
  %v2162 = vpop.f32.mrf.mxu0
  %2163 = vmatprep.mubr.f32.mxu0 0.0
  %2164 = vmatmul.mubr.f32.gmra.mxu0 %v1120
  %v2165 = vpop.f32.mrf.mxu0
  %v2166 = vadd.f32 %v798, %v2165
  %v2167 = vpop.f32.mrf.mxu0
  %2168 = vmatprep.mubr.f32.mxu0 0.0
  %2169 = vmatmul.mubr.f32.gmra.mxu0 %v1123
  %v2170 = vpop.f32.mrf.mxu0
  %v2171 = vadd.f32 %v798, %v2170
  %v2172 = vpop.f32.mrf.mxu0
  %2173 = vmatprep.mubr.f32.mxu0 0.0
  %2174 = vmatmul.mubr.f32.gmra.mxu0 %v1126
  %v2175 = vpop.f32.mrf.mxu0
  %v2176 = vadd.f32 %v798, %v2175
  %v2177 = vpop.f32.mrf.mxu0
  %2178 = vmatprep.mubr.f32.mxu0 0.0
  %2179 = vmatmul.mubr.f32.gmra.mxu0 %v1129
  %v2180 = vpop.f32.mrf.mxu0
  %v2181 = vadd.f32 %v798, %v2180
  %v2182 = vpop.f32.mrf.mxu0
  %2183 = vmatprep.mubr.f32.mxu0 0.0
  %2184 = vmatmul.mubr.f32.gmra.mxu0 %v1132
  %v2185 = vpop.f32.mrf.mxu0
  %v2186 = vadd.f32 %v798, %v2185
  %v2187 = vpop.f32.mrf.mxu0
  %2188 = vmatprep.mubr.f32.mxu0 0.0
  %2189 = vmatmul.mubr.f32.gmra.mxu0 %v1135
  %v2190 = vpop.f32.mrf.mxu0
  %v2191 = vadd.f32 %v798, %v2190
  %v2192 = vpop.f32.mrf.mxu0
  %2193 = vmatprep.mubr.f32.mxu0 0.0
  %2194 = vmatmul.mubr.f32.gmra.mxu0 %v1138
  %v2195 = vpop.f32.mrf.mxu0
  %v2196 = vadd.f32 %v798, %v2195
  %v2197 = vpop.f32.mrf.mxu0
  %2198 = vmatprep.mubr.f32.mxu0 0.0
  %2199 = vmatmul.mubr.f32.gmra.mxu0 %v1141
  %v2200 = vpop.f32.mrf.mxu0
  %v2201 = vadd.f32 %v798, %v2200
  %v2202 = vpop.f32.mrf.mxu0
  %2203 = vmatprep.mubr.f32.mxu0 0.0
  %2204 = vmatmul.mubr.f32.gmra.mxu0 %v1144
  %v2205 = vpop.f32.mrf.mxu0
  %v2206 = vadd.f32 %v798, %v2205
  %v2207 = vpop.f32.mrf.mxu0
  %2208 = vmatprep.mubr.f32.mxu0 0.0
  %2209 = vmatmul.mubr.f32.gmra.mxu0 %v1147
  %v2210 = vpop.f32.mrf.mxu0
  %v2211 = vadd.f32 %v798, %v2210
  %v2212 = vpop.f32.mrf.mxu0
  %2213 = vmatprep.mubr.f32.mxu0 0.0
  %2214 = vmatmul.mubr.f32.gmra.mxu0 %v1150
  %v2215 = vpop.f32.mrf.mxu0
  %v2216 = vadd.f32 %v798, %v2215
  %v2217 = vpop.f32.mrf.mxu0
  %2218 = vmatprep.mubr.f32.mxu0 0.0
  %2219 = vmatmul.mubr.f32.gmra.mxu0 %v1153
  %v2220 = vpop.f32.mrf.mxu0
  %v2221 = vadd.f32 %v798, %v2220
  %v2222 = vpop.f32.mrf.mxu0
  %2223 = vmatprep.mubr.f32.mxu0 0.0
  %2224 = vmatmul.mubr.f32.gmra.mxu0 %v1156
  %v2225 = vpop.f32.mrf.mxu0
  %v2226 = vadd.f32 %v798, %v2225
  %v2227 = vpop.f32.mrf.mxu0
  %2228 = vmatprep.mubr.f32.mxu0 0.0
  %2229 = vmatmul.mubr.f32.gmra.mxu0 %v1159
  %v2230 = vpop.f32.mrf.mxu0
  %v2231 = vadd.f32 %v798, %v2230
  %v2232 = vpop.f32.mrf.mxu0
  %2233 = vmatprep.mubr.f32.mxu0 0.0
  %2234 = vmatmul.mubr.f32.gmra.mxu0 %v1162
  %v2235 = vpop.f32.mrf.mxu0
  %v2236 = vadd.f32 %v798, %v2235
  %v2237 = vpop.f32.mrf.mxu0
  %2238 = vmatprep.mubr.f32.mxu0 0.0
  %2239 = vmatmul.mubr.f32.gmra.mxu0 %v1165
  %v2240 = vpop.f32.mrf.mxu0
  %v2241 = vadd.f32 %v798, %v2240
  %v2242 = vpop.f32.mrf.mxu0
  %2243 = vmatprep.mubr.f32.mxu0 0.0
  %2244 = vmatmul.mubr.f32.gmra.mxu0 %v1168
  %v2245 = vpop.f32.mrf.mxu0
  %v2246 = vadd.f32 %v798, %v2245
  %v2247 = vpop.f32.mrf.mxu0
  %2248 = vmatprep.mubr.f32.mxu0 0.0
  %2249 = vmatmul.mubr.f32.gmra.mxu0 %v1171
  %v2250 = vpop.f32.mrf.mxu0
  %v2251 = vadd.f32 %v798, %v2250
  %v2252 = vpop.f32.mrf.mxu0
  %2253 = vmatprep.mubr.f32.mxu0 0.0
  %2254 = vmatmul.mubr.f32.gmra.mxu0 %v1174
  %v2255 = vpop.f32.mrf.mxu0
  %v2256 = vadd.f32 %v798, %v2255
  %v2257 = vpop.f32.mrf.mxu0
  %2258 = vmatprep.mubr.f32.mxu0 0.0
  %2259 = vmatmul.mubr.f32.gmra.mxu0 %v1177
  %v2260 = vpop.f32.mrf.mxu0
  %v2261 = vadd.f32 %v798, %v2260
  %v2262 = vpop.f32.mrf.mxu0
  %2263 = vmatprep.mubr.f32.mxu0 0.0
  %2264 = vmatmul.mubr.f32.gmra.mxu0 %v1180
  %v2265 = vpop.f32.mrf.mxu0
  %v2266 = vadd.f32 %v798, %v2265
  %v2267 = vpop.f32.mrf.mxu0
  %2268 = vmatprep.mubr.f32.mxu0 0.0
  %2269 = vmatmul.mubr.f32.gmra.mxu0 %v1183
  %v2270 = vpop.f32.mrf.mxu0
  %v2271 = vadd.f32 %v798, %v2270
  %v2272 = vpop.f32.mrf.mxu0
  %2273 = vmatprep.mubr.f32.mxu0 0.0
  %2274 = vmatmul.mubr.f32.gmra.mxu0 %v1186
  %v2275 = vpop.f32.mrf.mxu0
  %v2276 = vadd.f32 %v798, %v2275
  %v2277 = vpop.f32.mrf.mxu0
  %2278 = vmatprep.mubr.f32.mxu0 0.0
  %2279 = vmatmul.mubr.f32.gmra.mxu0 %v1189
  %v2280 = vpop.f32.mrf.mxu0
  %v2281 = vadd.f32 %v798, %v2280
  %v2282 = vpop.f32.mrf.mxu0
  %2283 = vmatprep.mubr.f32.mxu0 0.0
  %2284 = vmatmul.mubr.f32.gmra.mxu0 %v1192
  %v2285 = vpop.f32.mrf.mxu0
  %v2286 = vadd.f32 %v798, %v2285
  %v2287 = vpop.f32.mrf.mxu0
  %2288 = vmatprep.mubr.f32.mxu0 0.0
  %2289 = vmatmul.mubr.f32.gmra.mxu0 %v1195
  %v2290 = vpop.f32.mrf.mxu0
  %v2291 = vadd.f32 %v798, %v2290
  %v2292 = vpop.f32.mrf.mxu0
  %2293 = vmatprep.mubr.f32.mxu0 0.0
  %2294 = vmatmul.mubr.f32.gmra.mxu0 %v1198
  %v2295 = vpop.f32.mrf.mxu0
  %v2296 = vadd.f32 %v798, %v2295
  %v2297 = vpop.f32.mrf.mxu0
  %2298 = vmatprep.mubr.f32.mxu0 0.0
  %2299 = vmatmul.mubr.f32.gmra.mxu0 %v1201
  %v2300 = vpop.f32.mrf.mxu0
  %v2301 = vadd.f32 %v798, %v2300
  %v2302 = vpop.f32.mrf.mxu0
  %2303 = vmatprep.mubr.f32.mxu0 0.0
  %2304 = vmatmul.mubr.f32.gmra.mxu0 %v1204
  %v2305 = vpop.f32.mrf.mxu0
  %v2306 = vadd.f32 %v798, %v2305
  %v2307 = vpop.f32.mrf.mxu0
  %2308 = vmatprep.mubr.f32.mxu0 0.0
  %2309 = vmatmul.mubr.f32.gmra.mxu0 %v1207
  %v2310 = vpop.f32.mrf.mxu0
  %v2311 = vadd.f32 %v798, %v2310
  %v2312 = vpop.f32.mrf.mxu0
  %2313 = vmatprep.mubr.f32.mxu0 0.0
  %2314 = vmatmul.mubr.f32.gmra.mxu0 %v1210
  %v2315 = vpop.f32.mrf.mxu0
  %v2316 = vadd.f32 %v798, %v2315
  %v2317 = vpop.f32.mrf.mxu0
  %2318 = vmatprep.mubr.f32.mxu0 0.0
  %2319 = vmatmul.mubr.f32.gmra.mxu0 %v1213
  %v2320 = vpop.f32.mrf.mxu0
  %v2321 = vadd.f32 %v798, %v2320
  %v2322 = vpop.f32.mrf.mxu0
  %2323 = vmatprep.mubr.f32.mxu0 0.0
  %2324 = vmatmul.mubr.f32.gmra.mxu0 %v1216
  %v2325 = vpop.f32.mrf.mxu0
  %v2326 = vadd.f32 %v798, %v2325
  %v2327 = vpop.f32.mrf.mxu0
  %2328 = vmatprep.mubr.f32.mxu0 0.0
  %2329 = vmatmul.mubr.f32.gmra.mxu0 %v1219
  %v2330 = vpop.f32.mrf.mxu0
  %v2331 = vadd.f32 %v798, %v2330
  %v2332 = vpop.f32.mrf.mxu0
  %2333 = vmatprep.mubr.f32.mxu0 0.0
  %2334 = vmatmul.mubr.f32.gmra.mxu0 %v1222
  %v2335 = vpop.f32.mrf.mxu0
  %v2336 = vadd.f32 %v798, %v2335
  %v2337 = vpop.f32.mrf.mxu0
  %2338 = vmatprep.mubr.f32.mxu0 0.0
  %2339 = vmatmul.mubr.f32.gmra.mxu0 %v1225
  %v2340 = vpop.f32.mrf.mxu0
  %v2341 = vadd.f32 %v798, %v2340
  %v2342 = vpop.f32.mrf.mxu0
  %2343 = vmatprep.mubr.f32.mxu0 0.0
  %2344 = vmatmul.mubr.f32.gmra.mxu0 %v1228
  %v2345 = vpop.f32.mrf.mxu0
  %v2346 = vadd.f32 %v798, %v2345
  %v2347 = vpop.f32.mrf.mxu0
  %2348 = vmatprep.mubr.f32.mxu0 0.0
  %2349 = vmatmul.mubr.f32.gmra.mxu0 %v1231
  %v2350 = vpop.f32.mrf.mxu0
  %v2351 = vadd.f32 %v798, %v2350
  %v2352 = vpop.f32.mrf.mxu0
  %2353 = vmatprep.mubr.f32.mxu0 0.0
  %2354 = vmatmul.mubr.f32.gmra.mxu0 %v1234
  %v2355 = vpop.f32.mrf.mxu0
  %v2356 = vadd.f32 %v798, %v2355
  %v2357 = vpop.f32.mrf.mxu0
  %2358 = vmatprep.mubr.f32.mxu0 0.0
  %2359 = vmatmul.mubr.f32.gmra.mxu0 %v1237
  %v2360 = vpop.f32.mrf.mxu0
  %v2361 = vadd.f32 %v798, %v2360
  %v2362 = vpop.f32.mrf.mxu0
  %2363 = vmatprep.mubr.f32.mxu0 0.0
  %2364 = vmatmul.mubr.f32.gmra.mxu0 %v1240
  %v2365 = vpop.f32.mrf.mxu0
  %v2366 = vadd.f32 %v798, %v2365
  %v2367 = vpop.f32.mrf.mxu0
  %2368 = vmatprep.mubr.f32.mxu0 0.0
  %2369 = vmatmul.mubr.f32.gmra.mxu0 %v1243
  %v2370 = vpop.f32.mrf.mxu0
  %v2371 = vadd.f32 %v798, %v2370
  %v2372 = vpop.f32.mrf.mxu0
  %2373 = vmatprep.mubr.f32.mxu0 0.0
  %2374 = vmatmul.mubr.f32.gmra.mxu0 %v1246
  %v2375 = vpop.f32.mrf.mxu0
  %v2376 = vadd.f32 %v798, %v2375
  %v2377 = vpop.f32.mrf.mxu0
  %2378 = vmatprep.mubr.f32.mxu0 0.0
  %2379 = vmatmul.mubr.f32.gmra.mxu0 %v1249
  %v2380 = vpop.f32.mrf.mxu0
  %v2381 = vadd.f32 %v798, %v2380
  %v2382 = vpop.f32.mrf.mxu0
  %2383 = vmatprep.mubr.f32.mxu0 0.0
  %2384 = vmatmul.mubr.f32.gmra.mxu0 %v1252
  %v2385 = vpop.f32.mrf.mxu0
  %v2386 = vadd.f32 %v798, %v2385
  %v2387 = vpop.f32.mrf.mxu0
  %2388 = vmatprep.mubr.f32.mxu0 0.0
  %2389 = vmatmul.mubr.f32.gmra.mxu0 %v1255
  %v2390 = vpop.f32.mrf.mxu0
  %v2391 = vadd.f32 %v798, %v2390
  %v2392 = vpop.f32.mrf.mxu0
  %2393 = vmatprep.mubr.f32.mxu0 0.0
  %2394 = vmatmul.mubr.f32.gmra.mxu0 %v1258
  %v2395 = vpop.f32.mrf.mxu0
  %v2396 = vadd.f32 %v798, %v2395
  %v2397 = vpop.f32.mrf.mxu0
  %2398 = vmatprep.mubr.f32.mxu0 0.0
  %2399 = vmatmul.mubr.f32.gmra.mxu0 %v1261
  %v2400 = vpop.f32.mrf.mxu0
  %v2401 = vadd.f32 %v798, %v2400
  %v2402 = vpop.f32.mrf.mxu0
  %2403 = vmatprep.mubr.f32.mxu0 0.0
  %2404 = vmatmul.mubr.f32.gmra.mxu0 %v1264
  %v2405 = vpop.f32.mrf.mxu0
  %v2406 = vadd.f32 %v798, %v2405
  %v2407 = vpop.f32.mrf.mxu0
  %2408 = vmatprep.mubr.f32.mxu0 0.0
  %2409 = vmatmul.mubr.f32.gmra.mxu0 %v1267
  %v2410 = vpop.f32.mrf.mxu0
  %v2411 = vadd.f32 %v798, %v2410
  %v2412 = vpop.f32.mrf.mxu0
  %2413 = vmatprep.mubr.f32.mxu0 0.0
  %2414 = vmatmul.mubr.f32.gmra.mxu0 %v1270
  %v2415 = vpop.f32.mrf.mxu0
  %v2416 = vadd.f32 %v798, %v2415
  %v2417 = vpop.f32.mrf.mxu0
  %2418 = vmatprep.mubr.f32.mxu0 0.0
  %2419 = vmatmul.mubr.f32.gmra.mxu0 %v1273
  %v2420 = vpop.f32.mrf.mxu0
  %v2421 = vadd.f32 %v798, %v2420
  %v2422 = vpop.f32.mrf.mxu0
  %2423 = vmatprep.mubr.f32.mxu0 0.0
  %2424 = vmatmul.mubr.f32.gmra.mxu0 %v1276
  %v2425 = vpop.f32.mrf.mxu0
  %v2426 = vadd.f32 %v798, %v2425
  %v2427 = vpop.f32.mrf.mxu0
  %2428 = vmatprep.mubr.f32.mxu0 0.0
  %2429 = vmatmul.mubr.f32.gmra.mxu0 %v1279
  %v2430 = vpop.f32.mrf.mxu0
  %v2431 = vadd.f32 %v798, %v2430
  %v2432 = vpop.f32.mrf.mxu0
  %2433 = vmatprep.mubr.f32.mxu0 0.0
  %2434 = vmatmul.mubr.f32.gmra.mxu0 %v1282
  %v2435 = vpop.f32.mrf.mxu0
  %v2436 = vadd.f32 %v798, %v2435
  %v2437 = vpop.f32.mrf.mxu0
  %2438 = vmatprep.mubr.f32.mxu0 0.0
  %2439 = vmatmul.mubr.f32.gmra.mxu0 %v1285
  %v2440 = vpop.f32.mrf.mxu0
  %v2441 = vadd.f32 %v798, %v2440
  %v2442 = vpop.f32.mrf.mxu0
  %2443 = vmatprep.mubr.f32.mxu0 0.0
  %2444 = vmatmul.mubr.f32.gmra.mxu0 %v1288
  %v2445 = vpop.f32.mrf.mxu0
  %v2446 = vadd.f32 %v798, %v2445
  %v2447 = vpop.f32.mrf.mxu0
  %2448 = vmatprep.mubr.f32.mxu0 0.0
  %2449 = vmatmul.mubr.f32.gmra.mxu0 %v1291
  %v2450 = vpop.f32.mrf.mxu0
  %v2451 = vadd.f32 %v798, %v2450
  %v2452 = vpop.f32.mrf.mxu0
  %2453 = vmatprep.mubr.f32.mxu0 0.0
  %2454 = vmatmul.mubr.f32.gmra.mxu0 %v1294
  %v2455 = vpop.f32.mrf.mxu0
  %v2456 = vadd.f32 %v798, %v2455
  %v2457 = vpop.f32.mrf.mxu0
  %2458 = vmatprep.mubr.f32.mxu0 0.0
  %2459 = vmatmul.mubr.f32.gmra.mxu0 %v1297
  %v2460 = vpop.f32.mrf.mxu0
  %v2461 = vadd.f32 %v798, %v2460
  %v2462 = vpop.f32.mrf.mxu0
  %2463 = vmatprep.mubr.f32.mxu0 0.0
  %2464 = vmatmul.mubr.f32.gmra.mxu0 %v1300
  %v2465 = vpop.f32.mrf.mxu0
  %v2466 = vadd.f32 %v798, %v2465
  %v2467 = vpop.f32.mrf.mxu0
  %2468 = vmatprep.mubr.f32.mxu0 0.0
  %2469 = vmatmul.mubr.f32.gmra.mxu0 %v1303
  %v2470 = vpop.f32.mrf.mxu0
  %v2471 = vadd.f32 %v798, %v2470
  %v2472 = vpop.f32.mrf.mxu0
  %2473 = vmatprep.mubr.f32.mxu0 0.0
  %2474 = vmatmul.mubr.f32.gmra.mxu0 %v1306
  %v2475 = vpop.f32.mrf.mxu0
  %v2476 = vadd.f32 %v798, %v2475
  %v2477 = vpop.f32.mrf.mxu0
  %2478 = vmatprep.mubr.f32.mxu0 0.0
  %2479 = vmatmul.mubr.f32.gmra.mxu0 %v1309
  %v2480 = vpop.f32.mrf.mxu0
  %v2481 = vadd.f32 %v798, %v2480
  %v2482 = vpop.f32.mrf.mxu0
  %2483 = vmatprep.mubr.f32.mxu0 0.0
  %2484 = vmatmul.mubr.f32.gmra.mxu0 %v1312
  %v2485 = vpop.f32.mrf.mxu0
  %v2486 = vadd.f32 %v798, %v2485
  %v2487 = vpop.f32.mrf.mxu0
  %2488 = vmatprep.mubr.f32.mxu0 0.0
  %2489 = vmatmul.mubr.f32.gmra.mxu0 %v1315
  %v2490 = vpop.f32.mrf.mxu0
  %v2491 = vadd.f32 %v798, %v2490
  %v2492 = vpop.f32.mrf.mxu0
  %2493 = vmatprep.mubr.f32.mxu0 0.0
  %2494 = vmatmul.mubr.f32.gmra.mxu0 %v1318
  %v2495 = vpop.f32.mrf.mxu0
  %v2496 = vadd.f32 %v798, %v2495
  %v2497 = vpop.f32.mrf.mxu0
  %2498 = vmatprep.mubr.f32.mxu0 0.0
  %2499 = vmatmul.mubr.f32.gmra.mxu0 %v1321
  %v2500 = vpop.f32.mrf.mxu0
  %v2501 = vadd.f32 %v798, %v2500
  %v2502 = vpop.f32.mrf.mxu0
  %2503 = vmatprep.mubr.f32.mxu0 0.0
  %2504 = vmatmul.mubr.f32.gmra.mxu0 %v1324
  %v2505 = vpop.f32.mrf.mxu0
  %v2506 = vadd.f32 %v798, %v2505
  %v2507 = vpop.f32.mrf.mxu0
  %2508 = vmatprep.mubr.f32.mxu0 0.0
  %2509 = vmatmul.mubr.f32.gmra.mxu0 %v1327
  %v2510 = vpop.f32.mrf.mxu0
  %v2511 = vadd.f32 %v798, %v2510
  %v2512 = vpop.f32.mrf.mxu0
  %2513 = vmatprep.mubr.f32.mxu0 0.0
  %2514 = vmatmul.mubr.f32.gmra.mxu0 %v1330
  %v2515 = vpop.f32.mrf.mxu0
  %v2516 = vadd.f32 %v798, %v2515
  %v2517 = vpop.f32.mrf.mxu0
  %2518 = vmatprep.mubr.f32.mxu0 0.0
  %2519 = vmatmul.mubr.f32.gmra.mxu0 %v1333
  %v2520 = vpop.f32.mrf.mxu0
  %v2521 = vadd.f32 %v798, %v2520
  %v2522 = vpop.f32.mrf.mxu0
  %2523 = vmatprep.mubr.f32.mxu0 0.0
  %2524 = vmatmul.mubr.f32.gmra.mxu0 %v1336
  %v2525 = vpop.f32.mrf.mxu0
  %v2526 = vadd.f32 %v798, %v2525
  %v2527 = vpop.f32.mrf.mxu0
  %2528 = vmatprep.mubr.f32.mxu0 0.0
  %2529 = vmatmul.mubr.f32.gmra.mxu0 %v1339
  %v2530 = vpop.f32.mrf.mxu0
  %v2531 = vadd.f32 %v798, %v2530
  %v2532 = vpop.f32.mrf.mxu0
  %2533 = vmatprep.mubr.f32.mxu0 0.0
  %2534 = vmatmul.mubr.f32.gmra.mxu0 %v1342
  %v2535 = vpop.f32.mrf.mxu0
  %v2536 = vadd.f32 %v798, %v2535
  %v2537 = vpop.f32.mrf.mxu0
  %2538 = vmatprep.mubr.f32.mxu0 0.0
  %2539 = vmatmul.mubr.f32.gmra.mxu0 %v1345
  %v2540 = vpop.f32.mrf.mxu0
  %v2541 = vadd.f32 %v798, %v2540
  %v2542 = vpop.f32.mrf.mxu0
  %2543 = vmatprep.mubr.f32.mxu0 0.0
  %2544 = vmatmul.mubr.f32.gmra.mxu0 %v1348
  %v2545 = vpop.f32.mrf.mxu0
  %v2546 = vadd.f32 %v798, %v2545
  %v2547 = vpop.f32.mrf.mxu0
  %2548 = vmatprep.mubr.f32.mxu0 0.0
  %2549 = vmatmul.mubr.f32.gmra.mxu0 %v1351
  %v2550 = vpop.f32.mrf.mxu0
  %v2551 = vadd.f32 %v798, %v2550
  %v2552 = vpop.f32.mrf.mxu0
  %2553 = vmatprep.mubr.f32.mxu0 0.0
  %2554 = vmatmul.mubr.f32.gmra.mxu0 %v1354
  %v2555 = vpop.f32.mrf.mxu0
  %v2556 = vadd.f32 %v798, %v2555
  %v2557 = vpop.f32.mrf.mxu0
  %2558 = vmatprep.mubr.f32.mxu0 0.0
  %2559 = vmatmul.mubr.f32.gmra.mxu0 %v1357
  %v2560 = vpop.f32.mrf.mxu0
  %v2561 = vadd.f32 %v798, %v2560
  %v2562 = vpop.f32.mrf.mxu0
  %2563 = vmatprep.mubr.f32.mxu0 0.0
  %2564 = vmatmul.mubr.f32.gmra.mxu0 %v1360
  %v2565 = vpop.f32.mrf.mxu0
  %v2566 = vadd.f32 %v798, %v2565
  %v2567 = vpop.f32.mrf.mxu0
  %2568 = vmatprep.mubr.f32.mxu0 0.0
  %2569 = vmatmul.mubr.f32.gmra.mxu0 %v1363
  %v2570 = vpop.f32.mrf.mxu0
  %v2571 = vadd.f32 %v798, %v2570
  %v2572 = vpop.f32.mrf.mxu0
  %2573 = vmatprep.mubr.f32.mxu0 0.0
  %2574 = vmatmul.mubr.f32.gmra.mxu0 %v1366
  %v2575 = vpop.f32.mrf.mxu0
  %v2576 = vadd.f32 %v798, %v2575
  %v2577 = vpop.f32.mrf.mxu0
  %2578 = vmatprep.mubr.f32.mxu0 0.0
  %2579 = vmatmul.mubr.f32.gmra.mxu0 %v1369
  %v2580 = vpop.f32.mrf.mxu0
  %v2581 = vadd.f32 %v798, %v2580
  %v2582 = vpop.f32.mrf.mxu0
  %2583 = vmatprep.mubr.f32.mxu0 0.0
  %2584 = vmatmul.mubr.f32.gmra.mxu0 %v1372
  %v2585 = vpop.f32.mrf.mxu0
  %v2586 = vadd.f32 %v798, %v2585
  %v2587 = vpop.f32.mrf.mxu0
  %2588 = vmatprep.mubr.f32.mxu0 0.0
  %2589 = vmatmul.mubr.f32.gmra.mxu0 %v1375
  %v2590 = vpop.f32.mrf.mxu0
  %v2591 = vadd.f32 %v798, %v2590
  %v2592 = vpop.f32.mrf.mxu0
  %2593 = vmatprep.mubr.f32.mxu0 0.0
  %2594 = vmatmul.mubr.f32.gmra.mxu0 %v1378
  %v2595 = vpop.f32.mrf.mxu0
  %v2596 = vadd.f32 %v798, %v2595
  %v2597 = vpop.f32.mrf.mxu0
  %2598 = vmatprep.mubr.f32.mxu0 0.0
  %2599 = vmatmul.mubr.f32.gmra.mxu0 %v1381
  %v2600 = vpop.f32.mrf.mxu0
  %v2601 = vadd.f32 %v798, %v2600
  %v2602 = vpop.f32.mrf.mxu0
  %2603 = vmatprep.mubr.f32.mxu0 0.0
  %2604 = vmatmul.mubr.f32.gmra.mxu0 %v1384
  %v2605 = vpop.f32.mrf.mxu0
  %v2606 = vadd.f32 %v798, %v2605
  %v2607 = vpop.f32.mrf.mxu0
  %2608 = vmatprep.mubr.f32.mxu0 0.0
  %2609 = vmatmul.mubr.f32.gmra.mxu0 %v1387
  %v2610 = vpop.f32.mrf.mxu0
  %v2611 = vadd.f32 %v798, %v2610
  %v2612 = vpop.f32.mrf.mxu0
  %2613 = vmatprep.mubr.f32.mxu0 0.0
  %2614 = vmatmul.mubr.f32.gmra.mxu0 %v1390
  %v2615 = vpop.f32.mrf.mxu0
  %v2616 = vadd.f32 %v798, %v2615
  %v2617 = vpop.f32.mrf.mxu0
  %2618 = vmatprep.mubr.f32.mxu0 0.0
  %2619 = vmatmul.mubr.f32.gmra.mxu0 %v1393
  %v2620 = vpop.f32.mrf.mxu0
  %v2621 = vadd.f32 %v798, %v2620
  %v2622 = vpop.f32.mrf.mxu0
  %2623 = vmatprep.mubr.f32.mxu0 0.0
  %2624 = vmatmul.mubr.f32.gmra.mxu0 %v1396
  %v2625 = vpop.f32.mrf.mxu0
  %v2626 = vadd.f32 %v798, %v2625
  %v2627 = vpop.f32.mrf.mxu0
  %2628 = vmatprep.mubr.f32.mxu0 0.0
  %2629 = vmatmul.mubr.f32.gmra.mxu0 %v1399
  %v2630 = vpop.f32.mrf.mxu0
  %v2631 = vadd.f32 %v798, %v2630
  %v2632 = vpop.f32.mrf.mxu0
  %2633 = vmatprep.mubr.f32.mxu0 0.0
  %2634 = vmatmul.mubr.f32.gmra.mxu0 %v1402
  %v2635 = vpop.f32.mrf.mxu0
  %v2636 = vadd.f32 %v798, %v2635
  %v2637 = vpop.f32.mrf.mxu0
  %2638 = vmatprep.mubr.f32.mxu0 0.0
  %2639 = vmatmul.mubr.f32.gmra.mxu0 %v1405
  %v2640 = vpop.f32.mrf.mxu0
  %v2641 = vadd.f32 %v798, %v2640
  %v2642 = vpop.f32.mrf.mxu0
  %2643 = vmatprep.mubr.f32.mxu0 0.0
  %2644 = vmatmul.mubr.f32.gmra.mxu0 %v1408
  %v2645 = vpop.f32.mrf.mxu0
  %v2646 = vadd.f32 %v798, %v2645
  %v2647 = vpop.f32.mrf.mxu0
  %2648 = vmatprep.mubr.f32.mxu0 0.0
  %2649 = vmatmul.mubr.f32.gmra.mxu0 %v1411
  %v2650 = vpop.f32.mrf.mxu0
  %v2651 = vadd.f32 %v798, %v2650
  %v2652 = vpop.f32.mrf.mxu0
  %2653 = vmatprep.mubr.f32.mxu0 0.0
  %2654 = vmatmul.mubr.f32.gmra.mxu0 %v1414
  %v2655 = vpop.f32.mrf.mxu0
  %v2656 = vadd.f32 %v798, %v2655
  %v2657 = vpop.f32.mrf.mxu0
  %2658 = vmatprep.mubr.f32.mxu0 0.0
  %2659 = vmatmul.mubr.f32.gmra.mxu0 %v1417
  %v2660 = vpop.f32.mrf.mxu0
  %v2661 = vadd.f32 %v798, %v2660
  %v2662 = vpop.f32.mrf.mxu0
  %2663 = vmatprep.mubr.f32.mxu0 0.0
  %2664 = vmatmul.mubr.f32.gmra.mxu0 %v1420
  %v2665 = vpop.f32.mrf.mxu0
  %v2666 = vadd.f32 %v798, %v2665
  %v2667 = vpop.f32.mrf.mxu0
  %2668 = vmatprep.mubr.f32.mxu0 0.0
  %2669 = vmatmul.mubr.f32.gmra.mxu0 %v1423
  %v2670 = vpop.f32.mrf.mxu0
  %v2671 = vadd.f32 %v798, %v2670
  %v2672 = vpop.f32.mrf.mxu0
  %2673 = vmatprep.mubr.f32.mxu0 0.0
  %2674 = vmatmul.mubr.f32.gmra.mxu0 %v1426
  %v2675 = vpop.f32.mrf.mxu0
  %v2676 = vadd.f32 %v798, %v2675
  %v2677 = vpop.f32.mrf.mxu0
  %2678 = vmatprep.mubr.f32.mxu0 0.0
  %2679 = vmatmul.mubr.f32.gmra.mxu0 %v1429
  %v2680 = vpop.f32.mrf.mxu0
  %v2681 = vadd.f32 %v798, %v2680
  %v2682 = vpop.f32.mrf.mxu0
  %2683 = vmatprep.mubr.f32.mxu0 0.0
  %2684 = vmatmul.mubr.f32.gmra.mxu0 %v1432
  %v2685 = vpop.f32.mrf.mxu0
  %v2686 = vadd.f32 %v798, %v2685
  %v2687 = vpop.f32.mrf.mxu0
  %2688 = vmatprep.mubr.f32.mxu0 0.0
  %2689 = vmatmul.mubr.f32.gmra.mxu0 %v1435
  %v2690 = vpop.f32.mrf.mxu0
  %v2691 = vadd.f32 %v798, %v2690
  %v2692 = vpop.f32.mrf.mxu0
  %2693 = vmatprep.mubr.f32.mxu0 0.0
  %2694 = vmatmul.mubr.f32.gmra.mxu0 %v1438
  %v2695 = vpop.f32.mrf.mxu0
  %v2696 = vadd.f32 %v798, %v2695
  %v2697 = vpop.f32.mrf.mxu0
  %2698 = vmatprep.mubr.f32.mxu0 0.0
  %2699 = vmatmul.mubr.f32.gmra.mxu0 %v1441
  %v2700 = vpop.f32.mrf.mxu0
  %v2701 = vadd.f32 %v798, %v2700
  %v2702 = vpop.f32.mrf.mxu0
  %2703 = vmatprep.mubr.f32.mxu0 0.0
  %2704 = vmatmul.mubr.f32.gmra.mxu0 %v1444
  %v2705 = vpop.f32.mrf.mxu0
  %v2706 = vadd.f32 %v798, %v2705
  %v2707 = vpop.f32.mrf.mxu0
  %2708 = vmatprep.mubr.f32.mxu0 0.0
  %2709 = vmatmul.mubr.f32.gmra.mxu0 %v1447
  %v2710 = vpop.f32.mrf.mxu0
  %v2711 = vadd.f32 %v798, %v2710
  %v2712 = vpop.f32.mrf.mxu0
  %2713 = vmatprep.mubr.f32.mxu0 0.0
  %2714 = vmatmul.mubr.f32.gmra.mxu0 %v1450
  %v2715 = vpop.f32.mrf.mxu0
  %v2716 = vadd.f32 %v798, %v2715
  %v2717 = vpop.f32.mrf.mxu0
  %2718 = vmatprep.mubr.f32.mxu0 0.0
  %2719 = vmatmul.mubr.f32.gmra.mxu0 %v1453
  %v2720 = vpop.f32.mrf.mxu0
  %v2721 = vadd.f32 %v798, %v2720
  %v2722 = vpop.f32.mrf.mxu0
  %2723 = vmatprep.mubr.f32.mxu0 0.0
  %2724 = vmatmul.mubr.f32.gmra.mxu0 %v1456
  %v2725 = vpop.f32.mrf.mxu0
  %v2726 = vadd.f32 %v798, %v2725
  %v2727 = vpop.f32.mrf.mxu0
  %2728 = vmatprep.mubr.f32.mxu0 0.0
  %2729 = vmatmul.mubr.f32.gmra.mxu0 %v1459
  %v2730 = vpop.f32.mrf.mxu0
  %v2731 = vadd.f32 %v798, %v2730
  %v2732 = vpop.f32.mrf.mxu0
  %2733 = vmatprep.mubr.f32.mxu0 0.0
  %2734 = vmatmul.mubr.f32.gmra.mxu0 %v1462
  %v2735 = vpop.f32.mrf.mxu0
  %v2736 = vadd.f32 %v798, %v2735
  %v2737 = vpop.f32.mrf.mxu0
  %2738 = vmatprep.mubr.f32.mxu0 0.0
  %2739 = vmatmul.mubr.f32.gmra.mxu0 %v1465
  %v2740 = vpop.f32.mrf.mxu0
  %v2741 = vadd.f32 %v798, %v2740
  %v2742 = vpop.f32.mrf.mxu0
  %2743 = vmatprep.mubr.f32.mxu0 0.0
  %2744 = vmatmul.mubr.f32.gmra.mxu0 %v1468
  %v2745 = vpop.f32.mrf.mxu0
  %v2746 = vadd.f32 %v798, %v2745
  %v2747 = vpop.f32.mrf.mxu0
  %2748 = vmatprep.mubr.f32.mxu0 0.0
  %2749 = vmatmul.mubr.f32.gmra.mxu0 %v1471
  %v2750 = vpop.f32.mrf.mxu0
  %v2751 = vadd.f32 %v798, %v2750
  %v2752 = vpop.f32.mrf.mxu0
  %2753 = vmatprep.mubr.f32.mxu0 0.0
  %2754 = vmatmul.mubr.f32.gmra.mxu0 %v1474
  %v2755 = vpop.f32.mrf.mxu0
  %v2756 = vadd.f32 %v798, %v2755
  %v2757 = vpop.f32.mrf.mxu0
  %2758 = vmatprep.mubr.f32.mxu0 0.0
  %2759 = vmatmul.mubr.f32.gmra.mxu0 %v1477
  %v2760 = vpop.f32.mrf.mxu0
  %v2761 = vadd.f32 %v798, %v2760
  %v2762 = vpop.f32.mrf.mxu0
  %2763 = vmatprep.mubr.f32.mxu0 0.0
  %2764 = vmatmul.mubr.f32.gmra.mxu0 %v1480
  %v2765 = vpop.f32.mrf.mxu0
  %v2766 = vadd.f32 %v798, %v2765
  %v2767 = vpop.f32.mrf.mxu0
  %2768 = vmatprep.mubr.f32.mxu0 0.0
  %2769 = vmatmul.mubr.f32.gmra.mxu0 %v1483
  %v2770 = vpop.f32.mrf.mxu0
  %v2771 = vadd.f32 %v798, %v2770
  %v2772 = vpop.f32.mrf.mxu0
  %2773 = vmatprep.mubr.f32.mxu0 0.0
  %2774 = vmatmul.mubr.f32.gmra.mxu0 %v1486
  %v2775 = vpop.f32.mrf.mxu0
  %v2776 = vadd.f32 %v798, %v2775
  %v2777 = vpop.f32.mrf.mxu0
  %2778 = vmatprep.mubr.f32.mxu0 0.0
  %2779 = vmatmul.mubr.f32.gmra.mxu0 %v1489
  %v2780 = vpop.f32.mrf.mxu0
  %v2781 = vadd.f32 %v798, %v2780
  %v2782 = vpop.f32.mrf.mxu0
  %2783 = vmatprep.mubr.f32.mxu0 0.0
  %2784 = vmatmul.mubr.f32.gmra.mxu0 %v1492
  %v2785 = vpop.f32.mrf.mxu0
  %v2786 = vadd.f32 %v798, %v2785
  %v2787 = vpop.f32.mrf.mxu0
  %2788 = vmatprep.mubr.f32.mxu0 0.0
  %2789 = vmatmul.mubr.f32.gmra.mxu0 %v1495
  %v2790 = vpop.f32.mrf.mxu0
  %v2791 = vadd.f32 %v798, %v2790
  %v2792 = vpop.f32.mrf.mxu0
  %2793 = vmatprep.mubr.f32.mxu0 0.0
  %2794 = vmatmul.mubr.f32.gmra.mxu0 %v1498
  %v2795 = vpop.f32.mrf.mxu0
  %v2796 = vadd.f32 %v798, %v2795
  %v2797 = vpop.f32.mrf.mxu0
  %2798 = vmatprep.mubr.f32.mxu0 0.0
  %2799 = vmatmul.mubr.f32.gmra.mxu0 %v1501
  %v2800 = vpop.f32.mrf.mxu0
  %v2801 = vadd.f32 %v798, %v2800
  %v2802 = vpop.f32.mrf.mxu0
  %2803 = vmatprep.mubr.f32.mxu0 0.0
  %2804 = vmatmul.mubr.f32.gmra.mxu0 %v1504
  %v2805 = vpop.f32.mrf.mxu0
  %v2806 = vadd.f32 %v798, %v2805
  %v2807 = vpop.f32.mrf.mxu0
  %2808 = vmatprep.mubr.f32.mxu0 0.0
  %2809 = vmatmul.mubr.f32.gmra.mxu0 %v1507
  %v2810 = vpop.f32.mrf.mxu0
  %v2811 = vadd.f32 %v798, %v2810
  %v2812 = vpop.f32.mrf.mxu0
  %2813 = vmatprep.mubr.f32.mxu0 0.0
  %2814 = vmatmul.mubr.f32.gmra.mxu0 %v1510
  %v2815 = vpop.f32.mrf.mxu0
  %v2816 = vadd.f32 %v798, %v2815
  %v2817 = vpop.f32.mrf.mxu0
  %2818 = vmatprep.mubr.f32.mxu0 0.0
  %2819 = vmatmul.mubr.f32.gmra.mxu0 %v1513
  %v2820 = vpop.f32.mrf.mxu0
  %v2821 = vadd.f32 %v798, %v2820
  %v2822 = vpop.f32.mrf.mxu0
  %2823 = vmatprep.mubr.f32.mxu0 0.0
  %2824 = vmatmul.mubr.f32.gmra.mxu0 %v1516
  %v2825 = vpop.f32.mrf.mxu0
  %v2826 = vadd.f32 %v798, %v2825
  %v2827 = vpop.f32.mrf.mxu0
  %2828 = vmatprep.mubr.f32.mxu0 0.0
  %2829 = vmatmul.mubr.f32.gmra.mxu0 %v1519
  %v2830 = vpop.f32.mrf.mxu0
  %v2831 = vadd.f32 %v798, %v2830
  %v2832 = vpop.f32.mrf.mxu0
  %2833 = vmatprep.mubr.f32.mxu0 0.0
  %2834 = vmatmul.mubr.f32.gmra.mxu0 %v1522
  %v2835 = vpop.f32.mrf.mxu0
  %v2836 = vadd.f32 %v798, %v2835
  %v2837 = vpop.f32.mrf.mxu0
  %2838 = vmatprep.mubr.f32.mxu0 0.0
  %2839 = vmatmul.mubr.f32.gmra.mxu0 %v1525
  %v2840 = vpop.f32.mrf.mxu0
  %v2841 = vadd.f32 %v798, %v2840
  %v2842 = vpop.f32.mrf.mxu0
  %2843 = vmatprep.mubr.f32.mxu0 0.0
  %2844 = vmatmul.mubr.f32.gmra.mxu0 %v1528
  %v2845 = vpop.f32.mrf.mxu0
  %v2846 = vadd.f32 %v798, %v2845
  %v2847 = vpop.f32.mrf.mxu0
  %2848 = vmatprep.mubr.f32.mxu0 0.0
  %2849 = vmatmul.mubr.f32.gmra.mxu0 %v1531
  %v2850 = vpop.f32.mrf.mxu0
  %v2851 = vadd.f32 %v798, %v2850
  %v2852 = vpop.f32.mrf.mxu0
  %2853 = vmatprep.mubr.f32.mxu0 0.0
  %2854 = vmatmul.mubr.f32.gmra.mxu0 %v1534
  %v2855 = vpop.f32.mrf.mxu0
  %v2856 = vadd.f32 %v798, %v2855
  %v2857 = vpop.f32.mrf.mxu0
  %2858 = vmatprep.mubr.f32.mxu0 0.0
  %2859 = vmatmul.mubr.f32.gmra.mxu0 %v1537
  %v2860 = vpop.f32.mrf.mxu0
  %v2861 = vadd.f32 %v798, %v2860
  %v2862 = vpop.f32.mrf.mxu0
  %2863 = vmatprep.mubr.f32.mxu0 0.0
  %2864 = vmatmul.mubr.f32.gmra.mxu0 %v1540
  %v2865 = vpop.f32.mrf.mxu0
  %v2866 = vadd.f32 %v798, %v2865
  %v2867 = vpop.f32.mrf.mxu0
  %2868 = vmatprep.mubr.f32.mxu0 0.0
  %2869 = vmatmul.mubr.f32.gmra.mxu0 %v1543
  %v2870 = vpop.f32.mrf.mxu0
  %v2871 = vadd.f32 %v798, %v2870
  %v2872 = vpop.f32.mrf.mxu0
  %2873 = vmatprep.mubr.f32.mxu0 0.0
  %2874 = vmatmul.mubr.f32.gmra.mxu0 %v1546
  %v2875 = vpop.f32.mrf.mxu0
  %v2876 = vadd.f32 %v798, %v2875
  %v2877 = vpop.f32.mrf.mxu0
  %2878 = vmatprep.mubr.f32.mxu0 0.0
  %2879 = vmatmul.mubr.f32.gmra.mxu0 %v1549
  %v2880 = vpop.f32.mrf.mxu0
  %v2881 = vadd.f32 %v798, %v2880
  %v2882 = vpop.f32.mrf.mxu0
  %2883 = vmatprep.mubr.f32.mxu0 0.0
  %2884 = vmatmul.mubr.f32.gmra.mxu0 %v1552
  %v2885 = vpop.f32.mrf.mxu0
  %v2886 = vadd.f32 %v798, %v2885
  %v2887 = vpop.f32.mrf.mxu0
  %2888 = vmatprep.mubr.f32.mxu0 0.0
  %2889 = vmatmul.mubr.f32.gmra.mxu0 %v1555
  %v2890 = vpop.f32.mrf.mxu0
  %v2891 = vadd.f32 %v798, %v2890
  %v2892 = vpop.f32.mrf.mxu0
  %2893 = vmatprep.mubr.f32.mxu0 0.0
  %2894 = vmatmul.mubr.f32.gmra.mxu0 %v1558
  %v2895 = vpop.f32.mrf.mxu0
  %v2896 = vadd.f32 %v798, %v2895
  %v2897 = vpop.f32.mrf.mxu0
  %2898 = vmatprep.mubr.f32.mxu0 0.0
  %2899 = vmatmul.mubr.f32.gmra.mxu0 %v1561
  %v2900 = vpop.f32.mrf.mxu0
  %v2901 = vadd.f32 %v798, %v2900
  %v2902 = vpop.f32.mrf.mxu0
  %2903 = vmatprep.mubr.f32.mxu0 0.0
  %2904 = vmatmul.mubr.f32.gmra.mxu0 %v1564
  %v2905 = vpop.f32.mrf.mxu0
  %v2906 = vadd.f32 %v798, %v2905
  %v2907 = vpop.f32.mrf.mxu0
  %2908 = vmatprep.mubr.f32.mxu0 0.0
  %2909 = vmatmul.mubr.f32.gmra.mxu0 %v1567
  %v2910 = vpop.f32.mrf.mxu0
  %v2911 = vadd.f32 %v798, %v2910
  %v2912 = vpop.f32.mrf.mxu0
  %2913 = vdwg.mxu0
  %v2914 = vmax.f32 %v1636, 0.0
  %v2915 = vmax.f32 %v1641, 0.0
  %v2916 = vmax.f32 %v1646, 0.0
  %v2917 = vmax.f32 %v1651, 0.0
  %v2918 = vmax.f32 %v1656, 0.0
  %v2919 = vmax.f32 %v1661, 0.0
  %v2920 = vmax.f32 %v1666, 0.0
  %v2921 = vmax.f32 %v1671, 0.0
  %v2922 = vmax.f32 %v1676, 0.0
  %v2923 = vmax.f32 %v1681, 0.0
  %v2924 = vmax.f32 %v1686, 0.0
  %v2925 = vmax.f32 %v1691, 0.0
  %v2926 = vmax.f32 %v1696, 0.0
  %v2927 = vmax.f32 %v1701, 0.0
  %v2928 = vmax.f32 %v1706, 0.0
  %v2929 = vmax.f32 %v1711, 0.0
  %v2930 = vmax.f32 %v1716, 0.0
  %v2931 = vmax.f32 %v1721, 0.0
  %v2932 = vmax.f32 %v1726, 0.0
  %v2933 = vmax.f32 %v1731, 0.0
  %v2934 = vmax.f32 %v1736, 0.0
  %v2935 = vmax.f32 %v1741, 0.0
  %v2936 = vmax.f32 %v1746, 0.0
  %v2937 = vmax.f32 %v1751, 0.0
  %v2938 = vmax.f32 %v1756, 0.0
  %v2939 = vmax.f32 %v1761, 0.0
  %v2940 = vmax.f32 %v1766, 0.0
  %v2941 = vmax.f32 %v1771, 0.0
  %v2942 = vmax.f32 %v1776, 0.0
  %v2943 = vmax.f32 %v1781, 0.0
  %v2944 = vmax.f32 %v1786, 0.0
  %v2945 = vmax.f32 %v1791, 0.0
  %v2946 = vmax.f32 %v1796, 0.0
  %v2947 = vmax.f32 %v1801, 0.0
  %v2948 = vmax.f32 %v1806, 0.0
  %v2949 = vmax.f32 %v1811, 0.0
  %v2950 = vmax.f32 %v1816, 0.0
  %v2951 = vmax.f32 %v1821, 0.0
  %v2952 = vmax.f32 %v1826, 0.0
  %v2953 = vmax.f32 %v1831, 0.0
  %v2954 = vmax.f32 %v1836, 0.0
  %v2955 = vmax.f32 %v1841, 0.0
  %v2956 = vmax.f32 %v1846, 0.0
  %v2957 = vmax.f32 %v1851, 0.0
  %v2958 = vmax.f32 %v1856, 0.0
  %v2959 = vmax.f32 %v1861, 0.0
  %v2960 = vmax.f32 %v1866, 0.0
  %v2961 = vmax.f32 %v1871, 0.0
  %v2962 = vmax.f32 %v1876, 0.0
  %v2963 = vmax.f32 %v1881, 0.0
  %v2964 = vmax.f32 %v1886, 0.0
  %v2965 = vmax.f32 %v1891, 0.0
  %v2966 = vmax.f32 %v1896, 0.0
  %v2967 = vmax.f32 %v1901, 0.0
  %v2968 = vmax.f32 %v1906, 0.0
  %v2969 = vmax.f32 %v1911, 0.0
  %v2970 = vmax.f32 %v1916, 0.0
  %v2971 = vmax.f32 %v1921, 0.0
  %v2972 = vmax.f32 %v1926, 0.0
  %v2973 = vmax.f32 %v1931, 0.0
  %v2974 = vmax.f32 %v1936, 0.0
  %v2975 = vmax.f32 %v1941, 0.0
  %v2976 = vmax.f32 %v1946, 0.0
  %v2977 = vmax.f32 %v1951, 0.0
  %v2978 = vmax.f32 %v1956, 0.0
  %v2979 = vmax.f32 %v1961, 0.0
  %v2980 = vmax.f32 %v1966, 0.0
  %v2981 = vmax.f32 %v1971, 0.0
  %v2982 = vmax.f32 %v1976, 0.0
  %v2983 = vmax.f32 %v1981, 0.0
  %v2984 = vmax.f32 %v1986, 0.0
  %v2985 = vmax.f32 %v1991, 0.0
  %v2986 = vmax.f32 %v1996, 0.0
  %v2987 = vmax.f32 %v2001, 0.0
  %v2988 = vmax.f32 %v2006, 0.0
  %v2989 = vmax.f32 %v2011, 0.0
  %v2990 = vmax.f32 %v2016, 0.0
  %v2991 = vmax.f32 %v2021, 0.0
  %v2992 = vmax.f32 %v2026, 0.0
  %v2993 = vmax.f32 %v2031, 0.0
  %v2994 = vmax.f32 %v2036, 0.0
  %v2995 = vmax.f32 %v2041, 0.0
  %v2996 = vmax.f32 %v2046, 0.0
  %v2997 = vmax.f32 %v2051, 0.0
  %v2998 = vmax.f32 %v2056, 0.0
  %v2999 = vmax.f32 %v2061, 0.0
  %v3000 = vmax.f32 %v2066, 0.0
  %v3001 = vmax.f32 %v2071, 0.0
  %v3002 = vmax.f32 %v2076, 0.0
  %v3003 = vmax.f32 %v2081, 0.0
  %v3004 = vmax.f32 %v2086, 0.0
  %v3005 = vmax.f32 %v2091, 0.0
  %v3006 = vmax.f32 %v2096, 0.0
  %v3007 = vmax.f32 %v2101, 0.0
  %v3008 = vmax.f32 %v2106, 0.0
  %v3009 = vmax.f32 %v2111, 0.0
  %v3010 = vmax.f32 %v2116, 0.0
  %v3011 = vmax.f32 %v2121, 0.0
  %v3012 = vmax.f32 %v2126, 0.0
  %v3013 = vmax.f32 %v2131, 0.0
  %v3014 = vmax.f32 %v2136, 0.0
  %v3015 = vmax.f32 %v2141, 0.0
  %v3016 = vmax.f32 %v2146, 0.0
  %v3017 = vmax.f32 %v2151, 0.0
  %v3018 = vmax.f32 %v2156, 0.0
  %v3019 = vmax.f32 %v2161, 0.0
  %v3020 = vmax.f32 %v2166, 0.0
  %v3021 = vmax.f32 %v2171, 0.0
  %v3022 = vmax.f32 %v2176, 0.0
  %v3023 = vmax.f32 %v2181, 0.0
  %v3024 = vmax.f32 %v2186, 0.0
  %v3025 = vmax.f32 %v2191, 0.0
  %v3026 = vmax.f32 %v2196, 0.0
  %v3027 = vmax.f32 %v2201, 0.0
  %v3028 = vmax.f32 %v2206, 0.0
  %v3029 = vmax.f32 %v2211, 0.0
  %v3030 = vmax.f32 %v2216, 0.0
  %v3031 = vmax.f32 %v2221, 0.0
  %v3032 = vmax.f32 %v2226, 0.0
  %v3033 = vmax.f32 %v2231, 0.0
  %v3034 = vmax.f32 %v2236, 0.0
  %v3035 = vmax.f32 %v2241, 0.0
  %v3036 = vmax.f32 %v2246, 0.0
  %v3037 = vmax.f32 %v2251, 0.0
  %v3038 = vmax.f32 %v2256, 0.0
  %v3039 = vmax.f32 %v2261, 0.0
  %v3040 = vmax.f32 %v2266, 0.0
  %v3041 = vmax.f32 %v2271, 0.0
  %v3042 = vmax.f32 %v2276, 0.0
  %v3043 = vmax.f32 %v2281, 0.0
  %v3044 = vmax.f32 %v2286, 0.0
  %v3045 = vmax.f32 %v2291, 0.0
  %v3046 = vmax.f32 %v2296, 0.0
  %v3047 = vmax.f32 %v2301, 0.0
  %v3048 = vmax.f32 %v2306, 0.0
  %v3049 = vmax.f32 %v2311, 0.0
  %v3050 = vmax.f32 %v2316, 0.0
  %v3051 = vmax.f32 %v2321, 0.0
  %v3052 = vmax.f32 %v2326, 0.0
  %v3053 = vmax.f32 %v2331, 0.0
  %v3054 = vmax.f32 %v2336, 0.0
  %v3055 = vmax.f32 %v2341, 0.0
  %v3056 = vmax.f32 %v2346, 0.0
  %v3057 = vmax.f32 %v2351, 0.0
  %v3058 = vmax.f32 %v2356, 0.0
  %v3059 = vmax.f32 %v2361, 0.0
  %v3060 = vmax.f32 %v2366, 0.0
  %v3061 = vmax.f32 %v2371, 0.0
  %v3062 = vmax.f32 %v2376, 0.0
  %v3063 = vmax.f32 %v2381, 0.0
  %v3064 = vmax.f32 %v2386, 0.0
  %v3065 = vmax.f32 %v2391, 0.0
  %v3066 = vmax.f32 %v2396, 0.0
  %v3067 = vmax.f32 %v2401, 0.0
  %v3068 = vmax.f32 %v2406, 0.0
  %v3069 = vmax.f32 %v2411, 0.0
  %v3070 = vmax.f32 %v2416, 0.0
  %v3071 = vmax.f32 %v2421, 0.0
  %v3072 = vmax.f32 %v2426, 0.0
  %v3073 = vmax.f32 %v2431, 0.0
  %v3074 = vmax.f32 %v2436, 0.0
  %v3075 = vmax.f32 %v2441, 0.0
  %v3076 = vmax.f32 %v2446, 0.0
  %v3077 = vmax.f32 %v2451, 0.0
  %v3078 = vmax.f32 %v2456, 0.0
  %v3079 = vmax.f32 %v2461, 0.0
  %v3080 = vmax.f32 %v2466, 0.0
  %v3081 = vmax.f32 %v2471, 0.0
  %v3082 = vmax.f32 %v2476, 0.0
  %v3083 = vmax.f32 %v2481, 0.0
  %v3084 = vmax.f32 %v2486, 0.0
  %v3085 = vmax.f32 %v2491, 0.0
  %v3086 = vmax.f32 %v2496, 0.0
  %v3087 = vmax.f32 %v2501, 0.0
  %v3088 = vmax.f32 %v2506, 0.0
  %v3089 = vmax.f32 %v2511, 0.0
  %v3090 = vmax.f32 %v2516, 0.0
  %v3091 = vmax.f32 %v2521, 0.0
  %v3092 = vmax.f32 %v2526, 0.0
  %v3093 = vmax.f32 %v2531, 0.0
  %v3094 = vmax.f32 %v2536, 0.0
  %v3095 = vmax.f32 %v2541, 0.0
  %v3096 = vmax.f32 %v2546, 0.0
  %v3097 = vmax.f32 %v2551, 0.0
  %v3098 = vmax.f32 %v2556, 0.0
  %v3099 = vmax.f32 %v2561, 0.0
  %v3100 = vmax.f32 %v2566, 0.0
  %v3101 = vmax.f32 %v2571, 0.0
  %v3102 = vmax.f32 %v2576, 0.0
  %v3103 = vmax.f32 %v2581, 0.0
  %v3104 = vmax.f32 %v2586, 0.0
  %v3105 = vmax.f32 %v2591, 0.0
  %v3106 = vmax.f32 %v2596, 0.0
  %v3107 = vmax.f32 %v2601, 0.0
  %v3108 = vmax.f32 %v2606, 0.0
  %v3109 = vmax.f32 %v2611, 0.0
  %v3110 = vmax.f32 %v2616, 0.0
  %v3111 = vmax.f32 %v2621, 0.0
  %v3112 = vmax.f32 %v2626, 0.0
  %v3113 = vmax.f32 %v2631, 0.0
  %v3114 = vmax.f32 %v2636, 0.0
  %v3115 = vmax.f32 %v2641, 0.0
  %v3116 = vmax.f32 %v2646, 0.0
  %v3117 = vmax.f32 %v2651, 0.0
  %v3118 = vmax.f32 %v2656, 0.0
  %v3119 = vmax.f32 %v2661, 0.0
  %v3120 = vmax.f32 %v2666, 0.0
  %v3121 = vmax.f32 %v2671, 0.0
  %v3122 = vmax.f32 %v2676, 0.0
  %v3123 = vmax.f32 %v2681, 0.0
  %v3124 = vmax.f32 %v2686, 0.0
  %v3125 = vmax.f32 %v2691, 0.0
  %v3126 = vmax.f32 %v2696, 0.0
  %v3127 = vmax.f32 %v2701, 0.0
  %v3128 = vmax.f32 %v2706, 0.0
  %v3129 = vmax.f32 %v2711, 0.0
  %v3130 = vmax.f32 %v2716, 0.0
  %v3131 = vmax.f32 %v2721, 0.0
  %v3132 = vmax.f32 %v2726, 0.0
  %v3133 = vmax.f32 %v2731, 0.0
  %v3134 = vmax.f32 %v2736, 0.0
  %v3135 = vmax.f32 %v2741, 0.0
  %v3136 = vmax.f32 %v2746, 0.0
  %v3137 = vmax.f32 %v2751, 0.0
  %v3138 = vmax.f32 %v2756, 0.0
  %v3139 = vmax.f32 %v2761, 0.0
  %v3140 = vmax.f32 %v2766, 0.0
  %v3141 = vmax.f32 %v2771, 0.0
  %v3142 = vmax.f32 %v2776, 0.0
  %v3143 = vmax.f32 %v2781, 0.0
  %v3144 = vmax.f32 %v2786, 0.0
  %v3145 = vmax.f32 %v2791, 0.0
  %v3146 = vmax.f32 %v2796, 0.0
  %v3147 = vmax.f32 %v2801, 0.0
  %v3148 = vmax.f32 %v2806, 0.0
  %v3149 = vmax.f32 %v2811, 0.0
  %v3150 = vmax.f32 %v2816, 0.0
  %v3151 = vmax.f32 %v2821, 0.0
  %v3152 = vmax.f32 %v2826, 0.0
  %v3153 = vmax.f32 %v2831, 0.0
  %v3154 = vmax.f32 %v2836, 0.0
  %v3155 = vmax.f32 %v2841, 0.0
  %v3156 = vmax.f32 %v2846, 0.0
  %v3157 = vmax.f32 %v2851, 0.0
  %v3158 = vmax.f32 %v2856, 0.0
  %v3159 = vmax.f32 %v2861, 0.0
  %v3160 = vmax.f32 %v2866, 0.0
  %v3161 = vmax.f32 %v2871, 0.0
  %v3162 = vmax.f32 %v2876, 0.0
  %v3163 = vmax.f32 %v2881, 0.0
  %v3164 = vmax.f32 %v2886, 0.0
  %v3165 = vmax.f32 %v2891, 0.0
  %v3166 = vmax.f32 %v2896, 0.0
  %v3167 = vmax.f32 %v2901, 0.0
  %v3168 = vmax.f32 %v2906, 0.0
  %v3169 = vmax.f32 %v2911, 0.0
  %v3170 = vld [vmem:[%s4] sm:$0xff]
  %v3171 = vld [vmem:[%s4 + $0x8] sm:$0xff]
  %v3172 = vld [vmem:[%s4 + $0x10] sm:$0xff]
  %v3173 = vld [vmem:[%s4 + $0x18] sm:$0xff]
  %v3174 = vld [vmem:[%s4 + $0x20] sm:$0xff]
  %v3175 = vld [vmem:[%s4 + $0x28] sm:$0xff]
  %v3176 = vld [vmem:[%s4 + $0x30] sm:$0xff]
  %v3177 = vld [vmem:[%s4 + $0x38] sm:$0xff]
  %v3178 = vld [vmem:[%s4 + $0x40] sm:$0xff]
  %v3179 = vld [vmem:[%s4 + $0x48] sm:$0xff]
  %v3180 = vld [vmem:[%s4 + $0x50] sm:$0xff]
  %v3181 = vld [vmem:[%s4 + $0x58] sm:$0xff]
  %v3182 = vld [vmem:[%s4 + $0x60] sm:$0xff]
  %v3183 = vld [vmem:[%s4 + $0x68] sm:$0xff]
  %v3184 = vld [vmem:[%s4 + $0x70] sm:$0xff]
  %v3185 = vld [vmem:[%s4 + $0x78] sm:$0xff]
  %v3186 = vld [vmem:[%s5] sm:$0x1]
  %v3188 = vlaneseq
  %v3189 = vshrl.u32 %v3188, 7
  %v3190 = vsub.s32 0, %v3189
  %v3191 = vrot.slane %v3186, %v3190
  %3193 = vmatprep.subr.mxu0 0.0
  %3194 = vmatpush1.msra.mxu0 %v3185
  %3195 = vmatprep.subr.mxu0 0.0
  %3196 = vmatpush1.msra.mxu0 %v3184
  %3197 = vmatprep.subr.mxu0 0.0
  %3198 = vmatpush1.msra.mxu0 %v3183
  %3199 = vmatprep.subr.mxu0 0.0
  %3200 = vmatpush1.msra.mxu0 %v3182
  %3201 = vmatprep.subr.mxu0 0.0
  %3202 = vmatpush1.msra.mxu0 %v3181
  %3203 = vmatprep.subr.mxu0 0.0
  %3204 = vmatpush1.msra.mxu0 %v3180
  %3205 = vmatprep.subr.mxu0 0.0
  %3206 = vmatpush1.msra.mxu0 %v3179
  %3207 = vmatprep.subr.mxu0 0.0
  %3208 = vmatpush1.msra.mxu0 %v3178
  %3209 = vmatprep.subr.mxu0 0.0
  %3210 = vmatpush1.msra.mxu0 %v3177
  %3211 = vmatprep.subr.mxu0 0.0
  %3212 = vmatpush1.msra.mxu0 %v3176
  %3213 = vmatprep.subr.mxu0 0.0
  %3214 = vmatpush1.msra.mxu0 %v3175
  %3215 = vmatprep.subr.mxu0 0.0
  %3216 = vmatpush1.msra.mxu0 %v3174
  %3217 = vmatprep.subr.mxu0 0.0
  %3218 = vmatpush1.msra.mxu0 %v3173
  %3219 = vmatprep.subr.mxu0 0.0
  %3220 = vmatpush1.msra.mxu0 %v3172
  %3221 = vmatprep.subr.mxu0 0.0
  %3222 = vmatpush1.msra.mxu0 %v3171
  %3223 = vmatprep.subr.mxu0 0.0
  %3224 = vmatpush1.msra.mxu0 %v3170
  %3225 = vmatprep.subr.mxu0 0.0
  %3226 = vmatpush2.msra.mxu0 0.0
  %3227 = vmatprep.subr.mxu0 0.0
  %3228 = vmatpush2.msra.mxu0 0.0
  %3229 = vmatprep.subr.mxu0 0.0
  %3230 = vmatpush2.msra.mxu0 0.0
  %3231 = vmatprep.subr.mxu0 0.0
  %3232 = vmatpush2.msra.mxu0 0.0
  %3233 = vmatprep.subr.mxu0 0.0
  %3234 = vmatpush2.msra.mxu0 0.0
  %3235 = vmatprep.subr.mxu0 0.0
  %3236 = vmatpush2.msra.mxu0 0.0
  %3237 = vmatprep.subr.mxu0 0.0
  %3238 = vmatpush2.msra.mxu0 0.0
  %3239 = vmatprep.subr.mxu0 0.0
  %3240 = vmatpush2.msra.mxu0 0.0
  %3241 = vmatprep.subr.mxu0 0.0
  %3242 = vmatpush2.msra.mxu0 0.0
  %3243 = vmatprep.subr.mxu0 0.0
  %3244 = vmatpush2.msra.mxu0 0.0
  %3245 = vmatprep.subr.mxu0 0.0
  %3246 = vmatpush2.msra.mxu0 0.0
  %3247 = vmatprep.subr.mxu0 0.0
  %3248 = vmatpush2.msra.mxu0 0.0
  %3249 = vmatprep.subr.mxu0 0.0
  %3250 = vmatpush2.msra.mxu0 0.0
  %3251 = vmatprep.subr.mxu0 0.0
  %3252 = vmatpush2.msra.mxu0 0.0
  %3253 = vmatprep.subr.mxu0 0.0
  %3254 = vmatpush2.msra.mxu0 0.0
  %3255 = vmatprep.subr.mxu0 0.0
  %3256 = vmatpush2.msra.mxu0 0.0
  %3257 = vmatprep.mubr.f32.mxu0 0.0
  %3258 = vmatmul.mubr.f32.gmra.mxu0 %v2914
  %v3259 = vpop.f32.mrf.mxu0
  %v3260 = vadd.f32 %v3191, %v3259
  %v3261 = vpop.f32.mrf.mxu0
  %3262 = vmatprep.mubr.f32.mxu0 0.0
  %3263 = vmatmul.mubr.f32.gmra.mxu0 %v2915
  %v3264 = vpop.f32.mrf.mxu0
  %v3265 = vadd.f32 %v3191, %v3264
  %v3266 = vpop.f32.mrf.mxu0
  %3267 = vmatprep.mubr.f32.mxu0 0.0
  %3268 = vmatmul.mubr.f32.gmra.mxu0 %v2916
  %v3269 = vpop.f32.mrf.mxu0
  %v3270 = vadd.f32 %v3191, %v3269
  %v3271 = vpop.f32.mrf.mxu0
  %3272 = vmatprep.mubr.f32.mxu0 0.0
  %3273 = vmatmul.mubr.f32.gmra.mxu0 %v2917
  %v3274 = vpop.f32.mrf.mxu0
  %v3275 = vadd.f32 %v3191, %v3274
  %v3276 = vpop.f32.mrf.mxu0
  %3277 = vmatprep.mubr.f32.mxu0 0.0
  %3278 = vmatmul.mubr.f32.gmra.mxu0 %v2918
  %v3279 = vpop.f32.mrf.mxu0
  %v3280 = vadd.f32 %v3191, %v3279
  %v3281 = vpop.f32.mrf.mxu0
  %3282 = vmatprep.mubr.f32.mxu0 0.0
  %3283 = vmatmul.mubr.f32.gmra.mxu0 %v2919
  %v3284 = vpop.f32.mrf.mxu0
  %v3285 = vadd.f32 %v3191, %v3284
  %v3286 = vpop.f32.mrf.mxu0
  %3287 = vmatprep.mubr.f32.mxu0 0.0
  %3288 = vmatmul.mubr.f32.gmra.mxu0 %v2920
  %v3289 = vpop.f32.mrf.mxu0
  %v3290 = vadd.f32 %v3191, %v3289
  %v3291 = vpop.f32.mrf.mxu0
  %3292 = vmatprep.mubr.f32.mxu0 0.0
  %3293 = vmatmul.mubr.f32.gmra.mxu0 %v2921
  %v3294 = vpop.f32.mrf.mxu0
  %v3295 = vadd.f32 %v3191, %v3294
  %v3296 = vpop.f32.mrf.mxu0
  %3297 = vmatprep.mubr.f32.mxu0 0.0
  %3298 = vmatmul.mubr.f32.gmra.mxu0 %v2922
  %v3299 = vpop.f32.mrf.mxu0
  %v3300 = vadd.f32 %v3191, %v3299
  %v3301 = vpop.f32.mrf.mxu0
  %3302 = vmatprep.mubr.f32.mxu0 0.0
  %3303 = vmatmul.mubr.f32.gmra.mxu0 %v2923
  %v3304 = vpop.f32.mrf.mxu0
  %v3305 = vadd.f32 %v3191, %v3304
  %v3306 = vpop.f32.mrf.mxu0
  %3307 = vmatprep.mubr.f32.mxu0 0.0
  %3308 = vmatmul.mubr.f32.gmra.mxu0 %v2924
  %v3309 = vpop.f32.mrf.mxu0
  %v3310 = vadd.f32 %v3191, %v3309
  %v3311 = vpop.f32.mrf.mxu0
  %3312 = vmatprep.mubr.f32.mxu0 0.0
  %3313 = vmatmul.mubr.f32.gmra.mxu0 %v2925
  %v3314 = vpop.f32.mrf.mxu0
  %v3315 = vadd.f32 %v3191, %v3314
  %v3316 = vpop.f32.mrf.mxu0
  %3317 = vmatprep.mubr.f32.mxu0 0.0
  %3318 = vmatmul.mubr.f32.gmra.mxu0 %v2926
  %v3319 = vpop.f32.mrf.mxu0
  %v3320 = vadd.f32 %v3191, %v3319
  %v3321 = vpop.f32.mrf.mxu0
  %3322 = vmatprep.mubr.f32.mxu0 0.0
  %3323 = vmatmul.mubr.f32.gmra.mxu0 %v2927
  %v3324 = vpop.f32.mrf.mxu0
  %v3325 = vadd.f32 %v3191, %v3324
  %v3326 = vpop.f32.mrf.mxu0
  %3327 = vmatprep.mubr.f32.mxu0 0.0
  %3328 = vmatmul.mubr.f32.gmra.mxu0 %v2928
  %v3329 = vpop.f32.mrf.mxu0
  %v3330 = vadd.f32 %v3191, %v3329
  %v3331 = vpop.f32.mrf.mxu0
  %3332 = vmatprep.mubr.f32.mxu0 0.0
  %3333 = vmatmul.mubr.f32.gmra.mxu0 %v2929
  %v3334 = vpop.f32.mrf.mxu0
  %v3335 = vadd.f32 %v3191, %v3334
  %v3336 = vpop.f32.mrf.mxu0
  %3337 = vmatprep.mubr.f32.mxu0 0.0
  %3338 = vmatmul.mubr.f32.gmra.mxu0 %v2930
  %v3339 = vpop.f32.mrf.mxu0
  %v3340 = vadd.f32 %v3191, %v3339
  %v3341 = vpop.f32.mrf.mxu0
  %3342 = vmatprep.mubr.f32.mxu0 0.0
  %3343 = vmatmul.mubr.f32.gmra.mxu0 %v2931
  %v3344 = vpop.f32.mrf.mxu0
  %v3345 = vadd.f32 %v3191, %v3344
  %v3346 = vpop.f32.mrf.mxu0
  %3347 = vmatprep.mubr.f32.mxu0 0.0
  %3348 = vmatmul.mubr.f32.gmra.mxu0 %v2932
  %v3349 = vpop.f32.mrf.mxu0
  %v3350 = vadd.f32 %v3191, %v3349
  %v3351 = vpop.f32.mrf.mxu0
  %3352 = vmatprep.mubr.f32.mxu0 0.0
  %3353 = vmatmul.mubr.f32.gmra.mxu0 %v2933
  %v3354 = vpop.f32.mrf.mxu0
  %v3355 = vadd.f32 %v3191, %v3354
  %v3356 = vpop.f32.mrf.mxu0
  %3357 = vmatprep.mubr.f32.mxu0 0.0
  %3358 = vmatmul.mubr.f32.gmra.mxu0 %v2934
  %v3359 = vpop.f32.mrf.mxu0
  %v3360 = vadd.f32 %v3191, %v3359
  %v3361 = vpop.f32.mrf.mxu0
  %3362 = vmatprep.mubr.f32.mxu0 0.0
  %3363 = vmatmul.mubr.f32.gmra.mxu0 %v2935
  %v3364 = vpop.f32.mrf.mxu0
  %v3365 = vadd.f32 %v3191, %v3364
  %v3366 = vpop.f32.mrf.mxu0
  %3367 = vmatprep.mubr.f32.mxu0 0.0
  %3368 = vmatmul.mubr.f32.gmra.mxu0 %v2936
  %v3369 = vpop.f32.mrf.mxu0
  %v3370 = vadd.f32 %v3191, %v3369
  %v3371 = vpop.f32.mrf.mxu0
  %3372 = vmatprep.mubr.f32.mxu0 0.0
  %3373 = vmatmul.mubr.f32.gmra.mxu0 %v2937
  %v3374 = vpop.f32.mrf.mxu0
  %v3375 = vadd.f32 %v3191, %v3374
  %v3376 = vpop.f32.mrf.mxu0
  %3377 = vmatprep.mubr.f32.mxu0 0.0
  %3378 = vmatmul.mubr.f32.gmra.mxu0 %v2938
  %v3379 = vpop.f32.mrf.mxu0
  %v3380 = vadd.f32 %v3191, %v3379
  %v3381 = vpop.f32.mrf.mxu0
  %3382 = vmatprep.mubr.f32.mxu0 0.0
  %3383 = vmatmul.mubr.f32.gmra.mxu0 %v2939
  %v3384 = vpop.f32.mrf.mxu0
  %v3385 = vadd.f32 %v3191, %v3384
  %v3386 = vpop.f32.mrf.mxu0
  %3387 = vmatprep.mubr.f32.mxu0 0.0
  %3388 = vmatmul.mubr.f32.gmra.mxu0 %v2940
  %v3389 = vpop.f32.mrf.mxu0
  %v3390 = vadd.f32 %v3191, %v3389
  %v3391 = vpop.f32.mrf.mxu0
  %3392 = vmatprep.mubr.f32.mxu0 0.0
  %3393 = vmatmul.mubr.f32.gmra.mxu0 %v2941
  %v3394 = vpop.f32.mrf.mxu0
  %v3395 = vadd.f32 %v3191, %v3394
  %v3396 = vpop.f32.mrf.mxu0
  %3397 = vmatprep.mubr.f32.mxu0 0.0
  %3398 = vmatmul.mubr.f32.gmra.mxu0 %v2942
  %v3399 = vpop.f32.mrf.mxu0
  %v3400 = vadd.f32 %v3191, %v3399
  %v3401 = vpop.f32.mrf.mxu0
  %3402 = vmatprep.mubr.f32.mxu0 0.0
  %3403 = vmatmul.mubr.f32.gmra.mxu0 %v2943
  %v3404 = vpop.f32.mrf.mxu0
  %v3405 = vadd.f32 %v3191, %v3404
  %v3406 = vpop.f32.mrf.mxu0
  %3407 = vmatprep.mubr.f32.mxu0 0.0
  %3408 = vmatmul.mubr.f32.gmra.mxu0 %v2944
  %v3409 = vpop.f32.mrf.mxu0
  %v3410 = vadd.f32 %v3191, %v3409
  %v3411 = vpop.f32.mrf.mxu0
  %3412 = vmatprep.mubr.f32.mxu0 0.0
  %3413 = vmatmul.mubr.f32.gmra.mxu0 %v2945
  %v3414 = vpop.f32.mrf.mxu0
  %v3415 = vadd.f32 %v3191, %v3414
  %v3416 = vpop.f32.mrf.mxu0
  %3417 = vmatprep.mubr.f32.mxu0 0.0
  %3418 = vmatmul.mubr.f32.gmra.mxu0 %v2946
  %v3419 = vpop.f32.mrf.mxu0
  %v3420 = vadd.f32 %v3191, %v3419
  %v3421 = vpop.f32.mrf.mxu0
  %3422 = vmatprep.mubr.f32.mxu0 0.0
  %3423 = vmatmul.mubr.f32.gmra.mxu0 %v2947
  %v3424 = vpop.f32.mrf.mxu0
  %v3425 = vadd.f32 %v3191, %v3424
  %v3426 = vpop.f32.mrf.mxu0
  %3427 = vmatprep.mubr.f32.mxu0 0.0
  %3428 = vmatmul.mubr.f32.gmra.mxu0 %v2948
  %v3429 = vpop.f32.mrf.mxu0
  %v3430 = vadd.f32 %v3191, %v3429
  %v3431 = vpop.f32.mrf.mxu0
  %3432 = vmatprep.mubr.f32.mxu0 0.0
  %3433 = vmatmul.mubr.f32.gmra.mxu0 %v2949
  %v3434 = vpop.f32.mrf.mxu0
  %v3435 = vadd.f32 %v3191, %v3434
  %v3436 = vpop.f32.mrf.mxu0
  %3437 = vmatprep.mubr.f32.mxu0 0.0
  %3438 = vmatmul.mubr.f32.gmra.mxu0 %v2950
  %v3439 = vpop.f32.mrf.mxu0
  %v3440 = vadd.f32 %v3191, %v3439
  %v3441 = vpop.f32.mrf.mxu0
  %3442 = vmatprep.mubr.f32.mxu0 0.0
  %3443 = vmatmul.mubr.f32.gmra.mxu0 %v2951
  %v3444 = vpop.f32.mrf.mxu0
  %v3445 = vadd.f32 %v3191, %v3444
  %v3446 = vpop.f32.mrf.mxu0
  %3447 = vmatprep.mubr.f32.mxu0 0.0
  %3448 = vmatmul.mubr.f32.gmra.mxu0 %v2952
  %v3449 = vpop.f32.mrf.mxu0
  %v3450 = vadd.f32 %v3191, %v3449
  %v3451 = vpop.f32.mrf.mxu0
  %3452 = vmatprep.mubr.f32.mxu0 0.0
  %3453 = vmatmul.mubr.f32.gmra.mxu0 %v2953
  %v3454 = vpop.f32.mrf.mxu0
  %v3455 = vadd.f32 %v3191, %v3454
  %v3456 = vpop.f32.mrf.mxu0
  %3457 = vmatprep.mubr.f32.mxu0 0.0
  %3458 = vmatmul.mubr.f32.gmra.mxu0 %v2954
  %v3459 = vpop.f32.mrf.mxu0
  %v3460 = vadd.f32 %v3191, %v3459
  %v3461 = vpop.f32.mrf.mxu0
  %3462 = vmatprep.mubr.f32.mxu0 0.0
  %3463 = vmatmul.mubr.f32.gmra.mxu0 %v2955
  %v3464 = vpop.f32.mrf.mxu0
  %v3465 = vadd.f32 %v3191, %v3464
  %v3466 = vpop.f32.mrf.mxu0
  %3467 = vmatprep.mubr.f32.mxu0 0.0
  %3468 = vmatmul.mubr.f32.gmra.mxu0 %v2956
  %v3469 = vpop.f32.mrf.mxu0
  %v3470 = vadd.f32 %v3191, %v3469
  %v3471 = vpop.f32.mrf.mxu0
  %3472 = vmatprep.mubr.f32.mxu0 0.0
  %3473 = vmatmul.mubr.f32.gmra.mxu0 %v2957
  %v3474 = vpop.f32.mrf.mxu0
  %v3475 = vadd.f32 %v3191, %v3474
  %v3476 = vpop.f32.mrf.mxu0
  %3477 = vmatprep.mubr.f32.mxu0 0.0
  %3478 = vmatmul.mubr.f32.gmra.mxu0 %v2958
  %v3479 = vpop.f32.mrf.mxu0
  %v3480 = vadd.f32 %v3191, %v3479
  %v3481 = vpop.f32.mrf.mxu0
  %3482 = vmatprep.mubr.f32.mxu0 0.0
  %3483 = vmatmul.mubr.f32.gmra.mxu0 %v2959
  %v3484 = vpop.f32.mrf.mxu0
  %v3485 = vadd.f32 %v3191, %v3484
  %v3486 = vpop.f32.mrf.mxu0
  %3487 = vmatprep.mubr.f32.mxu0 0.0
  %3488 = vmatmul.mubr.f32.gmra.mxu0 %v2960
  %v3489 = vpop.f32.mrf.mxu0
  %v3490 = vadd.f32 %v3191, %v3489
  %v3491 = vpop.f32.mrf.mxu0
  %3492 = vmatprep.mubr.f32.mxu0 0.0
  %3493 = vmatmul.mubr.f32.gmra.mxu0 %v2961
  %v3494 = vpop.f32.mrf.mxu0
  %v3495 = vadd.f32 %v3191, %v3494
  %v3496 = vpop.f32.mrf.mxu0
  %3497 = vmatprep.mubr.f32.mxu0 0.0
  %3498 = vmatmul.mubr.f32.gmra.mxu0 %v2962
  %v3499 = vpop.f32.mrf.mxu0
  %v3500 = vadd.f32 %v3191, %v3499
  %v3501 = vpop.f32.mrf.mxu0
  %3502 = vmatprep.mubr.f32.mxu0 0.0
  %3503 = vmatmul.mubr.f32.gmra.mxu0 %v2963
  %v3504 = vpop.f32.mrf.mxu0
  %v3505 = vadd.f32 %v3191, %v3504
  %v3506 = vpop.f32.mrf.mxu0
  %3507 = vmatprep.mubr.f32.mxu0 0.0
  %3508 = vmatmul.mubr.f32.gmra.mxu0 %v2964
  %v3509 = vpop.f32.mrf.mxu0
  %v3510 = vadd.f32 %v3191, %v3509
  %v3511 = vpop.f32.mrf.mxu0
  %3512 = vmatprep.mubr.f32.mxu0 0.0
  %3513 = vmatmul.mubr.f32.gmra.mxu0 %v2965
  %v3514 = vpop.f32.mrf.mxu0
  %v3515 = vadd.f32 %v3191, %v3514
  %v3516 = vpop.f32.mrf.mxu0
  %3517 = vmatprep.mubr.f32.mxu0 0.0
  %3518 = vmatmul.mubr.f32.gmra.mxu0 %v2966
  %v3519 = vpop.f32.mrf.mxu0
  %v3520 = vadd.f32 %v3191, %v3519
  %v3521 = vpop.f32.mrf.mxu0
  %3522 = vmatprep.mubr.f32.mxu0 0.0
  %3523 = vmatmul.mubr.f32.gmra.mxu0 %v2967
  %v3524 = vpop.f32.mrf.mxu0
  %v3525 = vadd.f32 %v3191, %v3524
  %v3526 = vpop.f32.mrf.mxu0
  %3527 = vmatprep.mubr.f32.mxu0 0.0
  %3528 = vmatmul.mubr.f32.gmra.mxu0 %v2968
  %v3529 = vpop.f32.mrf.mxu0
  %v3530 = vadd.f32 %v3191, %v3529
  %v3531 = vpop.f32.mrf.mxu0
  %3532 = vmatprep.mubr.f32.mxu0 0.0
  %3533 = vmatmul.mubr.f32.gmra.mxu0 %v2969
  %v3534 = vpop.f32.mrf.mxu0
  %v3535 = vadd.f32 %v3191, %v3534
  %v3536 = vpop.f32.mrf.mxu0
  %3537 = vmatprep.mubr.f32.mxu0 0.0
  %3538 = vmatmul.mubr.f32.gmra.mxu0 %v2970
  %v3539 = vpop.f32.mrf.mxu0
  %v3540 = vadd.f32 %v3191, %v3539
  %v3541 = vpop.f32.mrf.mxu0
  %3542 = vmatprep.mubr.f32.mxu0 0.0
  %3543 = vmatmul.mubr.f32.gmra.mxu0 %v2971
  %v3544 = vpop.f32.mrf.mxu0
  %v3545 = vadd.f32 %v3191, %v3544
  %v3546 = vpop.f32.mrf.mxu0
  %3547 = vmatprep.mubr.f32.mxu0 0.0
  %3548 = vmatmul.mubr.f32.gmra.mxu0 %v2972
  %v3549 = vpop.f32.mrf.mxu0
  %v3550 = vadd.f32 %v3191, %v3549
  %v3551 = vpop.f32.mrf.mxu0
  %3552 = vmatprep.mubr.f32.mxu0 0.0
  %3553 = vmatmul.mubr.f32.gmra.mxu0 %v2973
  %v3554 = vpop.f32.mrf.mxu0
  %v3555 = vadd.f32 %v3191, %v3554
  %v3556 = vpop.f32.mrf.mxu0
  %3557 = vmatprep.mubr.f32.mxu0 0.0
  %3558 = vmatmul.mubr.f32.gmra.mxu0 %v2974
  %v3559 = vpop.f32.mrf.mxu0
  %v3560 = vadd.f32 %v3191, %v3559
  %v3561 = vpop.f32.mrf.mxu0
  %3562 = vmatprep.mubr.f32.mxu0 0.0
  %3563 = vmatmul.mubr.f32.gmra.mxu0 %v2975
  %v3564 = vpop.f32.mrf.mxu0
  %v3565 = vadd.f32 %v3191, %v3564
  %v3566 = vpop.f32.mrf.mxu0
  %3567 = vmatprep.mubr.f32.mxu0 0.0
  %3568 = vmatmul.mubr.f32.gmra.mxu0 %v2976
  %v3569 = vpop.f32.mrf.mxu0
  %v3570 = vadd.f32 %v3191, %v3569
  %v3571 = vpop.f32.mrf.mxu0
  %3572 = vmatprep.mubr.f32.mxu0 0.0
  %3573 = vmatmul.mubr.f32.gmra.mxu0 %v2977
  %v3574 = vpop.f32.mrf.mxu0
  %v3575 = vadd.f32 %v3191, %v3574
  %v3576 = vpop.f32.mrf.mxu0
  %3577 = vmatprep.mubr.f32.mxu0 0.0
  %3578 = vmatmul.mubr.f32.gmra.mxu0 %v2978
  %v3579 = vpop.f32.mrf.mxu0
  %v3580 = vadd.f32 %v3191, %v3579
  %v3581 = vpop.f32.mrf.mxu0
  %3582 = vmatprep.mubr.f32.mxu0 0.0
  %3583 = vmatmul.mubr.f32.gmra.mxu0 %v2979
  %v3584 = vpop.f32.mrf.mxu0
  %v3585 = vadd.f32 %v3191, %v3584
  %v3586 = vpop.f32.mrf.mxu0
  %3587 = vmatprep.mubr.f32.mxu0 0.0
  %3588 = vmatmul.mubr.f32.gmra.mxu0 %v2980
  %v3589 = vpop.f32.mrf.mxu0
  %v3590 = vadd.f32 %v3191, %v3589
  %v3591 = vpop.f32.mrf.mxu0
  %3592 = vmatprep.mubr.f32.mxu0 0.0
  %3593 = vmatmul.mubr.f32.gmra.mxu0 %v2981
  %v3594 = vpop.f32.mrf.mxu0
  %v3595 = vadd.f32 %v3191, %v3594
  %v3596 = vpop.f32.mrf.mxu0
  %3597 = vmatprep.mubr.f32.mxu0 0.0
  %3598 = vmatmul.mubr.f32.gmra.mxu0 %v2982
  %v3599 = vpop.f32.mrf.mxu0
  %v3600 = vadd.f32 %v3191, %v3599
  %v3601 = vpop.f32.mrf.mxu0
  %3602 = vmatprep.mubr.f32.mxu0 0.0
  %3603 = vmatmul.mubr.f32.gmra.mxu0 %v2983
  %v3604 = vpop.f32.mrf.mxu0
  %v3605 = vadd.f32 %v3191, %v3604
  %v3606 = vpop.f32.mrf.mxu0
  %3607 = vmatprep.mubr.f32.mxu0 0.0
  %3608 = vmatmul.mubr.f32.gmra.mxu0 %v2984
  %v3609 = vpop.f32.mrf.mxu0
  %v3610 = vadd.f32 %v3191, %v3609
  %v3611 = vpop.f32.mrf.mxu0
  %3612 = vmatprep.mubr.f32.mxu0 0.0
  %3613 = vmatmul.mubr.f32.gmra.mxu0 %v2985
  %v3614 = vpop.f32.mrf.mxu0
  %v3615 = vadd.f32 %v3191, %v3614
  %v3616 = vpop.f32.mrf.mxu0
  %3617 = vmatprep.mubr.f32.mxu0 0.0
  %3618 = vmatmul.mubr.f32.gmra.mxu0 %v2986
  %v3619 = vpop.f32.mrf.mxu0
  %v3620 = vadd.f32 %v3191, %v3619
  %v3621 = vpop.f32.mrf.mxu0
  %3622 = vmatprep.mubr.f32.mxu0 0.0
  %3623 = vmatmul.mubr.f32.gmra.mxu0 %v2987
  %v3624 = vpop.f32.mrf.mxu0
  %v3625 = vadd.f32 %v3191, %v3624
  %v3626 = vpop.f32.mrf.mxu0
  %3627 = vmatprep.mubr.f32.mxu0 0.0
  %3628 = vmatmul.mubr.f32.gmra.mxu0 %v2988
  %v3629 = vpop.f32.mrf.mxu0
  %v3630 = vadd.f32 %v3191, %v3629
  %v3631 = vpop.f32.mrf.mxu0
  %3632 = vmatprep.mubr.f32.mxu0 0.0
  %3633 = vmatmul.mubr.f32.gmra.mxu0 %v2989
  %v3634 = vpop.f32.mrf.mxu0
  %v3635 = vadd.f32 %v3191, %v3634
  %v3636 = vpop.f32.mrf.mxu0
  %3637 = vmatprep.mubr.f32.mxu0 0.0
  %3638 = vmatmul.mubr.f32.gmra.mxu0 %v2990
  %v3639 = vpop.f32.mrf.mxu0
  %v3640 = vadd.f32 %v3191, %v3639
  %v3641 = vpop.f32.mrf.mxu0
  %3642 = vmatprep.mubr.f32.mxu0 0.0
  %3643 = vmatmul.mubr.f32.gmra.mxu0 %v2991
  %v3644 = vpop.f32.mrf.mxu0
  %v3645 = vadd.f32 %v3191, %v3644
  %v3646 = vpop.f32.mrf.mxu0
  %3647 = vmatprep.mubr.f32.mxu0 0.0
  %3648 = vmatmul.mubr.f32.gmra.mxu0 %v2992
  %v3649 = vpop.f32.mrf.mxu0
  %v3650 = vadd.f32 %v3191, %v3649
  %v3651 = vpop.f32.mrf.mxu0
  %3652 = vmatprep.mubr.f32.mxu0 0.0
  %3653 = vmatmul.mubr.f32.gmra.mxu0 %v2993
  %v3654 = vpop.f32.mrf.mxu0
  %v3655 = vadd.f32 %v3191, %v3654
  %v3656 = vpop.f32.mrf.mxu0
  %3657 = vmatprep.mubr.f32.mxu0 0.0
  %3658 = vmatmul.mubr.f32.gmra.mxu0 %v2994
  %v3659 = vpop.f32.mrf.mxu0
  %v3660 = vadd.f32 %v3191, %v3659
  %v3661 = vpop.f32.mrf.mxu0
  %3662 = vmatprep.mubr.f32.mxu0 0.0
  %3663 = vmatmul.mubr.f32.gmra.mxu0 %v2995
  %v3664 = vpop.f32.mrf.mxu0
  %v3665 = vadd.f32 %v3191, %v3664
  %v3666 = vpop.f32.mrf.mxu0
  %3667 = vmatprep.mubr.f32.mxu0 0.0
  %3668 = vmatmul.mubr.f32.gmra.mxu0 %v2996
  %v3669 = vpop.f32.mrf.mxu0
  %v3670 = vadd.f32 %v3191, %v3669
  %v3671 = vpop.f32.mrf.mxu0
  %3672 = vmatprep.mubr.f32.mxu0 0.0
  %3673 = vmatmul.mubr.f32.gmra.mxu0 %v2997
  %v3674 = vpop.f32.mrf.mxu0
  %v3675 = vadd.f32 %v3191, %v3674
  %v3676 = vpop.f32.mrf.mxu0
  %3677 = vmatprep.mubr.f32.mxu0 0.0
  %3678 = vmatmul.mubr.f32.gmra.mxu0 %v2998
  %v3679 = vpop.f32.mrf.mxu0
  %v3680 = vadd.f32 %v3191, %v3679
  %v3681 = vpop.f32.mrf.mxu0
  %3682 = vmatprep.mubr.f32.mxu0 0.0
  %3683 = vmatmul.mubr.f32.gmra.mxu0 %v2999
  %v3684 = vpop.f32.mrf.mxu0
  %v3685 = vadd.f32 %v3191, %v3684
  %v3686 = vpop.f32.mrf.mxu0
  %3687 = vmatprep.mubr.f32.mxu0 0.0
  %3688 = vmatmul.mubr.f32.gmra.mxu0 %v3000
  %v3689 = vpop.f32.mrf.mxu0
  %v3690 = vadd.f32 %v3191, %v3689
  %v3691 = vpop.f32.mrf.mxu0
  %3692 = vmatprep.mubr.f32.mxu0 0.0
  %3693 = vmatmul.mubr.f32.gmra.mxu0 %v3001
  %v3694 = vpop.f32.mrf.mxu0
  %v3695 = vadd.f32 %v3191, %v3694
  %v3696 = vpop.f32.mrf.mxu0
  %3697 = vmatprep.mubr.f32.mxu0 0.0
  %3698 = vmatmul.mubr.f32.gmra.mxu0 %v3002
  %v3699 = vpop.f32.mrf.mxu0
  %v3700 = vadd.f32 %v3191, %v3699
  %v3701 = vpop.f32.mrf.mxu0
  %3702 = vmatprep.mubr.f32.mxu0 0.0
  %3703 = vmatmul.mubr.f32.gmra.mxu0 %v3003
  %v3704 = vpop.f32.mrf.mxu0
  %v3705 = vadd.f32 %v3191, %v3704
  %v3706 = vpop.f32.mrf.mxu0
  %3707 = vmatprep.mubr.f32.mxu0 0.0
  %3708 = vmatmul.mubr.f32.gmra.mxu0 %v3004
  %v3709 = vpop.f32.mrf.mxu0
  %v3710 = vadd.f32 %v3191, %v3709
  %v3711 = vpop.f32.mrf.mxu0
  %3712 = vmatprep.mubr.f32.mxu0 0.0
  %3713 = vmatmul.mubr.f32.gmra.mxu0 %v3005
  %v3714 = vpop.f32.mrf.mxu0
  %v3715 = vadd.f32 %v3191, %v3714
  %v3716 = vpop.f32.mrf.mxu0
  %3717 = vmatprep.mubr.f32.mxu0 0.0
  %3718 = vmatmul.mubr.f32.gmra.mxu0 %v3006
  %v3719 = vpop.f32.mrf.mxu0
  %v3720 = vadd.f32 %v3191, %v3719
  %v3721 = vpop.f32.mrf.mxu0
  %3722 = vmatprep.mubr.f32.mxu0 0.0
  %3723 = vmatmul.mubr.f32.gmra.mxu0 %v3007
  %v3724 = vpop.f32.mrf.mxu0
  %v3725 = vadd.f32 %v3191, %v3724
  %v3726 = vpop.f32.mrf.mxu0
  %3727 = vmatprep.mubr.f32.mxu0 0.0
  %3728 = vmatmul.mubr.f32.gmra.mxu0 %v3008
  %v3729 = vpop.f32.mrf.mxu0
  %v3730 = vadd.f32 %v3191, %v3729
  %v3731 = vpop.f32.mrf.mxu0
  %3732 = vmatprep.mubr.f32.mxu0 0.0
  %3733 = vmatmul.mubr.f32.gmra.mxu0 %v3009
  %v3734 = vpop.f32.mrf.mxu0
  %v3735 = vadd.f32 %v3191, %v3734
  %v3736 = vpop.f32.mrf.mxu0
  %3737 = vmatprep.mubr.f32.mxu0 0.0
  %3738 = vmatmul.mubr.f32.gmra.mxu0 %v3010
  %v3739 = vpop.f32.mrf.mxu0
  %v3740 = vadd.f32 %v3191, %v3739
  %v3741 = vpop.f32.mrf.mxu0
  %3742 = vmatprep.mubr.f32.mxu0 0.0
  %3743 = vmatmul.mubr.f32.gmra.mxu0 %v3011
  %v3744 = vpop.f32.mrf.mxu0
  %v3745 = vadd.f32 %v3191, %v3744
  %v3746 = vpop.f32.mrf.mxu0
  %3747 = vmatprep.mubr.f32.mxu0 0.0
  %3748 = vmatmul.mubr.f32.gmra.mxu0 %v3012
  %v3749 = vpop.f32.mrf.mxu0
  %v3750 = vadd.f32 %v3191, %v3749
  %v3751 = vpop.f32.mrf.mxu0
  %3752 = vmatprep.mubr.f32.mxu0 0.0
  %3753 = vmatmul.mubr.f32.gmra.mxu0 %v3013
  %v3754 = vpop.f32.mrf.mxu0
  %v3755 = vadd.f32 %v3191, %v3754
  %v3756 = vpop.f32.mrf.mxu0
  %3757 = vmatprep.mubr.f32.mxu0 0.0
  %3758 = vmatmul.mubr.f32.gmra.mxu0 %v3014
  %v3759 = vpop.f32.mrf.mxu0
  %v3760 = vadd.f32 %v3191, %v3759
  %v3761 = vpop.f32.mrf.mxu0
  %3762 = vmatprep.mubr.f32.mxu0 0.0
  %3763 = vmatmul.mubr.f32.gmra.mxu0 %v3015
  %v3764 = vpop.f32.mrf.mxu0
  %v3765 = vadd.f32 %v3191, %v3764
  %v3766 = vpop.f32.mrf.mxu0
  %3767 = vmatprep.mubr.f32.mxu0 0.0
  %3768 = vmatmul.mubr.f32.gmra.mxu0 %v3016
  %v3769 = vpop.f32.mrf.mxu0
  %v3770 = vadd.f32 %v3191, %v3769
  %v3771 = vpop.f32.mrf.mxu0
  %3772 = vmatprep.mubr.f32.mxu0 0.0
  %3773 = vmatmul.mubr.f32.gmra.mxu0 %v3017
  %v3774 = vpop.f32.mrf.mxu0
  %v3775 = vadd.f32 %v3191, %v3774
  %v3776 = vpop.f32.mrf.mxu0
  %3777 = vmatprep.mubr.f32.mxu0 0.0
  %3778 = vmatmul.mubr.f32.gmra.mxu0 %v3018
  %v3779 = vpop.f32.mrf.mxu0
  %v3780 = vadd.f32 %v3191, %v3779
  %v3781 = vpop.f32.mrf.mxu0
  %3782 = vmatprep.mubr.f32.mxu0 0.0
  %3783 = vmatmul.mubr.f32.gmra.mxu0 %v3019
  %v3784 = vpop.f32.mrf.mxu0
  %v3785 = vadd.f32 %v3191, %v3784
  %v3786 = vpop.f32.mrf.mxu0
  %3787 = vmatprep.mubr.f32.mxu0 0.0
  %3788 = vmatmul.mubr.f32.gmra.mxu0 %v3020
  %v3789 = vpop.f32.mrf.mxu0
  %v3790 = vadd.f32 %v3191, %v3789
  %v3791 = vpop.f32.mrf.mxu0
  %3792 = vmatprep.mubr.f32.mxu0 0.0
  %3793 = vmatmul.mubr.f32.gmra.mxu0 %v3021
  %v3794 = vpop.f32.mrf.mxu0
  %v3795 = vadd.f32 %v3191, %v3794
  %v3796 = vpop.f32.mrf.mxu0
  %3797 = vmatprep.mubr.f32.mxu0 0.0
  %3798 = vmatmul.mubr.f32.gmra.mxu0 %v3022
  %v3799 = vpop.f32.mrf.mxu0
  %v3800 = vadd.f32 %v3191, %v3799
  %v3801 = vpop.f32.mrf.mxu0
  %3802 = vmatprep.mubr.f32.mxu0 0.0
  %3803 = vmatmul.mubr.f32.gmra.mxu0 %v3023
  %v3804 = vpop.f32.mrf.mxu0
  %v3805 = vadd.f32 %v3191, %v3804
  %v3806 = vpop.f32.mrf.mxu0
  %3807 = vmatprep.mubr.f32.mxu0 0.0
  %3808 = vmatmul.mubr.f32.gmra.mxu0 %v3024
  %v3809 = vpop.f32.mrf.mxu0
  %v3810 = vadd.f32 %v3191, %v3809
  %v3811 = vpop.f32.mrf.mxu0
  %3812 = vmatprep.mubr.f32.mxu0 0.0
  %3813 = vmatmul.mubr.f32.gmra.mxu0 %v3025
  %v3814 = vpop.f32.mrf.mxu0
  %v3815 = vadd.f32 %v3191, %v3814
  %v3816 = vpop.f32.mrf.mxu0
  %3817 = vmatprep.mubr.f32.mxu0 0.0
  %3818 = vmatmul.mubr.f32.gmra.mxu0 %v3026
  %v3819 = vpop.f32.mrf.mxu0
  %v3820 = vadd.f32 %v3191, %v3819
  %v3821 = vpop.f32.mrf.mxu0
  %3822 = vmatprep.mubr.f32.mxu0 0.0
  %3823 = vmatmul.mubr.f32.gmra.mxu0 %v3027
  %v3824 = vpop.f32.mrf.mxu0
  %v3825 = vadd.f32 %v3191, %v3824
  %v3826 = vpop.f32.mrf.mxu0
  %3827 = vmatprep.mubr.f32.mxu0 0.0
  %3828 = vmatmul.mubr.f32.gmra.mxu0 %v3028
  %v3829 = vpop.f32.mrf.mxu0
  %v3830 = vadd.f32 %v3191, %v3829
  %v3831 = vpop.f32.mrf.mxu0
  %3832 = vmatprep.mubr.f32.mxu0 0.0
  %3833 = vmatmul.mubr.f32.gmra.mxu0 %v3029
  %v3834 = vpop.f32.mrf.mxu0
  %v3835 = vadd.f32 %v3191, %v3834
  %v3836 = vpop.f32.mrf.mxu0
  %3837 = vmatprep.mubr.f32.mxu0 0.0
  %3838 = vmatmul.mubr.f32.gmra.mxu0 %v3030
  %v3839 = vpop.f32.mrf.mxu0
  %v3840 = vadd.f32 %v3191, %v3839
  %v3841 = vpop.f32.mrf.mxu0
  %3842 = vmatprep.mubr.f32.mxu0 0.0
  %3843 = vmatmul.mubr.f32.gmra.mxu0 %v3031
  %v3844 = vpop.f32.mrf.mxu0
  %v3845 = vadd.f32 %v3191, %v3844
  %v3846 = vpop.f32.mrf.mxu0
  %3847 = vmatprep.mubr.f32.mxu0 0.0
  %3848 = vmatmul.mubr.f32.gmra.mxu0 %v3032
  %v3849 = vpop.f32.mrf.mxu0
  %v3850 = vadd.f32 %v3191, %v3849
  %v3851 = vpop.f32.mrf.mxu0
  %3852 = vmatprep.mubr.f32.mxu0 0.0
  %3853 = vmatmul.mubr.f32.gmra.mxu0 %v3033
  %v3854 = vpop.f32.mrf.mxu0
  %v3855 = vadd.f32 %v3191, %v3854
  %v3856 = vpop.f32.mrf.mxu0
  %3857 = vmatprep.mubr.f32.mxu0 0.0
  %3858 = vmatmul.mubr.f32.gmra.mxu0 %v3034
  %v3859 = vpop.f32.mrf.mxu0
  %v3860 = vadd.f32 %v3191, %v3859
  %v3861 = vpop.f32.mrf.mxu0
  %3862 = vmatprep.mubr.f32.mxu0 0.0
  %3863 = vmatmul.mubr.f32.gmra.mxu0 %v3035
  %v3864 = vpop.f32.mrf.mxu0
  %v3865 = vadd.f32 %v3191, %v3864
  %v3866 = vpop.f32.mrf.mxu0
  %3867 = vmatprep.mubr.f32.mxu0 0.0
  %3868 = vmatmul.mubr.f32.gmra.mxu0 %v3036
  %v3869 = vpop.f32.mrf.mxu0
  %v3870 = vadd.f32 %v3191, %v3869
  %v3871 = vpop.f32.mrf.mxu0
  %3872 = vmatprep.mubr.f32.mxu0 0.0
  %3873 = vmatmul.mubr.f32.gmra.mxu0 %v3037
  %v3874 = vpop.f32.mrf.mxu0
  %v3875 = vadd.f32 %v3191, %v3874
  %v3876 = vpop.f32.mrf.mxu0
  %3877 = vmatprep.mubr.f32.mxu0 0.0
  %3878 = vmatmul.mubr.f32.gmra.mxu0 %v3038
  %v3879 = vpop.f32.mrf.mxu0
  %v3880 = vadd.f32 %v3191, %v3879
  %v3881 = vpop.f32.mrf.mxu0
  %3882 = vmatprep.mubr.f32.mxu0 0.0
  %3883 = vmatmul.mubr.f32.gmra.mxu0 %v3039
  %v3884 = vpop.f32.mrf.mxu0
  %v3885 = vadd.f32 %v3191, %v3884
  %v3886 = vpop.f32.mrf.mxu0
  %3887 = vmatprep.mubr.f32.mxu0 0.0
  %3888 = vmatmul.mubr.f32.gmra.mxu0 %v3040
  %v3889 = vpop.f32.mrf.mxu0
  %v3890 = vadd.f32 %v3191, %v3889
  %v3891 = vpop.f32.mrf.mxu0
  %3892 = vmatprep.mubr.f32.mxu0 0.0
  %3893 = vmatmul.mubr.f32.gmra.mxu0 %v3041
  %v3894 = vpop.f32.mrf.mxu0
  %v3895 = vadd.f32 %v3191, %v3894
  %v3896 = vpop.f32.mrf.mxu0
  %3897 = vmatprep.mubr.f32.mxu0 0.0
  %3898 = vmatmul.mubr.f32.gmra.mxu0 %v3042
  %v3899 = vpop.f32.mrf.mxu0
  %v3900 = vadd.f32 %v3191, %v3899
  %v3901 = vpop.f32.mrf.mxu0
  %3902 = vmatprep.mubr.f32.mxu0 0.0
  %3903 = vmatmul.mubr.f32.gmra.mxu0 %v3043
  %v3904 = vpop.f32.mrf.mxu0
  %v3905 = vadd.f32 %v3191, %v3904
  %v3906 = vpop.f32.mrf.mxu0
  %3907 = vmatprep.mubr.f32.mxu0 0.0
  %3908 = vmatmul.mubr.f32.gmra.mxu0 %v3044
  %v3909 = vpop.f32.mrf.mxu0
  %v3910 = vadd.f32 %v3191, %v3909
  %v3911 = vpop.f32.mrf.mxu0
  %3912 = vmatprep.mubr.f32.mxu0 0.0
  %3913 = vmatmul.mubr.f32.gmra.mxu0 %v3045
  %v3914 = vpop.f32.mrf.mxu0
  %v3915 = vadd.f32 %v3191, %v3914
  %v3916 = vpop.f32.mrf.mxu0
  %3917 = vmatprep.mubr.f32.mxu0 0.0
  %3918 = vmatmul.mubr.f32.gmra.mxu0 %v3046
  %v3919 = vpop.f32.mrf.mxu0
  %v3920 = vadd.f32 %v3191, %v3919
  %v3921 = vpop.f32.mrf.mxu0
  %3922 = vmatprep.mubr.f32.mxu0 0.0
  %3923 = vmatmul.mubr.f32.gmra.mxu0 %v3047
  %v3924 = vpop.f32.mrf.mxu0
  %v3925 = vadd.f32 %v3191, %v3924
  %v3926 = vpop.f32.mrf.mxu0
  %3927 = vmatprep.mubr.f32.mxu0 0.0
  %3928 = vmatmul.mubr.f32.gmra.mxu0 %v3048
  %v3929 = vpop.f32.mrf.mxu0
  %v3930 = vadd.f32 %v3191, %v3929
  %v3931 = vpop.f32.mrf.mxu0
  %3932 = vmatprep.mubr.f32.mxu0 0.0
  %3933 = vmatmul.mubr.f32.gmra.mxu0 %v3049
  %v3934 = vpop.f32.mrf.mxu0
  %v3935 = vadd.f32 %v3191, %v3934
  %v3936 = vpop.f32.mrf.mxu0
  %3937 = vmatprep.mubr.f32.mxu0 0.0
  %3938 = vmatmul.mubr.f32.gmra.mxu0 %v3050
  %v3939 = vpop.f32.mrf.mxu0
  %v3940 = vadd.f32 %v3191, %v3939
  %v3941 = vpop.f32.mrf.mxu0
  %3942 = vmatprep.mubr.f32.mxu0 0.0
  %3943 = vmatmul.mubr.f32.gmra.mxu0 %v3051
  %v3944 = vpop.f32.mrf.mxu0
  %v3945 = vadd.f32 %v3191, %v3944
  %v3946 = vpop.f32.mrf.mxu0
  %3947 = vmatprep.mubr.f32.mxu0 0.0
  %3948 = vmatmul.mubr.f32.gmra.mxu0 %v3052
  %v3949 = vpop.f32.mrf.mxu0
  %v3950 = vadd.f32 %v3191, %v3949
  %v3951 = vpop.f32.mrf.mxu0
  %3952 = vmatprep.mubr.f32.mxu0 0.0
  %3953 = vmatmul.mubr.f32.gmra.mxu0 %v3053
  %v3954 = vpop.f32.mrf.mxu0
  %v3955 = vadd.f32 %v3191, %v3954
  %v3956 = vpop.f32.mrf.mxu0
  %3957 = vmatprep.mubr.f32.mxu0 0.0
  %3958 = vmatmul.mubr.f32.gmra.mxu0 %v3054
  %v3959 = vpop.f32.mrf.mxu0
  %v3960 = vadd.f32 %v3191, %v3959
  %v3961 = vpop.f32.mrf.mxu0
  %3962 = vmatprep.mubr.f32.mxu0 0.0
  %3963 = vmatmul.mubr.f32.gmra.mxu0 %v3055
  %v3964 = vpop.f32.mrf.mxu0
  %v3965 = vadd.f32 %v3191, %v3964
  %v3966 = vpop.f32.mrf.mxu0
  %3967 = vmatprep.mubr.f32.mxu0 0.0
  %3968 = vmatmul.mubr.f32.gmra.mxu0 %v3056
  %v3969 = vpop.f32.mrf.mxu0
  %v3970 = vadd.f32 %v3191, %v3969
  %v3971 = vpop.f32.mrf.mxu0
  %3972 = vmatprep.mubr.f32.mxu0 0.0
  %3973 = vmatmul.mubr.f32.gmra.mxu0 %v3057
  %v3974 = vpop.f32.mrf.mxu0
  %v3975 = vadd.f32 %v3191, %v3974
  %v3976 = vpop.f32.mrf.mxu0
  %3977 = vmatprep.mubr.f32.mxu0 0.0
  %3978 = vmatmul.mubr.f32.gmra.mxu0 %v3058
  %v3979 = vpop.f32.mrf.mxu0
  %v3980 = vadd.f32 %v3191, %v3979
  %v3981 = vpop.f32.mrf.mxu0
  %3982 = vmatprep.mubr.f32.mxu0 0.0
  %3983 = vmatmul.mubr.f32.gmra.mxu0 %v3059
  %v3984 = vpop.f32.mrf.mxu0
  %v3985 = vadd.f32 %v3191, %v3984
  %v3986 = vpop.f32.mrf.mxu0
  %3987 = vmatprep.mubr.f32.mxu0 0.0
  %3988 = vmatmul.mubr.f32.gmra.mxu0 %v3060
  %v3989 = vpop.f32.mrf.mxu0
  %v3990 = vadd.f32 %v3191, %v3989
  %v3991 = vpop.f32.mrf.mxu0
  %3992 = vmatprep.mubr.f32.mxu0 0.0
  %3993 = vmatmul.mubr.f32.gmra.mxu0 %v3061
  %v3994 = vpop.f32.mrf.mxu0
  %v3995 = vadd.f32 %v3191, %v3994
  %v3996 = vpop.f32.mrf.mxu0
  %3997 = vmatprep.mubr.f32.mxu0 0.0
  %3998 = vmatmul.mubr.f32.gmra.mxu0 %v3062
  %v3999 = vpop.f32.mrf.mxu0
  %v4000 = vadd.f32 %v3191, %v3999
  %v4001 = vpop.f32.mrf.mxu0
  %4002 = vmatprep.mubr.f32.mxu0 0.0
  %4003 = vmatmul.mubr.f32.gmra.mxu0 %v3063
  %v4004 = vpop.f32.mrf.mxu0
  %v4005 = vadd.f32 %v3191, %v4004
  %v4006 = vpop.f32.mrf.mxu0
  %4007 = vmatprep.mubr.f32.mxu0 0.0
  %4008 = vmatmul.mubr.f32.gmra.mxu0 %v3064
  %v4009 = vpop.f32.mrf.mxu0
  %v4010 = vadd.f32 %v3191, %v4009
  %v4011 = vpop.f32.mrf.mxu0
  %4012 = vmatprep.mubr.f32.mxu0 0.0
  %4013 = vmatmul.mubr.f32.gmra.mxu0 %v3065
  %v4014 = vpop.f32.mrf.mxu0
  %v4015 = vadd.f32 %v3191, %v4014
  %v4016 = vpop.f32.mrf.mxu0
  %4017 = vmatprep.mubr.f32.mxu0 0.0
  %4018 = vmatmul.mubr.f32.gmra.mxu0 %v3066
  %v4019 = vpop.f32.mrf.mxu0
  %v4020 = vadd.f32 %v3191, %v4019
  %v4021 = vpop.f32.mrf.mxu0
  %4022 = vmatprep.mubr.f32.mxu0 0.0
  %4023 = vmatmul.mubr.f32.gmra.mxu0 %v3067
  %v4024 = vpop.f32.mrf.mxu0
  %v4025 = vadd.f32 %v3191, %v4024
  %v4026 = vpop.f32.mrf.mxu0
  %4027 = vmatprep.mubr.f32.mxu0 0.0
  %4028 = vmatmul.mubr.f32.gmra.mxu0 %v3068
  %v4029 = vpop.f32.mrf.mxu0
  %v4030 = vadd.f32 %v3191, %v4029
  %v4031 = vpop.f32.mrf.mxu0
  %4032 = vmatprep.mubr.f32.mxu0 0.0
  %4033 = vmatmul.mubr.f32.gmra.mxu0 %v3069
  %v4034 = vpop.f32.mrf.mxu0
  %v4035 = vadd.f32 %v3191, %v4034
  %v4036 = vpop.f32.mrf.mxu0
  %4037 = vmatprep.mubr.f32.mxu0 0.0
  %4038 = vmatmul.mubr.f32.gmra.mxu0 %v3070
  %v4039 = vpop.f32.mrf.mxu0
  %v4040 = vadd.f32 %v3191, %v4039
  %v4041 = vpop.f32.mrf.mxu0
  %4042 = vmatprep.mubr.f32.mxu0 0.0
  %4043 = vmatmul.mubr.f32.gmra.mxu0 %v3071
  %v4044 = vpop.f32.mrf.mxu0
  %v4045 = vadd.f32 %v3191, %v4044
  %v4046 = vpop.f32.mrf.mxu0
  %4047 = vmatprep.mubr.f32.mxu0 0.0
  %4048 = vmatmul.mubr.f32.gmra.mxu0 %v3072
  %v4049 = vpop.f32.mrf.mxu0
  %v4050 = vadd.f32 %v3191, %v4049
  %v4051 = vpop.f32.mrf.mxu0
  %4052 = vmatprep.mubr.f32.mxu0 0.0
  %4053 = vmatmul.mubr.f32.gmra.mxu0 %v3073
  %v4054 = vpop.f32.mrf.mxu0
  %v4055 = vadd.f32 %v3191, %v4054
  %v4056 = vpop.f32.mrf.mxu0
  %4057 = vmatprep.mubr.f32.mxu0 0.0
  %4058 = vmatmul.mubr.f32.gmra.mxu0 %v3074
  %v4059 = vpop.f32.mrf.mxu0
  %v4060 = vadd.f32 %v3191, %v4059
  %v4061 = vpop.f32.mrf.mxu0
  %4062 = vmatprep.mubr.f32.mxu0 0.0
  %4063 = vmatmul.mubr.f32.gmra.mxu0 %v3075
  %v4064 = vpop.f32.mrf.mxu0
  %v4065 = vadd.f32 %v3191, %v4064
  %v4066 = vpop.f32.mrf.mxu0
  %4067 = vmatprep.mubr.f32.mxu0 0.0
  %4068 = vmatmul.mubr.f32.gmra.mxu0 %v3076
  %v4069 = vpop.f32.mrf.mxu0
  %v4070 = vadd.f32 %v3191, %v4069
  %v4071 = vpop.f32.mrf.mxu0
  %4072 = vmatprep.mubr.f32.mxu0 0.0
  %4073 = vmatmul.mubr.f32.gmra.mxu0 %v3077
  %v4074 = vpop.f32.mrf.mxu0
  %v4075 = vadd.f32 %v3191, %v4074
  %v4076 = vpop.f32.mrf.mxu0
  %4077 = vmatprep.mubr.f32.mxu0 0.0
  %4078 = vmatmul.mubr.f32.gmra.mxu0 %v3078
  %v4079 = vpop.f32.mrf.mxu0
  %v4080 = vadd.f32 %v3191, %v4079
  %v4081 = vpop.f32.mrf.mxu0
  %4082 = vmatprep.mubr.f32.mxu0 0.0
  %4083 = vmatmul.mubr.f32.gmra.mxu0 %v3079
  %v4084 = vpop.f32.mrf.mxu0
  %v4085 = vadd.f32 %v3191, %v4084
  %v4086 = vpop.f32.mrf.mxu0
  %4087 = vmatprep.mubr.f32.mxu0 0.0
  %4088 = vmatmul.mubr.f32.gmra.mxu0 %v3080
  %v4089 = vpop.f32.mrf.mxu0
  %v4090 = vadd.f32 %v3191, %v4089
  %v4091 = vpop.f32.mrf.mxu0
  %4092 = vmatprep.mubr.f32.mxu0 0.0
  %4093 = vmatmul.mubr.f32.gmra.mxu0 %v3081
  %v4094 = vpop.f32.mrf.mxu0
  %v4095 = vadd.f32 %v3191, %v4094
  %v4096 = vpop.f32.mrf.mxu0
  %4097 = vmatprep.mubr.f32.mxu0 0.0
  %4098 = vmatmul.mubr.f32.gmra.mxu0 %v3082
  %v4099 = vpop.f32.mrf.mxu0
  %v4100 = vadd.f32 %v3191, %v4099
  %v4101 = vpop.f32.mrf.mxu0
  %4102 = vmatprep.mubr.f32.mxu0 0.0
  %4103 = vmatmul.mubr.f32.gmra.mxu0 %v3083
  %v4104 = vpop.f32.mrf.mxu0
  %v4105 = vadd.f32 %v3191, %v4104
  %v4106 = vpop.f32.mrf.mxu0
  %4107 = vmatprep.mubr.f32.mxu0 0.0
  %4108 = vmatmul.mubr.f32.gmra.mxu0 %v3084
  %v4109 = vpop.f32.mrf.mxu0
  %v4110 = vadd.f32 %v3191, %v4109
  %v4111 = vpop.f32.mrf.mxu0
  %4112 = vmatprep.mubr.f32.mxu0 0.0
  %4113 = vmatmul.mubr.f32.gmra.mxu0 %v3085
  %v4114 = vpop.f32.mrf.mxu0
  %v4115 = vadd.f32 %v3191, %v4114
  %v4116 = vpop.f32.mrf.mxu0
  %4117 = vmatprep.mubr.f32.mxu0 0.0
  %4118 = vmatmul.mubr.f32.gmra.mxu0 %v3086
  %v4119 = vpop.f32.mrf.mxu0
  %v4120 = vadd.f32 %v3191, %v4119
  %v4121 = vpop.f32.mrf.mxu0
  %4122 = vmatprep.mubr.f32.mxu0 0.0
  %4123 = vmatmul.mubr.f32.gmra.mxu0 %v3087
  %v4124 = vpop.f32.mrf.mxu0
  %v4125 = vadd.f32 %v3191, %v4124
  %v4126 = vpop.f32.mrf.mxu0
  %4127 = vmatprep.mubr.f32.mxu0 0.0
  %4128 = vmatmul.mubr.f32.gmra.mxu0 %v3088
  %v4129 = vpop.f32.mrf.mxu0
  %v4130 = vadd.f32 %v3191, %v4129
  %v4131 = vpop.f32.mrf.mxu0
  %4132 = vmatprep.mubr.f32.mxu0 0.0
  %4133 = vmatmul.mubr.f32.gmra.mxu0 %v3089
  %v4134 = vpop.f32.mrf.mxu0
  %v4135 = vadd.f32 %v3191, %v4134
  %v4136 = vpop.f32.mrf.mxu0
  %4137 = vmatprep.mubr.f32.mxu0 0.0
  %4138 = vmatmul.mubr.f32.gmra.mxu0 %v3090
  %v4139 = vpop.f32.mrf.mxu0
  %v4140 = vadd.f32 %v3191, %v4139
  %v4141 = vpop.f32.mrf.mxu0
  %4142 = vmatprep.mubr.f32.mxu0 0.0
  %4143 = vmatmul.mubr.f32.gmra.mxu0 %v3091
  %v4144 = vpop.f32.mrf.mxu0
  %v4145 = vadd.f32 %v3191, %v4144
  %v4146 = vpop.f32.mrf.mxu0
  %4147 = vmatprep.mubr.f32.mxu0 0.0
  %4148 = vmatmul.mubr.f32.gmra.mxu0 %v3092
  %v4149 = vpop.f32.mrf.mxu0
  %v4150 = vadd.f32 %v3191, %v4149
  %v4151 = vpop.f32.mrf.mxu0
  %4152 = vmatprep.mubr.f32.mxu0 0.0
  %4153 = vmatmul.mubr.f32.gmra.mxu0 %v3093
  %v4154 = vpop.f32.mrf.mxu0
  %v4155 = vadd.f32 %v3191, %v4154
  %v4156 = vpop.f32.mrf.mxu0
  %4157 = vmatprep.mubr.f32.mxu0 0.0
  %4158 = vmatmul.mubr.f32.gmra.mxu0 %v3094
  %v4159 = vpop.f32.mrf.mxu0
  %v4160 = vadd.f32 %v3191, %v4159
  %v4161 = vpop.f32.mrf.mxu0
  %4162 = vmatprep.mubr.f32.mxu0 0.0
  %4163 = vmatmul.mubr.f32.gmra.mxu0 %v3095
  %v4164 = vpop.f32.mrf.mxu0
  %v4165 = vadd.f32 %v3191, %v4164
  %v4166 = vpop.f32.mrf.mxu0
  %4167 = vmatprep.mubr.f32.mxu0 0.0
  %4168 = vmatmul.mubr.f32.gmra.mxu0 %v3096
  %v4169 = vpop.f32.mrf.mxu0
  %v4170 = vadd.f32 %v3191, %v4169
  %v4171 = vpop.f32.mrf.mxu0
  %4172 = vmatprep.mubr.f32.mxu0 0.0
  %4173 = vmatmul.mubr.f32.gmra.mxu0 %v3097
  %v4174 = vpop.f32.mrf.mxu0
  %v4175 = vadd.f32 %v3191, %v4174
  %v4176 = vpop.f32.mrf.mxu0
  %4177 = vmatprep.mubr.f32.mxu0 0.0
  %4178 = vmatmul.mubr.f32.gmra.mxu0 %v3098
  %v4179 = vpop.f32.mrf.mxu0
  %v4180 = vadd.f32 %v3191, %v4179
  %v4181 = vpop.f32.mrf.mxu0
  %4182 = vmatprep.mubr.f32.mxu0 0.0
  %4183 = vmatmul.mubr.f32.gmra.mxu0 %v3099
  %v4184 = vpop.f32.mrf.mxu0
  %v4185 = vadd.f32 %v3191, %v4184
  %v4186 = vpop.f32.mrf.mxu0
  %4187 = vmatprep.mubr.f32.mxu0 0.0
  %4188 = vmatmul.mubr.f32.gmra.mxu0 %v3100
  %v4189 = vpop.f32.mrf.mxu0
  %v4190 = vadd.f32 %v3191, %v4189
  %v4191 = vpop.f32.mrf.mxu0
  %4192 = vmatprep.mubr.f32.mxu0 0.0
  %4193 = vmatmul.mubr.f32.gmra.mxu0 %v3101
  %v4194 = vpop.f32.mrf.mxu0
  %v4195 = vadd.f32 %v3191, %v4194
  %v4196 = vpop.f32.mrf.mxu0
  %4197 = vmatprep.mubr.f32.mxu0 0.0
  %4198 = vmatmul.mubr.f32.gmra.mxu0 %v3102
  %v4199 = vpop.f32.mrf.mxu0
  %v4200 = vadd.f32 %v3191, %v4199
  %v4201 = vpop.f32.mrf.mxu0
  %4202 = vmatprep.mubr.f32.mxu0 0.0
  %4203 = vmatmul.mubr.f32.gmra.mxu0 %v3103
  %v4204 = vpop.f32.mrf.mxu0
  %v4205 = vadd.f32 %v3191, %v4204
  %v4206 = vpop.f32.mrf.mxu0
  %4207 = vmatprep.mubr.f32.mxu0 0.0
  %4208 = vmatmul.mubr.f32.gmra.mxu0 %v3104
  %v4209 = vpop.f32.mrf.mxu0
  %v4210 = vadd.f32 %v3191, %v4209
  %v4211 = vpop.f32.mrf.mxu0
  %4212 = vmatprep.mubr.f32.mxu0 0.0
  %4213 = vmatmul.mubr.f32.gmra.mxu0 %v3105
  %v4214 = vpop.f32.mrf.mxu0
  %v4215 = vadd.f32 %v3191, %v4214
  %v4216 = vpop.f32.mrf.mxu0
  %4217 = vmatprep.mubr.f32.mxu0 0.0
  %4218 = vmatmul.mubr.f32.gmra.mxu0 %v3106
  %v4219 = vpop.f32.mrf.mxu0
  %v4220 = vadd.f32 %v3191, %v4219
  %v4221 = vpop.f32.mrf.mxu0
  %4222 = vmatprep.mubr.f32.mxu0 0.0
  %4223 = vmatmul.mubr.f32.gmra.mxu0 %v3107
  %v4224 = vpop.f32.mrf.mxu0
  %v4225 = vadd.f32 %v3191, %v4224
  %v4226 = vpop.f32.mrf.mxu0
  %4227 = vmatprep.mubr.f32.mxu0 0.0
  %4228 = vmatmul.mubr.f32.gmra.mxu0 %v3108
  %v4229 = vpop.f32.mrf.mxu0
  %v4230 = vadd.f32 %v3191, %v4229
  %v4231 = vpop.f32.mrf.mxu0
  %4232 = vmatprep.mubr.f32.mxu0 0.0
  %4233 = vmatmul.mubr.f32.gmra.mxu0 %v3109
  %v4234 = vpop.f32.mrf.mxu0
  %v4235 = vadd.f32 %v3191, %v4234
  %v4236 = vpop.f32.mrf.mxu0
  %4237 = vmatprep.mubr.f32.mxu0 0.0
  %4238 = vmatmul.mubr.f32.gmra.mxu0 %v3110
  %v4239 = vpop.f32.mrf.mxu0
  %v4240 = vadd.f32 %v3191, %v4239
  %v4241 = vpop.f32.mrf.mxu0
  %4242 = vmatprep.mubr.f32.mxu0 0.0
  %4243 = vmatmul.mubr.f32.gmra.mxu0 %v3111
  %v4244 = vpop.f32.mrf.mxu0
  %v4245 = vadd.f32 %v3191, %v4244
  %v4246 = vpop.f32.mrf.mxu0
  %4247 = vmatprep.mubr.f32.mxu0 0.0
  %4248 = vmatmul.mubr.f32.gmra.mxu0 %v3112
  %v4249 = vpop.f32.mrf.mxu0
  %v4250 = vadd.f32 %v3191, %v4249
  %v4251 = vpop.f32.mrf.mxu0
  %4252 = vmatprep.mubr.f32.mxu0 0.0
  %4253 = vmatmul.mubr.f32.gmra.mxu0 %v3113
  %v4254 = vpop.f32.mrf.mxu0
  %v4255 = vadd.f32 %v3191, %v4254
  %v4256 = vpop.f32.mrf.mxu0
  %4257 = vmatprep.mubr.f32.mxu0 0.0
  %4258 = vmatmul.mubr.f32.gmra.mxu0 %v3114
  %v4259 = vpop.f32.mrf.mxu0
  %v4260 = vadd.f32 %v3191, %v4259
  %v4261 = vpop.f32.mrf.mxu0
  %4262 = vmatprep.mubr.f32.mxu0 0.0
  %4263 = vmatmul.mubr.f32.gmra.mxu0 %v3115
  %v4264 = vpop.f32.mrf.mxu0
  %v4265 = vadd.f32 %v3191, %v4264
  %v4266 = vpop.f32.mrf.mxu0
  %4267 = vmatprep.mubr.f32.mxu0 0.0
  %4268 = vmatmul.mubr.f32.gmra.mxu0 %v3116
  %v4269 = vpop.f32.mrf.mxu0
  %v4270 = vadd.f32 %v3191, %v4269
  %v4271 = vpop.f32.mrf.mxu0
  %4272 = vmatprep.mubr.f32.mxu0 0.0
  %4273 = vmatmul.mubr.f32.gmra.mxu0 %v3117
  %v4274 = vpop.f32.mrf.mxu0
  %v4275 = vadd.f32 %v3191, %v4274
  %v4276 = vpop.f32.mrf.mxu0
  %4277 = vmatprep.mubr.f32.mxu0 0.0
  %4278 = vmatmul.mubr.f32.gmra.mxu0 %v3118
  %v4279 = vpop.f32.mrf.mxu0
  %v4280 = vadd.f32 %v3191, %v4279
  %v4281 = vpop.f32.mrf.mxu0
  %4282 = vmatprep.mubr.f32.mxu0 0.0
  %4283 = vmatmul.mubr.f32.gmra.mxu0 %v3119
  %v4284 = vpop.f32.mrf.mxu0
  %v4285 = vadd.f32 %v3191, %v4284
  %v4286 = vpop.f32.mrf.mxu0
  %4287 = vmatprep.mubr.f32.mxu0 0.0
  %4288 = vmatmul.mubr.f32.gmra.mxu0 %v3120
  %v4289 = vpop.f32.mrf.mxu0
  %v4290 = vadd.f32 %v3191, %v4289
  %v4291 = vpop.f32.mrf.mxu0
  %4292 = vmatprep.mubr.f32.mxu0 0.0
  %4293 = vmatmul.mubr.f32.gmra.mxu0 %v3121
  %v4294 = vpop.f32.mrf.mxu0
  %v4295 = vadd.f32 %v3191, %v4294
  %v4296 = vpop.f32.mrf.mxu0
  %4297 = vmatprep.mubr.f32.mxu0 0.0
  %4298 = vmatmul.mubr.f32.gmra.mxu0 %v3122
  %v4299 = vpop.f32.mrf.mxu0
  %v4300 = vadd.f32 %v3191, %v4299
  %v4301 = vpop.f32.mrf.mxu0
  %4302 = vmatprep.mubr.f32.mxu0 0.0
  %4303 = vmatmul.mubr.f32.gmra.mxu0 %v3123
  %v4304 = vpop.f32.mrf.mxu0
  %v4305 = vadd.f32 %v3191, %v4304
  %v4306 = vpop.f32.mrf.mxu0
  %4307 = vmatprep.mubr.f32.mxu0 0.0
  %4308 = vmatmul.mubr.f32.gmra.mxu0 %v3124
  %v4309 = vpop.f32.mrf.mxu0
  %v4310 = vadd.f32 %v3191, %v4309
  %v4311 = vpop.f32.mrf.mxu0
  %4312 = vmatprep.mubr.f32.mxu0 0.0
  %4313 = vmatmul.mubr.f32.gmra.mxu0 %v3125
  %v4314 = vpop.f32.mrf.mxu0
  %v4315 = vadd.f32 %v3191, %v4314
  %v4316 = vpop.f32.mrf.mxu0
  %4317 = vmatprep.mubr.f32.mxu0 0.0
  %4318 = vmatmul.mubr.f32.gmra.mxu0 %v3126
  %v4319 = vpop.f32.mrf.mxu0
  %v4320 = vadd.f32 %v3191, %v4319
  %v4321 = vpop.f32.mrf.mxu0
  %4322 = vmatprep.mubr.f32.mxu0 0.0
  %4323 = vmatmul.mubr.f32.gmra.mxu0 %v3127
  %v4324 = vpop.f32.mrf.mxu0
  %v4325 = vadd.f32 %v3191, %v4324
  %v4326 = vpop.f32.mrf.mxu0
  %4327 = vmatprep.mubr.f32.mxu0 0.0
  %4328 = vmatmul.mubr.f32.gmra.mxu0 %v3128
  %v4329 = vpop.f32.mrf.mxu0
  %v4330 = vadd.f32 %v3191, %v4329
  %v4331 = vpop.f32.mrf.mxu0
  %4332 = vmatprep.mubr.f32.mxu0 0.0
  %4333 = vmatmul.mubr.f32.gmra.mxu0 %v3129
  %v4334 = vpop.f32.mrf.mxu0
  %v4335 = vadd.f32 %v3191, %v4334
  %v4336 = vpop.f32.mrf.mxu0
  %4337 = vmatprep.mubr.f32.mxu0 0.0
  %4338 = vmatmul.mubr.f32.gmra.mxu0 %v3130
  %v4339 = vpop.f32.mrf.mxu0
  %v4340 = vadd.f32 %v3191, %v4339
  %v4341 = vpop.f32.mrf.mxu0
  %4342 = vmatprep.mubr.f32.mxu0 0.0
  %4343 = vmatmul.mubr.f32.gmra.mxu0 %v3131
  %v4344 = vpop.f32.mrf.mxu0
  %v4345 = vadd.f32 %v3191, %v4344
  %v4346 = vpop.f32.mrf.mxu0
  %4347 = vmatprep.mubr.f32.mxu0 0.0
  %4348 = vmatmul.mubr.f32.gmra.mxu0 %v3132
  %v4349 = vpop.f32.mrf.mxu0
  %v4350 = vadd.f32 %v3191, %v4349
  %v4351 = vpop.f32.mrf.mxu0
  %4352 = vmatprep.mubr.f32.mxu0 0.0
  %4353 = vmatmul.mubr.f32.gmra.mxu0 %v3133
  %v4354 = vpop.f32.mrf.mxu0
  %v4355 = vadd.f32 %v3191, %v4354
  %v4356 = vpop.f32.mrf.mxu0
  %4357 = vmatprep.mubr.f32.mxu0 0.0
  %4358 = vmatmul.mubr.f32.gmra.mxu0 %v3134
  %v4359 = vpop.f32.mrf.mxu0
  %v4360 = vadd.f32 %v3191, %v4359
  %v4361 = vpop.f32.mrf.mxu0
  %4362 = vmatprep.mubr.f32.mxu0 0.0
  %4363 = vmatmul.mubr.f32.gmra.mxu0 %v3135
  %v4364 = vpop.f32.mrf.mxu0
  %v4365 = vadd.f32 %v3191, %v4364
  %v4366 = vpop.f32.mrf.mxu0
  %4367 = vmatprep.mubr.f32.mxu0 0.0
  %4368 = vmatmul.mubr.f32.gmra.mxu0 %v3136
  %v4369 = vpop.f32.mrf.mxu0
  %v4370 = vadd.f32 %v3191, %v4369
  %v4371 = vpop.f32.mrf.mxu0
  %4372 = vmatprep.mubr.f32.mxu0 0.0
  %4373 = vmatmul.mubr.f32.gmra.mxu0 %v3137
  %v4374 = vpop.f32.mrf.mxu0
  %v4375 = vadd.f32 %v3191, %v4374
  %v4376 = vpop.f32.mrf.mxu0
  %4377 = vmatprep.mubr.f32.mxu0 0.0
  %4378 = vmatmul.mubr.f32.gmra.mxu0 %v3138
  %v4379 = vpop.f32.mrf.mxu0
  %v4380 = vadd.f32 %v3191, %v4379
  %v4381 = vpop.f32.mrf.mxu0
  %4382 = vmatprep.mubr.f32.mxu0 0.0
  %4383 = vmatmul.mubr.f32.gmra.mxu0 %v3139
  %v4384 = vpop.f32.mrf.mxu0
  %v4385 = vadd.f32 %v3191, %v4384
  %v4386 = vpop.f32.mrf.mxu0
  %4387 = vmatprep.mubr.f32.mxu0 0.0
  %4388 = vmatmul.mubr.f32.gmra.mxu0 %v3140
  %v4389 = vpop.f32.mrf.mxu0
  %v4390 = vadd.f32 %v3191, %v4389
  %v4391 = vpop.f32.mrf.mxu0
  %4392 = vmatprep.mubr.f32.mxu0 0.0
  %4393 = vmatmul.mubr.f32.gmra.mxu0 %v3141
  %v4394 = vpop.f32.mrf.mxu0
  %v4395 = vadd.f32 %v3191, %v4394
  %v4396 = vpop.f32.mrf.mxu0
  %4397 = vmatprep.mubr.f32.mxu0 0.0
  %4398 = vmatmul.mubr.f32.gmra.mxu0 %v3142
  %v4399 = vpop.f32.mrf.mxu0
  %v4400 = vadd.f32 %v3191, %v4399
  %v4401 = vpop.f32.mrf.mxu0
  %4402 = vmatprep.mubr.f32.mxu0 0.0
  %4403 = vmatmul.mubr.f32.gmra.mxu0 %v3143
  %v4404 = vpop.f32.mrf.mxu0
  %v4405 = vadd.f32 %v3191, %v4404
  %v4406 = vpop.f32.mrf.mxu0
  %4407 = vmatprep.mubr.f32.mxu0 0.0
  %4408 = vmatmul.mubr.f32.gmra.mxu0 %v3144
  %v4409 = vpop.f32.mrf.mxu0
  %v4410 = vadd.f32 %v3191, %v4409
  %v4411 = vpop.f32.mrf.mxu0
  %4412 = vmatprep.mubr.f32.mxu0 0.0
  %4413 = vmatmul.mubr.f32.gmra.mxu0 %v3145
  %v4414 = vpop.f32.mrf.mxu0
  %v4415 = vadd.f32 %v3191, %v4414
  %v4416 = vpop.f32.mrf.mxu0
  %4417 = vmatprep.mubr.f32.mxu0 0.0
  %4418 = vmatmul.mubr.f32.gmra.mxu0 %v3146
  %v4419 = vpop.f32.mrf.mxu0
  %v4420 = vadd.f32 %v3191, %v4419
  %v4421 = vpop.f32.mrf.mxu0
  %4422 = vmatprep.mubr.f32.mxu0 0.0
  %4423 = vmatmul.mubr.f32.gmra.mxu0 %v3147
  %v4424 = vpop.f32.mrf.mxu0
  %v4425 = vadd.f32 %v3191, %v4424
  %v4426 = vpop.f32.mrf.mxu0
  %4427 = vmatprep.mubr.f32.mxu0 0.0
  %4428 = vmatmul.mubr.f32.gmra.mxu0 %v3148
  %v4429 = vpop.f32.mrf.mxu0
  %v4430 = vadd.f32 %v3191, %v4429
  %v4431 = vpop.f32.mrf.mxu0
  %4432 = vmatprep.mubr.f32.mxu0 0.0
  %4433 = vmatmul.mubr.f32.gmra.mxu0 %v3149
  %v4434 = vpop.f32.mrf.mxu0
  %v4435 = vadd.f32 %v3191, %v4434
  %v4436 = vpop.f32.mrf.mxu0
  %4437 = vmatprep.mubr.f32.mxu0 0.0
  %4438 = vmatmul.mubr.f32.gmra.mxu0 %v3150
  %v4439 = vpop.f32.mrf.mxu0
  %v4440 = vadd.f32 %v3191, %v4439
  %v4441 = vpop.f32.mrf.mxu0
  %4442 = vmatprep.mubr.f32.mxu0 0.0
  %4443 = vmatmul.mubr.f32.gmra.mxu0 %v3151
  %v4444 = vpop.f32.mrf.mxu0
  %v4445 = vadd.f32 %v3191, %v4444
  %v4446 = vpop.f32.mrf.mxu0
  %4447 = vmatprep.mubr.f32.mxu0 0.0
  %4448 = vmatmul.mubr.f32.gmra.mxu0 %v3152
  %v4449 = vpop.f32.mrf.mxu0
  %v4450 = vadd.f32 %v3191, %v4449
  %v4451 = vpop.f32.mrf.mxu0
  %4452 = vmatprep.mubr.f32.mxu0 0.0
  %4453 = vmatmul.mubr.f32.gmra.mxu0 %v3153
  %v4454 = vpop.f32.mrf.mxu0
  %v4455 = vadd.f32 %v3191, %v4454
  %v4456 = vpop.f32.mrf.mxu0
  %4457 = vmatprep.mubr.f32.mxu0 0.0
  %4458 = vmatmul.mubr.f32.gmra.mxu0 %v3154
  %v4459 = vpop.f32.mrf.mxu0
  %v4460 = vadd.f32 %v3191, %v4459
  %v4461 = vpop.f32.mrf.mxu0
  %4462 = vmatprep.mubr.f32.mxu0 0.0
  %4463 = vmatmul.mubr.f32.gmra.mxu0 %v3155
  %v4464 = vpop.f32.mrf.mxu0
  %v4465 = vadd.f32 %v3191, %v4464
  %v4466 = vpop.f32.mrf.mxu0
  %4467 = vmatprep.mubr.f32.mxu0 0.0
  %4468 = vmatmul.mubr.f32.gmra.mxu0 %v3156
  %v4469 = vpop.f32.mrf.mxu0
  %v4470 = vadd.f32 %v3191, %v4469
  %v4471 = vpop.f32.mrf.mxu0
  %4472 = vmatprep.mubr.f32.mxu0 0.0
  %4473 = vmatmul.mubr.f32.gmra.mxu0 %v3157
  %v4474 = vpop.f32.mrf.mxu0
  %v4475 = vadd.f32 %v3191, %v4474
  %v4476 = vpop.f32.mrf.mxu0
  %4477 = vmatprep.mubr.f32.mxu0 0.0
  %4478 = vmatmul.mubr.f32.gmra.mxu0 %v3158
  %v4479 = vpop.f32.mrf.mxu0
  %v4480 = vadd.f32 %v3191, %v4479
  %v4481 = vpop.f32.mrf.mxu0
  %4482 = vmatprep.mubr.f32.mxu0 0.0
  %4483 = vmatmul.mubr.f32.gmra.mxu0 %v3159
  %v4484 = vpop.f32.mrf.mxu0
  %v4485 = vadd.f32 %v3191, %v4484
  %v4486 = vpop.f32.mrf.mxu0
  %4487 = vmatprep.mubr.f32.mxu0 0.0
  %4488 = vmatmul.mubr.f32.gmra.mxu0 %v3160
  %v4489 = vpop.f32.mrf.mxu0
  %v4490 = vadd.f32 %v3191, %v4489
  %v4491 = vpop.f32.mrf.mxu0
  %4492 = vmatprep.mubr.f32.mxu0 0.0
  %4493 = vmatmul.mubr.f32.gmra.mxu0 %v3161
  %v4494 = vpop.f32.mrf.mxu0
  %v4495 = vadd.f32 %v3191, %v4494
  %v4496 = vpop.f32.mrf.mxu0
  %4497 = vmatprep.mubr.f32.mxu0 0.0
  %4498 = vmatmul.mubr.f32.gmra.mxu0 %v3162
  %v4499 = vpop.f32.mrf.mxu0
  %v4500 = vadd.f32 %v3191, %v4499
  %v4501 = vpop.f32.mrf.mxu0
  %4502 = vmatprep.mubr.f32.mxu0 0.0
  %4503 = vmatmul.mubr.f32.gmra.mxu0 %v3163
  %v4504 = vpop.f32.mrf.mxu0
  %v4505 = vadd.f32 %v3191, %v4504
  %v4506 = vpop.f32.mrf.mxu0
  %4507 = vmatprep.mubr.f32.mxu0 0.0
  %4508 = vmatmul.mubr.f32.gmra.mxu0 %v3164
  %v4509 = vpop.f32.mrf.mxu0
  %v4510 = vadd.f32 %v3191, %v4509
  %v4511 = vpop.f32.mrf.mxu0
  %4512 = vmatprep.mubr.f32.mxu0 0.0
  %4513 = vmatmul.mubr.f32.gmra.mxu0 %v3165
  %v4514 = vpop.f32.mrf.mxu0
  %v4515 = vadd.f32 %v3191, %v4514
  %v4516 = vpop.f32.mrf.mxu0
  %4517 = vmatprep.mubr.f32.mxu0 0.0
  %4518 = vmatmul.mubr.f32.gmra.mxu0 %v3166
  %v4519 = vpop.f32.mrf.mxu0
  %v4520 = vadd.f32 %v3191, %v4519
  %v4521 = vpop.f32.mrf.mxu0
  %4522 = vmatprep.mubr.f32.mxu0 0.0
  %4523 = vmatmul.mubr.f32.gmra.mxu0 %v3167
  %v4524 = vpop.f32.mrf.mxu0
  %v4525 = vadd.f32 %v3191, %v4524
  %v4526 = vpop.f32.mrf.mxu0
  %4527 = vmatprep.mubr.f32.mxu0 0.0
  %4528 = vmatmul.mubr.f32.gmra.mxu0 %v3168
  %v4529 = vpop.f32.mrf.mxu0
  %v4530 = vadd.f32 %v3191, %v4529
  %v4531 = vpop.f32.mrf.mxu0
  %4532 = vmatprep.mubr.f32.mxu0 0.0
  %4533 = vmatmul.mubr.f32.gmra.mxu0 %v3169
  %v4534 = vpop.f32.mrf.mxu0
  %v4535 = vadd.f32 %v3191, %v4534
  %v4536 = vpop.f32.mrf.mxu0
  %4537 = vdwg.mxu0
  %v4538 = vmax.f32 %v3260, 0.0
  %v4539 = vmax.f32 %v3265, 0.0
  %v4540 = vmax.f32 %v3270, 0.0
  %v4541 = vmax.f32 %v3275, 0.0
  %v4542 = vmax.f32 %v3280, 0.0
  %v4543 = vmax.f32 %v3285, 0.0
  %v4544 = vmax.f32 %v3290, 0.0
  %v4545 = vmax.f32 %v3295, 0.0
  %v4546 = vmax.f32 %v3300, 0.0
  %v4547 = vmax.f32 %v3305, 0.0
  %v4548 = vmax.f32 %v3310, 0.0
  %v4549 = vmax.f32 %v3315, 0.0
  %v4550 = vmax.f32 %v3320, 0.0
  %v4551 = vmax.f32 %v3325, 0.0
  %v4552 = vmax.f32 %v3330, 0.0
  %v4553 = vmax.f32 %v3335, 0.0
  %v4554 = vmax.f32 %v3340, 0.0
  %v4555 = vmax.f32 %v3345, 0.0
  %v4556 = vmax.f32 %v3350, 0.0
  %v4557 = vmax.f32 %v3355, 0.0
  %v4558 = vmax.f32 %v3360, 0.0
  %v4559 = vmax.f32 %v3365, 0.0
  %v4560 = vmax.f32 %v3370, 0.0
  %v4561 = vmax.f32 %v3375, 0.0
  %v4562 = vmax.f32 %v3380, 0.0
  %v4563 = vmax.f32 %v3385, 0.0
  %v4564 = vmax.f32 %v3390, 0.0
  %v4565 = vmax.f32 %v3395, 0.0
  %v4566 = vmax.f32 %v3400, 0.0
  %v4567 = vmax.f32 %v3405, 0.0
  %v4568 = vmax.f32 %v3410, 0.0
  %v4569 = vmax.f32 %v3415, 0.0
  %v4570 = vmax.f32 %v3420, 0.0
  %v4571 = vmax.f32 %v3425, 0.0
  %v4572 = vmax.f32 %v3430, 0.0
  %v4573 = vmax.f32 %v3435, 0.0
  %v4574 = vmax.f32 %v3440, 0.0
  %v4575 = vmax.f32 %v3445, 0.0
  %v4576 = vmax.f32 %v3450, 0.0
  %v4577 = vmax.f32 %v3455, 0.0
  %v4578 = vmax.f32 %v3460, 0.0
  %v4579 = vmax.f32 %v3465, 0.0
  %v4580 = vmax.f32 %v3470, 0.0
  %v4581 = vmax.f32 %v3475, 0.0
  %v4582 = vmax.f32 %v3480, 0.0
  %v4583 = vmax.f32 %v3485, 0.0
  %v4584 = vmax.f32 %v3490, 0.0
  %v4585 = vmax.f32 %v3495, 0.0
  %v4586 = vmax.f32 %v3500, 0.0
  %v4587 = vmax.f32 %v3505, 0.0
  %v4588 = vmax.f32 %v3510, 0.0
  %v4589 = vmax.f32 %v3515, 0.0
  %v4590 = vmax.f32 %v3520, 0.0
  %v4591 = vmax.f32 %v3525, 0.0
  %v4592 = vmax.f32 %v3530, 0.0
  %v4593 = vmax.f32 %v3535, 0.0
  %v4594 = vmax.f32 %v3540, 0.0
  %v4595 = vmax.f32 %v3545, 0.0
  %v4596 = vmax.f32 %v3550, 0.0
  %v4597 = vmax.f32 %v3555, 0.0
  %v4598 = vmax.f32 %v3560, 0.0
  %v4599 = vmax.f32 %v3565, 0.0
  %v4600 = vmax.f32 %v3570, 0.0
  %v4601 = vmax.f32 %v3575, 0.0
  %v4602 = vmax.f32 %v3580, 0.0
  %v4603 = vmax.f32 %v3585, 0.0
  %v4604 = vmax.f32 %v3590, 0.0
  %v4605 = vmax.f32 %v3595, 0.0
  %v4606 = vmax.f32 %v3600, 0.0
  %v4607 = vmax.f32 %v3605, 0.0
  %v4608 = vmax.f32 %v3610, 0.0
  %v4609 = vmax.f32 %v3615, 0.0
  %v4610 = vmax.f32 %v3620, 0.0
  %v4611 = vmax.f32 %v3625, 0.0
  %v4612 = vmax.f32 %v3630, 0.0
  %v4613 = vmax.f32 %v3635, 0.0
  %v4614 = vmax.f32 %v3640, 0.0
  %v4615 = vmax.f32 %v3645, 0.0
  %v4616 = vmax.f32 %v3650, 0.0
  %v4617 = vmax.f32 %v3655, 0.0
  %v4618 = vmax.f32 %v3660, 0.0
  %v4619 = vmax.f32 %v3665, 0.0
  %v4620 = vmax.f32 %v3670, 0.0
  %v4621 = vmax.f32 %v3675, 0.0
  %v4622 = vmax.f32 %v3680, 0.0
  %v4623 = vmax.f32 %v3685, 0.0
  %v4624 = vmax.f32 %v3690, 0.0
  %v4625 = vmax.f32 %v3695, 0.0
  %v4626 = vmax.f32 %v3700, 0.0
  %v4627 = vmax.f32 %v3705, 0.0
  %v4628 = vmax.f32 %v3710, 0.0
  %v4629 = vmax.f32 %v3715, 0.0
  %v4630 = vmax.f32 %v3720, 0.0
  %v4631 = vmax.f32 %v3725, 0.0
  %v4632 = vmax.f32 %v3730, 0.0
  %v4633 = vmax.f32 %v3735, 0.0
  %v4634 = vmax.f32 %v3740, 0.0
  %v4635 = vmax.f32 %v3745, 0.0
  %v4636 = vmax.f32 %v3750, 0.0
  %v4637 = vmax.f32 %v3755, 0.0
  %v4638 = vmax.f32 %v3760, 0.0
  %v4639 = vmax.f32 %v3765, 0.0
  %v4640 = vmax.f32 %v3770, 0.0
  %v4641 = vmax.f32 %v3775, 0.0
  %v4642 = vmax.f32 %v3780, 0.0
  %v4643 = vmax.f32 %v3785, 0.0
  %v4644 = vmax.f32 %v3790, 0.0
  %v4645 = vmax.f32 %v3795, 0.0
  %v4646 = vmax.f32 %v3800, 0.0
  %v4647 = vmax.f32 %v3805, 0.0
  %v4648 = vmax.f32 %v3810, 0.0
  %v4649 = vmax.f32 %v3815, 0.0
  %v4650 = vmax.f32 %v3820, 0.0
  %v4651 = vmax.f32 %v3825, 0.0
  %v4652 = vmax.f32 %v3830, 0.0
  %v4653 = vmax.f32 %v3835, 0.0
  %v4654 = vmax.f32 %v3840, 0.0
  %v4655 = vmax.f32 %v3845, 0.0
  %v4656 = vmax.f32 %v3850, 0.0
  %v4657 = vmax.f32 %v3855, 0.0
  %v4658 = vmax.f32 %v3860, 0.0
  %v4659 = vmax.f32 %v3865, 0.0
  %v4660 = vmax.f32 %v3870, 0.0
  %v4661 = vmax.f32 %v3875, 0.0
  %v4662 = vmax.f32 %v3880, 0.0
  %v4663 = vmax.f32 %v3885, 0.0
  %v4664 = vmax.f32 %v3890, 0.0
  %v4665 = vmax.f32 %v3895, 0.0
  %v4666 = vmax.f32 %v3900, 0.0
  %v4667 = vmax.f32 %v3905, 0.0
  %v4668 = vmax.f32 %v3910, 0.0
  %v4669 = vmax.f32 %v3915, 0.0
  %v4670 = vmax.f32 %v3920, 0.0
  %v4671 = vmax.f32 %v3925, 0.0
  %v4672 = vmax.f32 %v3930, 0.0
  %v4673 = vmax.f32 %v3935, 0.0
  %v4674 = vmax.f32 %v3940, 0.0
  %v4675 = vmax.f32 %v3945, 0.0
  %v4676 = vmax.f32 %v3950, 0.0
  %v4677 = vmax.f32 %v3955, 0.0
  %v4678 = vmax.f32 %v3960, 0.0
  %v4679 = vmax.f32 %v3965, 0.0
  %v4680 = vmax.f32 %v3970, 0.0
  %v4681 = vmax.f32 %v3975, 0.0
  %v4682 = vmax.f32 %v3980, 0.0
  %v4683 = vmax.f32 %v3985, 0.0
  %v4684 = vmax.f32 %v3990, 0.0
  %v4685 = vmax.f32 %v3995, 0.0
  %v4686 = vmax.f32 %v4000, 0.0
  %v4687 = vmax.f32 %v4005, 0.0
  %v4688 = vmax.f32 %v4010, 0.0
  %v4689 = vmax.f32 %v4015, 0.0
  %v4690 = vmax.f32 %v4020, 0.0
  %v4691 = vmax.f32 %v4025, 0.0
  %v4692 = vmax.f32 %v4030, 0.0
  %v4693 = vmax.f32 %v4035, 0.0
  %v4694 = vmax.f32 %v4040, 0.0
  %v4695 = vmax.f32 %v4045, 0.0
  %v4696 = vmax.f32 %v4050, 0.0
  %v4697 = vmax.f32 %v4055, 0.0
  %v4698 = vmax.f32 %v4060, 0.0
  %v4699 = vmax.f32 %v4065, 0.0
  %v4700 = vmax.f32 %v4070, 0.0
  %v4701 = vmax.f32 %v4075, 0.0
  %v4702 = vmax.f32 %v4080, 0.0
  %v4703 = vmax.f32 %v4085, 0.0
  %v4704 = vmax.f32 %v4090, 0.0
  %v4705 = vmax.f32 %v4095, 0.0
  %v4706 = vmax.f32 %v4100, 0.0
  %v4707 = vmax.f32 %v4105, 0.0
  %v4708 = vmax.f32 %v4110, 0.0
  %v4709 = vmax.f32 %v4115, 0.0
  %v4710 = vmax.f32 %v4120, 0.0
  %v4711 = vmax.f32 %v4125, 0.0
  %v4712 = vmax.f32 %v4130, 0.0
  %v4713 = vmax.f32 %v4135, 0.0
  %v4714 = vmax.f32 %v4140, 0.0
  %v4715 = vmax.f32 %v4145, 0.0
  %v4716 = vmax.f32 %v4150, 0.0
  %v4717 = vmax.f32 %v4155, 0.0
  %v4718 = vmax.f32 %v4160, 0.0
  %v4719 = vmax.f32 %v4165, 0.0
  %v4720 = vmax.f32 %v4170, 0.0
  %v4721 = vmax.f32 %v4175, 0.0
  %v4722 = vmax.f32 %v4180, 0.0
  %v4723 = vmax.f32 %v4185, 0.0
  %v4724 = vmax.f32 %v4190, 0.0
  %v4725 = vmax.f32 %v4195, 0.0
  %v4726 = vmax.f32 %v4200, 0.0
  %v4727 = vmax.f32 %v4205, 0.0
  %v4728 = vmax.f32 %v4210, 0.0
  %v4729 = vmax.f32 %v4215, 0.0
  %v4730 = vmax.f32 %v4220, 0.0
  %v4731 = vmax.f32 %v4225, 0.0
  %v4732 = vmax.f32 %v4230, 0.0
  %v4733 = vmax.f32 %v4235, 0.0
  %v4734 = vmax.f32 %v4240, 0.0
  %v4735 = vmax.f32 %v4245, 0.0
  %v4736 = vmax.f32 %v4250, 0.0
  %v4737 = vmax.f32 %v4255, 0.0
  %v4738 = vmax.f32 %v4260, 0.0
  %v4739 = vmax.f32 %v4265, 0.0
  %v4740 = vmax.f32 %v4270, 0.0
  %v4741 = vmax.f32 %v4275, 0.0
  %v4742 = vmax.f32 %v4280, 0.0
  %v4743 = vmax.f32 %v4285, 0.0
  %v4744 = vmax.f32 %v4290, 0.0
  %v4745 = vmax.f32 %v4295, 0.0
  %v4746 = vmax.f32 %v4300, 0.0
  %v4747 = vmax.f32 %v4305, 0.0
  %v4748 = vmax.f32 %v4310, 0.0
  %v4749 = vmax.f32 %v4315, 0.0
  %v4750 = vmax.f32 %v4320, 0.0
  %v4751 = vmax.f32 %v4325, 0.0
  %v4752 = vmax.f32 %v4330, 0.0
  %v4753 = vmax.f32 %v4335, 0.0
  %v4754 = vmax.f32 %v4340, 0.0
  %v4755 = vmax.f32 %v4345, 0.0
  %v4756 = vmax.f32 %v4350, 0.0
  %v4757 = vmax.f32 %v4355, 0.0
  %v4758 = vmax.f32 %v4360, 0.0
  %v4759 = vmax.f32 %v4365, 0.0
  %v4760 = vmax.f32 %v4370, 0.0
  %v4761 = vmax.f32 %v4375, 0.0
  %v4762 = vmax.f32 %v4380, 0.0
  %v4763 = vmax.f32 %v4385, 0.0
  %v4764 = vmax.f32 %v4390, 0.0
  %v4765 = vmax.f32 %v4395, 0.0
  %v4766 = vmax.f32 %v4400, 0.0
  %v4767 = vmax.f32 %v4405, 0.0
  %v4768 = vmax.f32 %v4410, 0.0
  %v4769 = vmax.f32 %v4415, 0.0
  %v4770 = vmax.f32 %v4420, 0.0
  %v4771 = vmax.f32 %v4425, 0.0
  %v4772 = vmax.f32 %v4430, 0.0
  %v4773 = vmax.f32 %v4435, 0.0
  %v4774 = vmax.f32 %v4440, 0.0
  %v4775 = vmax.f32 %v4445, 0.0
  %v4776 = vmax.f32 %v4450, 0.0
  %v4777 = vmax.f32 %v4455, 0.0
  %v4778 = vmax.f32 %v4460, 0.0
  %v4779 = vmax.f32 %v4465, 0.0
  %v4780 = vmax.f32 %v4470, 0.0
  %v4781 = vmax.f32 %v4475, 0.0
  %v4782 = vmax.f32 %v4480, 0.0
  %v4783 = vmax.f32 %v4485, 0.0
  %v4784 = vmax.f32 %v4490, 0.0
  %v4785 = vmax.f32 %v4495, 0.0
  %v4786 = vmax.f32 %v4500, 0.0
  %v4787 = vmax.f32 %v4505, 0.0
  %v4788 = vmax.f32 %v4510, 0.0
  %v4789 = vmax.f32 %v4515, 0.0
  %v4790 = vmax.f32 %v4520, 0.0
  %v4791 = vmax.f32 %v4525, 0.0
  %v4792 = vmax.f32 %v4530, 0.0
  %v4793 = vmax.f32 %v4535, 0.0
  %vm4794 = vcmask 261120
  %4795 = vst.msk [vmem:[%s6] sm:$0xff] %vm4794, %v4538
  %4796 = vst.msk [vmem:[%s6 + $0x8] sm:$0xff] %vm4794, %v4539
  %4797 = vst.msk [vmem:[%s6 + $0x10] sm:$0xff] %vm4794, %v4540
  %4798 = vst.msk [vmem:[%s6 + $0x18] sm:$0xff] %vm4794, %v4541
  %4799 = vst.msk [vmem:[%s6 + $0x20] sm:$0xff] %vm4794, %v4542
  %4800 = vst.msk [vmem:[%s6 + $0x28] sm:$0xff] %vm4794, %v4543
  %4801 = vst.msk [vmem:[%s6 + $0x30] sm:$0xff] %vm4794, %v4544
  %4802 = vst.msk [vmem:[%s6 + $0x38] sm:$0xff] %vm4794, %v4545
  %4803 = vst.msk [vmem:[%s6 + $0x40] sm:$0xff] %vm4794, %v4546
  %4804 = vst.msk [vmem:[%s6 + $0x48] sm:$0xff] %vm4794, %v4547
  %4805 = vst.msk [vmem:[%s6 + $0x50] sm:$0xff] %vm4794, %v4548
  %4806 = vst.msk [vmem:[%s6 + $0x58] sm:$0xff] %vm4794, %v4549
  %4807 = vst.msk [vmem:[%s6 + $0x60] sm:$0xff] %vm4794, %v4550
  %4808 = vst.msk [vmem:[%s6 + $0x68] sm:$0xff] %vm4794, %v4551
  %4809 = vst.msk [vmem:[%s6 + $0x70] sm:$0xff] %vm4794, %v4552
  %4810 = vst.msk [vmem:[%s6 + $0x78] sm:$0xff] %vm4794, %v4553
  %4811 = vst.msk [vmem:[%s6 + $0x80] sm:$0xff] %vm4794, %v4554
  %4812 = vst.msk [vmem:[%s6 + $0x88] sm:$0xff] %vm4794, %v4555
  %4813 = vst.msk [vmem:[%s6 + $0x90] sm:$0xff] %vm4794, %v4556
  %4814 = vst.msk [vmem:[%s6 + $0x98] sm:$0xff] %vm4794, %v4557
  %4815 = vst.msk [vmem:[%s6 + $0xa0] sm:$0xff] %vm4794, %v4558
  %4816 = vst.msk [vmem:[%s6 + $0xa8] sm:$0xff] %vm4794, %v4559
  %4817 = vst.msk [vmem:[%s6 + $0xb0] sm:$0xff] %vm4794, %v4560
  %4818 = vst.msk [vmem:[%s6 + $0xb8] sm:$0xff] %vm4794, %v4561
  %4819 = vst.msk [vmem:[%s6 + $0xc0] sm:$0xff] %vm4794, %v4562
  %4820 = vst.msk [vmem:[%s6 + $0xc8] sm:$0xff] %vm4794, %v4563
  %4821 = vst.msk [vmem:[%s6 + $0xd0] sm:$0xff] %vm4794, %v4564
  %4822 = vst.msk [vmem:[%s6 + $0xd8] sm:$0xff] %vm4794, %v4565
  %4823 = vst.msk [vmem:[%s6 + $0xe0] sm:$0xff] %vm4794, %v4566
  %4824 = vst.msk [vmem:[%s6 + $0xe8] sm:$0xff] %vm4794, %v4567
  %4825 = vst.msk [vmem:[%s6 + $0xf0] sm:$0xff] %vm4794, %v4568
  %4826 = vst.msk [vmem:[%s6 + $0xf8] sm:$0xff] %vm4794, %v4569
  %4827 = vst.msk [vmem:[%s6 + $0x100] sm:$0xff] %vm4794, %v4570
  %4828 = vst.msk [vmem:[%s6 + $0x108] sm:$0xff] %vm4794, %v4571
  %4829 = vst.msk [vmem:[%s6 + $0x110] sm:$0xff] %vm4794, %v4572
  %4830 = vst.msk [vmem:[%s6 + $0x118] sm:$0xff] %vm4794, %v4573
  %4831 = vst.msk [vmem:[%s6 + $0x120] sm:$0xff] %vm4794, %v4574
  %4832 = vst.msk [vmem:[%s6 + $0x128] sm:$0xff] %vm4794, %v4575
  %4833 = vst.msk [vmem:[%s6 + $0x130] sm:$0xff] %vm4794, %v4576
  %4834 = vst.msk [vmem:[%s6 + $0x138] sm:$0xff] %vm4794, %v4577
  %4835 = vst.msk [vmem:[%s6 + $0x140] sm:$0xff] %vm4794, %v4578
  %4836 = vst.msk [vmem:[%s6 + $0x148] sm:$0xff] %vm4794, %v4579
  %4837 = vst.msk [vmem:[%s6 + $0x150] sm:$0xff] %vm4794, %v4580
  %4838 = vst.msk [vmem:[%s6 + $0x158] sm:$0xff] %vm4794, %v4581
  %4839 = vst.msk [vmem:[%s6 + $0x160] sm:$0xff] %vm4794, %v4582
  %4840 = vst.msk [vmem:[%s6 + $0x168] sm:$0xff] %vm4794, %v4583
  %4841 = vst.msk [vmem:[%s6 + $0x170] sm:$0xff] %vm4794, %v4584
  %4842 = vst.msk [vmem:[%s6 + $0x178] sm:$0xff] %vm4794, %v4585
  %4843 = vst.msk [vmem:[%s6 + $0x180] sm:$0xff] %vm4794, %v4586
  %4844 = vst.msk [vmem:[%s6 + $0x188] sm:$0xff] %vm4794, %v4587
  %4845 = vst.msk [vmem:[%s6 + $0x190] sm:$0xff] %vm4794, %v4588
  %4846 = vst.msk [vmem:[%s6 + $0x198] sm:$0xff] %vm4794, %v4589
  %4847 = vst.msk [vmem:[%s6 + $0x1a0] sm:$0xff] %vm4794, %v4590
  %4848 = vst.msk [vmem:[%s6 + $0x1a8] sm:$0xff] %vm4794, %v4591
  %4849 = vst.msk [vmem:[%s6 + $0x1b0] sm:$0xff] %vm4794, %v4592
  %4850 = vst.msk [vmem:[%s6 + $0x1b8] sm:$0xff] %vm4794, %v4593
  %4851 = vst.msk [vmem:[%s6 + $0x1c0] sm:$0xff] %vm4794, %v4594
  %4852 = vst.msk [vmem:[%s6 + $0x1c8] sm:$0xff] %vm4794, %v4595
  %4853 = vst.msk [vmem:[%s6 + $0x1d0] sm:$0xff] %vm4794, %v4596
  %4854 = vst.msk [vmem:[%s6 + $0x1d8] sm:$0xff] %vm4794, %v4597
  %4855 = vst.msk [vmem:[%s6 + $0x1e0] sm:$0xff] %vm4794, %v4598
  %4856 = vst.msk [vmem:[%s6 + $0x1e8] sm:$0xff] %vm4794, %v4599
  %4857 = vst.msk [vmem:[%s6 + $0x1f0] sm:$0xff] %vm4794, %v4600
  %4858 = vst.msk [vmem:[%s6 + $0x1f8] sm:$0xff] %vm4794, %v4601
  %4859 = vst.msk [vmem:[%s6 + $0x200] sm:$0xff] %vm4794, %v4602
  %4860 = vst.msk [vmem:[%s6 + $0x208] sm:$0xff] %vm4794, %v4603
  %4861 = vst.msk [vmem:[%s6 + $0x210] sm:$0xff] %vm4794, %v4604
  %4862 = vst.msk [vmem:[%s6 + $0x218] sm:$0xff] %vm4794, %v4605
  %4863 = vst.msk [vmem:[%s6 + $0x220] sm:$0xff] %vm4794, %v4606
  %4864 = vst.msk [vmem:[%s6 + $0x228] sm:$0xff] %vm4794, %v4607
  %4865 = vst.msk [vmem:[%s6 + $0x230] sm:$0xff] %vm4794, %v4608
  %4866 = vst.msk [vmem:[%s6 + $0x238] sm:$0xff] %vm4794, %v4609
  %4867 = vst.msk [vmem:[%s6 + $0x240] sm:$0xff] %vm4794, %v4610
  %4868 = vst.msk [vmem:[%s6 + $0x248] sm:$0xff] %vm4794, %v4611
  %4869 = vst.msk [vmem:[%s6 + $0x250] sm:$0xff] %vm4794, %v4612
  %4870 = vst.msk [vmem:[%s6 + $0x258] sm:$0xff] %vm4794, %v4613
  %4871 = vst.msk [vmem:[%s6 + $0x260] sm:$0xff] %vm4794, %v4614
  %4872 = vst.msk [vmem:[%s6 + $0x268] sm:$0xff] %vm4794, %v4615
  %4873 = vst.msk [vmem:[%s6 + $0x270] sm:$0xff] %vm4794, %v4616
  %4874 = vst.msk [vmem:[%s6 + $0x278] sm:$0xff] %vm4794, %v4617
  %4875 = vst.msk [vmem:[%s6 + $0x280] sm:$0xff] %vm4794, %v4618
  %4876 = vst.msk [vmem:[%s6 + $0x288] sm:$0xff] %vm4794, %v4619
  %4877 = vst.msk [vmem:[%s6 + $0x290] sm:$0xff] %vm4794, %v4620
  %4878 = vst.msk [vmem:[%s6 + $0x298] sm:$0xff] %vm4794, %v4621
  %4879 = vst.msk [vmem:[%s6 + $0x2a0] sm:$0xff] %vm4794, %v4622
  %4880 = vst.msk [vmem:[%s6 + $0x2a8] sm:$0xff] %vm4794, %v4623
  %4881 = vst.msk [vmem:[%s6 + $0x2b0] sm:$0xff] %vm4794, %v4624
  %4882 = vst.msk [vmem:[%s6 + $0x2b8] sm:$0xff] %vm4794, %v4625
  %4883 = vst.msk [vmem:[%s6 + $0x2c0] sm:$0xff] %vm4794, %v4626
  %4884 = vst.msk [vmem:[%s6 + $0x2c8] sm:$0xff] %vm4794, %v4627
  %4885 = vst.msk [vmem:[%s6 + $0x2d0] sm:$0xff] %vm4794, %v4628
  %4886 = vst.msk [vmem:[%s6 + $0x2d8] sm:$0xff] %vm4794, %v4629
  %4887 = vst.msk [vmem:[%s6 + $0x2e0] sm:$0xff] %vm4794, %v4630
  %4888 = vst.msk [vmem:[%s6 + $0x2e8] sm:$0xff] %vm4794, %v4631
  %4889 = vst.msk [vmem:[%s6 + $0x2f0] sm:$0xff] %vm4794, %v4632
  %4890 = vst.msk [vmem:[%s6 + $0x2f8] sm:$0xff] %vm4794, %v4633
  %4891 = vst.msk [vmem:[%s6 + $0x300] sm:$0xff] %vm4794, %v4634
  %4892 = vst.msk [vmem:[%s6 + $0x308] sm:$0xff] %vm4794, %v4635
  %4893 = vst.msk [vmem:[%s6 + $0x310] sm:$0xff] %vm4794, %v4636
  %4894 = vst.msk [vmem:[%s6 + $0x318] sm:$0xff] %vm4794, %v4637
  %4895 = vst.msk [vmem:[%s6 + $0x320] sm:$0xff] %vm4794, %v4638
  %4896 = vst.msk [vmem:[%s6 + $0x328] sm:$0xff] %vm4794, %v4639
  %4897 = vst.msk [vmem:[%s6 + $0x330] sm:$0xff] %vm4794, %v4640
  %4898 = vst.msk [vmem:[%s6 + $0x338] sm:$0xff] %vm4794, %v4641
  %4899 = vst.msk [vmem:[%s6 + $0x340] sm:$0xff] %vm4794, %v4642
  %4900 = vst.msk [vmem:[%s6 + $0x348] sm:$0xff] %vm4794, %v4643
  %4901 = vst.msk [vmem:[%s6 + $0x350] sm:$0xff] %vm4794, %v4644
  %4902 = vst.msk [vmem:[%s6 + $0x358] sm:$0xff] %vm4794, %v4645
  %4903 = vst.msk [vmem:[%s6 + $0x360] sm:$0xff] %vm4794, %v4646
  %4904 = vst.msk [vmem:[%s6 + $0x368] sm:$0xff] %vm4794, %v4647
  %4905 = vst.msk [vmem:[%s6 + $0x370] sm:$0xff] %vm4794, %v4648
  %4906 = vst.msk [vmem:[%s6 + $0x378] sm:$0xff] %vm4794, %v4649
  %4907 = vst.msk [vmem:[%s6 + $0x380] sm:$0xff] %vm4794, %v4650
  %4908 = vst.msk [vmem:[%s6 + $0x388] sm:$0xff] %vm4794, %v4651
  %4909 = vst.msk [vmem:[%s6 + $0x390] sm:$0xff] %vm4794, %v4652
  %4910 = vst.msk [vmem:[%s6 + $0x398] sm:$0xff] %vm4794, %v4653
  %4911 = vst.msk [vmem:[%s6 + $0x3a0] sm:$0xff] %vm4794, %v4654
  %4912 = vst.msk [vmem:[%s6 + $0x3a8] sm:$0xff] %vm4794, %v4655
  %4913 = vst.msk [vmem:[%s6 + $0x3b0] sm:$0xff] %vm4794, %v4656
  %4914 = vst.msk [vmem:[%s6 + $0x3b8] sm:$0xff] %vm4794, %v4657
  %4915 = vst.msk [vmem:[%s6 + $0x3c0] sm:$0xff] %vm4794, %v4658
  %4916 = vst.msk [vmem:[%s6 + $0x3c8] sm:$0xff] %vm4794, %v4659
  %4917 = vst.msk [vmem:[%s6 + $0x3d0] sm:$0xff] %vm4794, %v4660
  %4918 = vst.msk [vmem:[%s6 + $0x3d8] sm:$0xff] %vm4794, %v4661
  %4919 = vst.msk [vmem:[%s6 + $0x3e0] sm:$0xff] %vm4794, %v4662
  %4920 = vst.msk [vmem:[%s6 + $0x3e8] sm:$0xff] %vm4794, %v4663
  %4921 = vst.msk [vmem:[%s6 + $0x3f0] sm:$0xff] %vm4794, %v4664
  %4922 = vst.msk [vmem:[%s6 + $0x3f8] sm:$0xff] %vm4794, %v4665
  %4923 = vst.msk [vmem:[%s6 + $0x400] sm:$0xff] %vm4794, %v4666
  %4924 = vst.msk [vmem:[%s6 + $0x408] sm:$0xff] %vm4794, %v4667
  %4925 = vst.msk [vmem:[%s6 + $0x410] sm:$0xff] %vm4794, %v4668
  %4926 = vst.msk [vmem:[%s6 + $0x418] sm:$0xff] %vm4794, %v4669
  %4927 = vst.msk [vmem:[%s6 + $0x420] sm:$0xff] %vm4794, %v4670
  %4928 = vst.msk [vmem:[%s6 + $0x428] sm:$0xff] %vm4794, %v4671
  %4929 = vst.msk [vmem:[%s6 + $0x430] sm:$0xff] %vm4794, %v4672
  %4930 = vst.msk [vmem:[%s6 + $0x438] sm:$0xff] %vm4794, %v4673
  %4931 = vst.msk [vmem:[%s6 + $0x440] sm:$0xff] %vm4794, %v4674
  %4932 = vst.msk [vmem:[%s6 + $0x448] sm:$0xff] %vm4794, %v4675
  %4933 = vst.msk [vmem:[%s6 + $0x450] sm:$0xff] %vm4794, %v4676
  %4934 = vst.msk [vmem:[%s6 + $0x458] sm:$0xff] %vm4794, %v4677
  %4935 = vst.msk [vmem:[%s6 + $0x460] sm:$0xff] %vm4794, %v4678
  %4936 = vst.msk [vmem:[%s6 + $0x468] sm:$0xff] %vm4794, %v4679
  %4937 = vst.msk [vmem:[%s6 + $0x470] sm:$0xff] %vm4794, %v4680
  %4938 = vst.msk [vmem:[%s6 + $0x478] sm:$0xff] %vm4794, %v4681
  %4939 = vst.msk [vmem:[%s6 + $0x480] sm:$0xff] %vm4794, %v4682
  %4940 = vst.msk [vmem:[%s6 + $0x488] sm:$0xff] %vm4794, %v4683
  %4941 = vst.msk [vmem:[%s6 + $0x490] sm:$0xff] %vm4794, %v4684
  %4942 = vst.msk [vmem:[%s6 + $0x498] sm:$0xff] %vm4794, %v4685
  %4943 = vst.msk [vmem:[%s6 + $0x4a0] sm:$0xff] %vm4794, %v4686
  %4944 = vst.msk [vmem:[%s6 + $0x4a8] sm:$0xff] %vm4794, %v4687
  %4945 = vst.msk [vmem:[%s6 + $0x4b0] sm:$0xff] %vm4794, %v4688
  %4946 = vst.msk [vmem:[%s6 + $0x4b8] sm:$0xff] %vm4794, %v4689
  %4947 = vst.msk [vmem:[%s6 + $0x4c0] sm:$0xff] %vm4794, %v4690
  %4948 = vst.msk [vmem:[%s6 + $0x4c8] sm:$0xff] %vm4794, %v4691
  %4949 = vst.msk [vmem:[%s6 + $0x4d0] sm:$0xff] %vm4794, %v4692
  %4950 = vst.msk [vmem:[%s6 + $0x4d8] sm:$0xff] %vm4794, %v4693
  %4951 = vst.msk [vmem:[%s6 + $0x4e0] sm:$0xff] %vm4794, %v4694
  %4952 = vst.msk [vmem:[%s6 + $0x4e8] sm:$0xff] %vm4794, %v4695
  %4953 = vst.msk [vmem:[%s6 + $0x4f0] sm:$0xff] %vm4794, %v4696
  %4954 = vst.msk [vmem:[%s6 + $0x4f8] sm:$0xff] %vm4794, %v4697
  %4955 = vst.msk [vmem:[%s6 + $0x500] sm:$0xff] %vm4794, %v4698
  %4956 = vst.msk [vmem:[%s6 + $0x508] sm:$0xff] %vm4794, %v4699
  %4957 = vst.msk [vmem:[%s6 + $0x510] sm:$0xff] %vm4794, %v4700
  %4958 = vst.msk [vmem:[%s6 + $0x518] sm:$0xff] %vm4794, %v4701
  %4959 = vst.msk [vmem:[%s6 + $0x520] sm:$0xff] %vm4794, %v4702
  %4960 = vst.msk [vmem:[%s6 + $0x528] sm:$0xff] %vm4794, %v4703
  %4961 = vst.msk [vmem:[%s6 + $0x530] sm:$0xff] %vm4794, %v4704
  %4962 = vst.msk [vmem:[%s6 + $0x538] sm:$0xff] %vm4794, %v4705
  %4963 = vst.msk [vmem:[%s6 + $0x540] sm:$0xff] %vm4794, %v4706
  %4964 = vst.msk [vmem:[%s6 + $0x548] sm:$0xff] %vm4794, %v4707
  %4965 = vst.msk [vmem:[%s6 + $0x550] sm:$0xff] %vm4794, %v4708
  %4966 = vst.msk [vmem:[%s6 + $0x558] sm:$0xff] %vm4794, %v4709
  %4967 = vst.msk [vmem:[%s6 + $0x560] sm:$0xff] %vm4794, %v4710
  %4968 = vst.msk [vmem:[%s6 + $0x568] sm:$0xff] %vm4794, %v4711
  %4969 = vst.msk [vmem:[%s6 + $0x570] sm:$0xff] %vm4794, %v4712
  %4970 = vst.msk [vmem:[%s6 + $0x578] sm:$0xff] %vm4794, %v4713
  %4971 = vst.msk [vmem:[%s6 + $0x580] sm:$0xff] %vm4794, %v4714
  %4972 = vst.msk [vmem:[%s6 + $0x588] sm:$0xff] %vm4794, %v4715
  %4973 = vst.msk [vmem:[%s6 + $0x590] sm:$0xff] %vm4794, %v4716
  %4974 = vst.msk [vmem:[%s6 + $0x598] sm:$0xff] %vm4794, %v4717
  %4975 = vst.msk [vmem:[%s6 + $0x5a0] sm:$0xff] %vm4794, %v4718
  %4976 = vst.msk [vmem:[%s6 + $0x5a8] sm:$0xff] %vm4794, %v4719
  %4977 = vst.msk [vmem:[%s6 + $0x5b0] sm:$0xff] %vm4794, %v4720
  %4978 = vst.msk [vmem:[%s6 + $0x5b8] sm:$0xff] %vm4794, %v4721
  %4979 = vst.msk [vmem:[%s6 + $0x5c0] sm:$0xff] %vm4794, %v4722
  %4980 = vst.msk [vmem:[%s6 + $0x5c8] sm:$0xff] %vm4794, %v4723
  %4981 = vst.msk [vmem:[%s6 + $0x5d0] sm:$0xff] %vm4794, %v4724
  %4982 = vst.msk [vmem:[%s6 + $0x5d8] sm:$0xff] %vm4794, %v4725
  %4983 = vst.msk [vmem:[%s6 + $0x5e0] sm:$0xff] %vm4794, %v4726
  %4984 = vst.msk [vmem:[%s6 + $0x5e8] sm:$0xff] %vm4794, %v4727
  %4985 = vst.msk [vmem:[%s6 + $0x5f0] sm:$0xff] %vm4794, %v4728
  %4986 = vst.msk [vmem:[%s6 + $0x5f8] sm:$0xff] %vm4794, %v4729
  %4987 = vst.msk [vmem:[%s6 + $0x600] sm:$0xff] %vm4794, %v4730
  %4988 = vst.msk [vmem:[%s6 + $0x608] sm:$0xff] %vm4794, %v4731
  %4989 = vst.msk [vmem:[%s6 + $0x610] sm:$0xff] %vm4794, %v4732
  %4990 = vst.msk [vmem:[%s6 + $0x618] sm:$0xff] %vm4794, %v4733
  %4991 = vst.msk [vmem:[%s6 + $0x620] sm:$0xff] %vm4794, %v4734
  %4992 = vst.msk [vmem:[%s6 + $0x628] sm:$0xff] %vm4794, %v4735
  %4993 = vst.msk [vmem:[%s6 + $0x630] sm:$0xff] %vm4794, %v4736
  %4994 = vst.msk [vmem:[%s6 + $0x638] sm:$0xff] %vm4794, %v4737
  %4995 = vst.msk [vmem:[%s6 + $0x640] sm:$0xff] %vm4794, %v4738
  %4996 = vst.msk [vmem:[%s6 + $0x648] sm:$0xff] %vm4794, %v4739
  %4997 = vst.msk [vmem:[%s6 + $0x650] sm:$0xff] %vm4794, %v4740
  %4998 = vst.msk [vmem:[%s6 + $0x658] sm:$0xff] %vm4794, %v4741
  %4999 = vst.msk [vmem:[%s6 + $0x660] sm:$0xff] %vm4794, %v4742
  %5000 = vst.msk [vmem:[%s6 + $0x668] sm:$0xff] %vm4794, %v4743
  %5001 = vst.msk [vmem:[%s6 + $0x670] sm:$0xff] %vm4794, %v4744
  %5002 = vst.msk [vmem:[%s6 + $0x678] sm:$0xff] %vm4794, %v4745
  %5003 = vst.msk [vmem:[%s6 + $0x680] sm:$0xff] %vm4794, %v4746
  %5004 = vst.msk [vmem:[%s6 + $0x688] sm:$0xff] %vm4794, %v4747
  %5005 = vst.msk [vmem:[%s6 + $0x690] sm:$0xff] %vm4794, %v4748
  %5006 = vst.msk [vmem:[%s6 + $0x698] sm:$0xff] %vm4794, %v4749
  %5007 = vst.msk [vmem:[%s6 + $0x6a0] sm:$0xff] %vm4794, %v4750
  %5008 = vst.msk [vmem:[%s6 + $0x6a8] sm:$0xff] %vm4794, %v4751
  %5009 = vst.msk [vmem:[%s6 + $0x6b0] sm:$0xff] %vm4794, %v4752
  %5010 = vst.msk [vmem:[%s6 + $0x6b8] sm:$0xff] %vm4794, %v4753
  %5011 = vst.msk [vmem:[%s6 + $0x6c0] sm:$0xff] %vm4794, %v4754
  %5012 = vst.msk [vmem:[%s6 + $0x6c8] sm:$0xff] %vm4794, %v4755
  %5013 = vst.msk [vmem:[%s6 + $0x6d0] sm:$0xff] %vm4794, %v4756
  %5014 = vst.msk [vmem:[%s6 + $0x6d8] sm:$0xff] %vm4794, %v4757
  %5015 = vst.msk [vmem:[%s6 + $0x6e0] sm:$0xff] %vm4794, %v4758
  %5016 = vst.msk [vmem:[%s6 + $0x6e8] sm:$0xff] %vm4794, %v4759
  %5017 = vst.msk [vmem:[%s6 + $0x6f0] sm:$0xff] %vm4794, %v4760
  %5018 = vst.msk [vmem:[%s6 + $0x6f8] sm:$0xff] %vm4794, %v4761
  %5019 = vst.msk [vmem:[%s6 + $0x700] sm:$0xff] %vm4794, %v4762
  %5020 = vst.msk [vmem:[%s6 + $0x708] sm:$0xff] %vm4794, %v4763
  %5021 = vst.msk [vmem:[%s6 + $0x710] sm:$0xff] %vm4794, %v4764
  %5022 = vst.msk [vmem:[%s6 + $0x718] sm:$0xff] %vm4794, %v4765
  %5023 = vst.msk [vmem:[%s6 + $0x720] sm:$0xff] %vm4794, %v4766
  %5024 = vst.msk [vmem:[%s6 + $0x728] sm:$0xff] %vm4794, %v4767
  %5025 = vst.msk [vmem:[%s6 + $0x730] sm:$0xff] %vm4794, %v4768
  %5026 = vst.msk [vmem:[%s6 + $0x738] sm:$0xff] %vm4794, %v4769
  %5027 = vst.msk [vmem:[%s6 + $0x740] sm:$0xff] %vm4794, %v4770
  %5028 = vst.msk [vmem:[%s6 + $0x748] sm:$0xff] %vm4794, %v4771
  %5029 = vst.msk [vmem:[%s6 + $0x750] sm:$0xff] %vm4794, %v4772
  %5030 = vst.msk [vmem:[%s6 + $0x758] sm:$0xff] %vm4794, %v4773
  %5031 = vst.msk [vmem:[%s6 + $0x760] sm:$0xff] %vm4794, %v4774
  %5032 = vst.msk [vmem:[%s6 + $0x768] sm:$0xff] %vm4794, %v4775
  %5033 = vst.msk [vmem:[%s6 + $0x770] sm:$0xff] %vm4794, %v4776
  %5034 = vst.msk [vmem:[%s6 + $0x778] sm:$0xff] %vm4794, %v4777
  %5035 = vst.msk [vmem:[%s6 + $0x780] sm:$0xff] %vm4794, %v4778
  %5036 = vst.msk [vmem:[%s6 + $0x788] sm:$0xff] %vm4794, %v4779
  %5037 = vst.msk [vmem:[%s6 + $0x790] sm:$0xff] %vm4794, %v4780
  %5038 = vst.msk [vmem:[%s6 + $0x798] sm:$0xff] %vm4794, %v4781
  %5039 = vst.msk [vmem:[%s6 + $0x7a0] sm:$0xff] %vm4794, %v4782
  %5040 = vst.msk [vmem:[%s6 + $0x7a8] sm:$0xff] %vm4794, %v4783
  %5041 = vst.msk [vmem:[%s6 + $0x7b0] sm:$0xff] %vm4794, %v4784
  %5042 = vst.msk [vmem:[%s6 + $0x7b8] sm:$0xff] %vm4794, %v4785
  %5043 = vst.msk [vmem:[%s6 + $0x7c0] sm:$0xff] %vm4794, %v4786
  %5044 = vst.msk [vmem:[%s6 + $0x7c8] sm:$0xff] %vm4794, %v4787
  %5045 = vst.msk [vmem:[%s6 + $0x7d0] sm:$0xff] %vm4794, %v4788
  %5046 = vst.msk [vmem:[%s6 + $0x7d8] sm:$0xff] %vm4794, %v4789
  %5047 = vst.msk [vmem:[%s6 + $0x7e0] sm:$0xff] %vm4794, %v4790
  %5048 = vst.msk [vmem:[%s6 + $0x7e8] sm:$0xff] %vm4794, %v4791
  %5049 = vst.msk [vmem:[%s6 + $0x7f0] sm:$0xff] %vm4794, %v4792
  %5050 = vst.msk [vmem:[%s6 + $0x7f8] sm:$0xff] %vm4794, %v4793
  // Predicated region
  $region26: #{forward.1} parent=0 // pred_check
    _
  $region27: #{forward.1} parent=0 // pred_check_branch
    %5052 = sbr.rel (0) target = $region29
  $region28: #{forward.1} parent=0 // pred_region
    _
  $region29: #{forward.1} parent=0 // pred_fallthru
    _
  // Predicated region
  $region30: #{forward.1} parent=0 // pred_check
    _
  $region31: #{forward.1} parent=0 // pred_check_branch
    %5054 = sbr.rel (0) target = $region33
  $region32: #{forward.1} parent=0 // pred_region
    _
  $region33: #{forward.1} parent=0 // pred_fallthru
    _

</llo_original>
